<compile_context>
chip_gen: v5e
topology: v5e:2x2
jax: 0.10.0
libtpu: 0.0.40
codegen_flags: <defaults>
</compile_context>

<pallas_src>
import functools

import numpy as np
import jax
import jax.numpy as jnp
from jax.experimental import pallas as pl

NEG_SLOPE = 0.1
BN_EPS = 1e-5


def _leaky(x):
    return jnp.where(x > 0, x, NEG_SLOPE * x)


def _bivariate_gauss_act(y):
    # TODO(synk): `output_activation` is not defined in the reference module source;
    # using the standard social-trajectory bivariate-Gaussian activation
    # (identity on mu_x/mu_y, exp on sigma_x/sigma_y, tanh on rho) for out_dim=5.
    col = jax.lax.broadcasted_iota(jnp.int32, y.shape, 1)
    return jnp.where(col < 2, y, jnp.where(col < 4, jnp.exp(y), jnp.tanh(y)))


def _lstm_step(x_gates, h, c, whh_t, H):
    """One nn.LSTM cell step. x_gates already contains x @ W_ih^T + (b_ih + b_hh)."""
    gates = x_gates + jnp.dot(h, whh_t, preferred_element_type=jnp.float32)
    i = jax.nn.sigmoid(gates[:, 0:H])
    f = jax.nn.sigmoid(gates[:, H:2 * H])
    g = jnp.tanh(gates[:, 2 * H:3 * H])
    o = jax.nn.sigmoid(gates[:, 3 * H:4 * H])
    c_new = f * c + i * g
    h_new = o * jnp.tanh(c_new)
    return h_new, c_new


def _res_block(x, wt_t, bt, wr_t, br, gamma, beta):
    """ST_GCN2D with in!=out channels: leaky(tcn(x) + BN(conv1x1(x))), 1x1 convs."""
    # residual branch: 1x1 conv + BatchNorm2d (training-mode stats over all N*T*V rows)
    r = jnp.dot(x, wr_t, preferred_element_type=jnp.float32) + br
    mean = jnp.mean(r, axis=0, keepdims=True)
    var = jnp.mean(jnp.square(r - mean), axis=0, keepdims=True)
    r = (r - mean) * jax.lax.rsqrt(var + BN_EPS) * gamma + beta
    # tcn branch: LeakyReLU -> 1x1 conv (temporal kernel size 1)
    tc = jnp.dot(_leaky(x), wt_t, preferred_element_type=jnp.float32) + bt
    return _leaky(tc + r)


def _fused_kernel(dims,
                  xs_ref, m_ref,
                  dyn_w_ref, dyn_b_ref,
                  enc_wih_ref, enc_whh_ref, enc_b_ref,
                  g1w_ref, g1b_ref, t1w_ref, t1b_ref,
                  t2w_ref, t2b_ref, r2w_ref, r2b_ref, bn2g_ref, bn2b_ref,
                  t3w_ref, t3b_ref, r3w_ref, r3b_ref, bn3g_ref, bn3b_ref,
                  hid_w_ref, hid_b_ref,
                  dec_wih_ref, dec_whh_ref, dec_b_ref,
                  out_w_ref, out_b_ref,
                  o_ref):
    N, T, V, P = dims
    B = N * V
    ENC = enc_whh_ref.shape[0]
    DEC = dec_whh_ref.shape[0]

    # ---- 1) x = leaky(dyn(x));  rows ordered (t, n, v) -----------------------------
    xd = _leaky(jnp.dot(xs_ref[...], dyn_w_ref[...],
                        preferred_element_type=jnp.float32) + dyn_b_ref[...])

    # ---- 2) encoder LSTM, batched over all (n, v) trajectories (zero init, shared W)
    wih = enc_wih_ref[...]
    whh = enc_whh_ref[...]
    eb = enc_b_ref[...]
    h = jnp.zeros((B, ENC), jnp.float32)
    c = jnp.zeros((B, ENC), jnp.float32)
    h_steps = []
    for t in range(T):                       # static unroll, h/c stay in vregs/VMEM
        xg = jnp.dot(xd[t * B:(t + 1) * B], wih,
                     preferred_element_type=jnp.float32) + eb
        h, c = _lstm_step(xg, h, c, whh, ENC)
        h_steps.append(h)
    h_all = jnp.concatenate(h_steps, axis=0)   # (T*B, ENC), rows (t, n, v)
    h_last = h                                 # (B, ENC),   rows (n, v)

    # ---- 3) ST-GCN block 1: 1x1 conv -> graph mix (block-diag A) -> tcn ------------
    y = jnp.dot(h_all, g1w_ref[...], preferred_element_type=jnp.float32) + g1b_ref[...]
    z = jnp.dot(m_ref[...], y, preferred_element_type=jnp.float32)   # graph einsum
    x1 = _leaky(jnp.dot(_leaky(z), t1w_ref[...],
                        preferred_element_type=jnp.float32) + t1b_ref[...])

    # ---- 4) ST-GCN blocks 2 / 3 (1x1 conv + BatchNorm residual) --------------------
    x2 = _res_block(x1, t2w_ref[...], t2b_ref[...], r2w_ref[...], r2b_ref[...],
                    bn2g_ref[...], bn2b_ref[...])
    x3 = _res_block(x2, t3w_ref[...], t3b_ref[...], r3w_ref[...], r3b_ref[...],
                    bn3g_ref[...], bn3b_ref[...])                     # (T*B, C3)

    # ---- 5) MaxPool2d((1,2), padding=(0,1)) over T: rows (t,n,v) => row-block maxima
    Tp = T // 2 + 1
    pooled_parts = []
    for j in range(Tp):
        idxs = [s for s in (2 * j - 1, 2 * j) if 0 <= s < T]   # -inf padding
        blocks = [x3[s * B:(s + 1) * B] for s in idxs]
        pooled_parts.append(blocks[0] if len(blocks) == 1
                            else jnp.maximum(blocks[0], blocks[1]))
    # j-major feature layout (B, Tp*C3); dec_wih rows were permuted to match in wrapper
    pooled = jnp.concatenate(pooled_parts, axis=1)

    # ---- 6) hidden layer on encoder final states + concat --------------------------
    hh = _leaky(jnp.dot(h_last, hid_w_ref[...],
                        preferred_element_type=jnp.float32) + hid_b_ref[...])
    xcat = jnp.concatenate([pooled, hh], axis=1)                # (B, Tp*C3 + self_h)

    # ---- 7) decoder LSTM: identical input every step -> input projection hoisted ---
    gx = jnp.dot(xcat, dec_wih_ref[...],
                 preferred_element_type=jnp.float32) + dec_b_ref[...]
    dwhh = dec_whh_ref[...]
    h = jnp.zeros((B, DEC), jnp.float32)
    c = jnp.zeros((B, DEC), jnp.float32)
    d_steps = []
    for _ in range(P):
        h, c = _lstm_step(gx, h, c, dwhh, DEC)
        d_steps.append(h)
    hd = jnp.concatenate(d_steps, axis=0)                       # (P*B, DEC), rows (step,n,v)

    # ---- 8) output projection + output_activation ----------------------------------
    o = jnp.dot(hd, out_w_ref[...], preferred_element_type=jnp.float32) + out_b_ref[...]
    o_ref[...] = _bivariate_gauss_act(o)


def stgcn2d_forward(params, x, A, pred_len):
    """x: (N, T, V, in_channels); A: (N, 1, V, V). Returns (N, pred_len, V, out_dim)."""
    N, T, V, Cin = x.shape
    C3 = params['b3_tcn_w'].shape[0]
    Tp = T // 2 + 1
    out_dim = params['out_w'].shape[0]
    d_in = params['dec_wih'].shape[1]
    assert C3 * Tp + params['hid_w'].shape[0] == d_in, "decoder input width mismatch"

    # row order (t, n, v) for the whole fused kernel
    xs = x.transpose(1, 0, 2, 3).reshape(T * N * V, Cin)

    # block-diagonal graph-mixing matrix: M[(t,n,w),(t',n',v)] = A[n,v,w]*[t==t']*[n==n']
    a_t = A[:, 0].transpose(0, 2, 1)                                      # (N, W, V)
    eye_t = jnp.eye(T, dtype=jnp.float32)
    eye_n = jnp.eye(N, dtype=jnp.float32)
    m = (eye_t[:, None, None, :, None, None]
         * eye_n[None, :, None, None, :, None]
         * a_t[None, :, :, None, None, :]).reshape(T * N * V, T * N * V)

    # decoder input weights: permute pooled-feature rows from c-major (PyTorch's
    # view(-1, V, C*5) order) to the j-major order produced inside the kernel.
    feat_perm = np.array([c * Tp + j for j in range(Tp) for c in range(C3)]
                         + list(range(C3 * Tp, d_in)), dtype=np.int32)
    dec_wih_t = jnp.transpose(params['dec_wih'])[feat_perm]

    def t2(w):            # (Out, In) PyTorch layout -> (In, Out) for row-major matmul
        return jnp.transpose(w)

    def row(b):
        return b.reshape(1, -1)

    kernel = functools.partial(_fused_kernel, (N, T, V, pred_len))
    out2d = pl.pallas_call(
        kernel,
        out_shape=jax.ShapeDtypeStruct((pred_len * N * V, out_dim), jnp.float32),
    )(
        xs, m,
        t2(params['dyn_w']), row(params['dyn_b']),
        t2(params['enc_wih']), t2(params['enc_whh']),
        row(params['enc_bih'] + params['enc_bhh']),
        t2(params['b1_gcn_w']), row(params['b1_gcn_b']),
        t2(params['b1_tcn_w']), row(params['b1_tcn_b']),
        t2(params['b2_tcn_w']), row(params['b2_tcn_b']),
        t2(params['b2_res_w']), row(params['b2_res_b']),
        row(params['b2_bn_g']), row(params['b2_bn_b']),
        t2(params['b3_tcn_w']), row(params['b3_tcn_b']),
        t2(params['b3_res_w']), row(params['b3_res_b']),
        row(params['b3_bn_g']), row(params['b3_bn_b']),
        t2(params['hid_w']), row(params['hid_b']),
        dec_wih_t, t2(params['dec_whh']),
        row(params['dec_bih'] + params['dec_bhh']),
        t2(params['out_w']), row(params['out_b']),
    )
    # rows are (step, n, v) -> (N, pred_len, V, out_dim); tiny wrapper-side transpose
    return out2d.reshape(pred_len, N, V, out_dim).transpose(1, 0, 2, 3)


if __name__ == "__main__":
    # hyper-parameters consistent with STGCN2DModel.__init__ / forward:
    N, T, V = 2, 8, 4          # T=8 -> pooled temporal length 5 (needed by view(-1, V, C*5))
    IN_CH = 2
    SPATIAL_K = 1              # A.size(1) must equal spatial_kernel_size
    DYN_H, SELF_H, ENC_H, DEC_H = 16, 16, 32, 32
    OUT_DIM, PRED_LEN = 5, 4

    key = jax.random.PRNGKey(0)
    kx, ka, kp = jax.random.split(key, 3)
    x = jax.random.normal(kx, (N, T, V, IN_CH), jnp.float32)
    A = 0.5 * jax.random.normal(ka, (N, SPATIAL_K, V, V), jnp.float32)

    def nrm(k, shape):
        return 0.1 * jax.random.normal(k, shape, jnp.float32)

    pk = iter(jax.random.split(kp, 30))
    params = {
        'dyn_w': nrm(next(pk), (DYN_H, IN_CH)),      'dyn_b': nrm(next(pk), (DYN_H,)),
        'enc_wih': nrm(next(pk), (4 * ENC_H, DYN_H)),
        'enc_whh': nrm(next(pk), (4 * ENC_H, ENC_H)),
        'enc_bih': nrm(next(pk), (4 * ENC_H,)),      'enc_bhh': nrm(next(pk), (4 * ENC_H,)),
        'hid_w': nrm(next(pk), (SELF_H, ENC_H)),     'hid_b': nrm(next(pk), (SELF_H,)),
        'dec_wih': nrm(next(pk), (4 * DEC_H, 40 + SELF_H)),
        'dec_whh': nrm(next(pk), (4 * DEC_H, DEC_H)),
        'dec_bih': nrm(next(pk), (4 * DEC_H,)),      'dec_bhh': nrm(next(pk), (4 * DEC_H,)),
        'out_w': nrm(next(pk), (OUT_DIM, DEC_H)),    'out_b': nrm(next(pk), (OUT_DIM,)),
        # ST_GCN2D #1: enc_hidden -> 64, apply_gcn=True, residual=False
        'b1_gcn_w': nrm(next(pk), (64, ENC_H)),      'b1_gcn_b': nrm(next(pk), (64,)),
        'b1_tcn_w': nrm(next(pk), (64, 64)),         'b1_tcn_b': nrm(next(pk), (64,)),
        # ST_GCN2D #2: 64 -> 16, conv1x1 + BatchNorm residual
        'b2_tcn_w': nrm(next(pk), (16, 64)),         'b2_tcn_b': nrm(next(pk), (16,)),
        'b2_res_w': nrm(next(pk), (16, 64)),         'b2_res_b': nrm(next(pk), (16,)),
        'b2_bn_g': jnp.ones((16,), jnp.float32),     'b2_bn_b': jnp.zeros((16,), jnp.float32),
        # ST_GCN2D #3: 16 -> 8, conv1x1 + BatchNorm residual
        'b3_tcn_w': nrm(next(pk), (8, 16)),          'b3_tcn_b': nrm(next(pk), (8,)),
        'b3_res_w': nrm(next(pk), (8, 16)),          'b3_res_b': nrm(next(pk), (8,)),
        'b3_bn_g': jnp.ones((8,), jnp.float32),      'b3_bn_b': jnp.zeros((8,), jnp.float32),
    }

    forward = jax.jit(stgcn2d_forward, static_argnames='pred_len')
    o_pred = forward(params, x, A, pred_len=PRED_LEN)
    jax.block_until_ready(o_pred)
    assert o_pred.shape == (N, PRED_LEN, V, OUT_DIM)
    print("KERNEL_OK")
</pallas_src>

<mosaic_0001>
module attributes {stable_mosaic.version = 11 : i64} {
  func.func @_fused_kernel(%arg0: memref<64x2xf32, #tpu.memory_space<vmem>>, %arg1: memref<64x64xf32, #tpu.memory_space<vmem>>, %arg2: memref<2x16xf32, #tpu.memory_space<vmem>>, %arg3: memref<1x16xf32, #tpu.memory_space<vmem>>, %arg4: memref<16x128xf32, #tpu.memory_space<vmem>>, %arg5: memref<32x128xf32, #tpu.memory_space<vmem>>, %arg6: memref<1x128xf32, #tpu.memory_space<vmem>>, %arg7: memref<32x64xf32, #tpu.memory_space<vmem>>, %arg8: memref<1x64xf32, #tpu.memory_space<vmem>>, %arg9: memref<64x64xf32, #tpu.memory_space<vmem>>, %arg10: memref<1x64xf32, #tpu.memory_space<vmem>>, %arg11: memref<64x16xf32, #tpu.memory_space<vmem>>, %arg12: memref<1x16xf32, #tpu.memory_space<vmem>>, %arg13: memref<64x16xf32, #tpu.memory_space<vmem>>, %arg14: memref<1x16xf32, #tpu.memory_space<vmem>>, %arg15: memref<1x16xf32, #tpu.memory_space<vmem>>, %arg16: memref<1x16xf32, #tpu.memory_space<vmem>>, %arg17: memref<16x8xf32, #tpu.memory_space<vmem>>, %arg18: memref<1x8xf32, #tpu.memory_space<vmem>>, %arg19: memref<16x8xf32, #tpu.memory_space<vmem>>, %arg20: memref<1x8xf32, #tpu.memory_space<vmem>>, %arg21: memref<1x8xf32, #tpu.memory_space<vmem>>, %arg22: memref<1x8xf32, #tpu.memory_space<vmem>>, %arg23: memref<32x16xf32, #tpu.memory_space<vmem>>, %arg24: memref<1x16xf32, #tpu.memory_space<vmem>>, %arg25: memref<56x128xf32, #tpu.memory_space<vmem>>, %arg26: memref<32x128xf32, #tpu.memory_space<vmem>>, %arg27: memref<1x128xf32, #tpu.memory_space<vmem>>, %arg28: memref<32x5xf32, #tpu.memory_space<vmem>>, %arg29: memref<1x5xf32, #tpu.memory_space<vmem>>, %arg30: memref<32x5xf32, #tpu.memory_space<vmem>>) attributes {dimension_semantics = [], scalar_prefetch = 0 : i64, scratch_operands = 0 : i64, tpu.core_type = #tpu.core_type<tc>} {
    %c0 = arith.constant 0 : index
    %c0_0 = arith.constant 0 : index
    %0 = vector.load %arg0[%c0, %c0_0] : memref<64x2xf32, #tpu.memory_space<vmem>>, vector<64x2xf32>
    %c0_1 = arith.constant 0 : index
    %c0_2 = arith.constant 0 : index
    %1 = vector.load %arg2[%c0_1, %c0_2] : memref<2x16xf32, #tpu.memory_space<vmem>>, vector<2x16xf32>
    %cst = arith.constant dense<0.000000e+00> : vector<64x16xf32>
    %2 = tpu.matmul %0, %1, %cst {dimension_numbers = #tpu.dot_dimension_numbers<[1], [0], [0], [1], [0, 0, 1, 1], [], []>} : vector<64x2xf32>, vector<2x16xf32>, vector<64x16xf32> -> vector<64x16xf32>
    %c0_3 = arith.constant 0 : index
    %c0_4 = arith.constant 0 : index
    %3 = vector.load %arg3[%c0_3, %c0_4] : memref<1x16xf32, #tpu.memory_space<vmem>>, vector<1x16xf32>
    %4 = vector.broadcast %3 : vector<1x16xf32> to vector<64x16xf32>
    %5 = arith.addf %2, %4 : vector<64x16xf32>
    %cst_5 = arith.constant 0.000000e+00 : f32
    %6 = vector.broadcast %cst_5 : f32 to vector<64x16xf32>
    %7 = arith.cmpf ogt, %5, %6 : vector<64x16xf32>
    %cst_6 = arith.constant 1.000000e-01 : f32
    %8 = vector.broadcast %cst_6 : f32 to vector<64x16xf32>
    %9 = arith.mulf %8, %5 : vector<64x16xf32>
    %10 = arith.select %7, %5, %9 : vector<64x16xi1>, vector<64x16xf32>
    %c0_7 = arith.constant 0 : index
    %c0_8 = arith.constant 0 : index
    %11 = vector.load %arg4[%c0_7, %c0_8] : memref<16x128xf32, #tpu.memory_space<vmem>>, vector<16x128xf32>
    %c0_9 = arith.constant 0 : index
    %c0_10 = arith.constant 0 : index
    %12 = vector.load %arg5[%c0_9, %c0_10] : memref<32x128xf32, #tpu.memory_space<vmem>>, vector<32x128xf32>
    %c0_11 = arith.constant 0 : index
    %c0_12 = arith.constant 0 : index
    %13 = vector.load %arg6[%c0_11, %c0_12] : memref<1x128xf32, #tpu.memory_space<vmem>>, vector<1x128xf32>
    %cst_13 = arith.constant 0.000000e+00 : f32
    %14 = vector.broadcast %cst_13 : f32 to vector<8x32xf32>
    %cst_14 = arith.constant 0.000000e+00 : f32
    %15 = vector.broadcast %cst_14 : f32 to vector<8x32xf32>
    %16 = vector.extract_strided_slice %10 {offsets = [0, 0], sizes = [8, 16], strides = [1, 1]} : vector<64x16xf32> to vector<8x16xf32>
    %cst_15 = arith.constant dense<0.000000e+00> : vector<8x128xf32>
    %17 = tpu.matmul %16, %11, %cst_15 {dimension_numbers = #tpu.dot_dimension_numbers<[1], [0], [0], [1], [0, 0, 1, 1], [], []>} : vector<8x16xf32>, vector<16x128xf32>, vector<8x128xf32> -> vector<8x128xf32>
    %18 = vector.broadcast %13 : vector<1x128xf32> to vector<8x128xf32>
    %19 = arith.addf %17, %18 : vector<8x128xf32>
    %cst_16 = arith.constant dense<0.000000e+00> : vector<8x128xf32>
    %20 = tpu.matmul %14, %12, %cst_16 {dimension_numbers = #tpu.dot_dimension_numbers<[1], [0], [0], [1], [0, 0, 1, 1], [], []>} : vector<8x32xf32>, vector<32x128xf32>, vector<8x128xf32> -> vector<8x128xf32>
    %21 = arith.addf %19, %20 : vector<8x128xf32>
    %22 = vector.extract_strided_slice %21 {offsets = [0, 0], sizes = [8, 32], strides = [1, 1]} : vector<8x128xf32> to vector<8x32xf32>
    %23 = arith.negf %22 : vector<8x32xf32>
    %24 = math.exp %23 : vector<8x32xf32>
    %cst_17 = arith.constant 1.000000e+00 : f32
    %25 = vector.broadcast %cst_17 : f32 to vector<8x32xf32>
    %26 = arith.addf %25, %24 : vector<8x32xf32>
    %27 = arith.divf %25, %26 : vector<8x32xf32>
    %28 = vector.extract_strided_slice %21 {offsets = [0, 32], sizes = [8, 32], strides = [1, 1]} : vector<8x128xf32> to vector<8x32xf32>
    %29 = arith.negf %28 : vector<8x32xf32>
    %30 = math.exp %29 : vector<8x32xf32>
    %cst_18 = arith.constant 1.000000e+00 : f32
    %31 = vector.broadcast %cst_18 : f32 to vector<8x32xf32>
    %32 = arith.addf %31, %30 : vector<8x32xf32>
    %33 = arith.divf %31, %32 : vector<8x32xf32>
    %34 = vector.extract_strided_slice %21 {offsets = [0, 64], sizes = [8, 32], strides = [1, 1]} : vector<8x128xf32> to vector<8x32xf32>
    %35 = math.tanh %34 : vector<8x32xf32>
    %36 = vector.extract_strided_slice %21 {offsets = [0, 96], sizes = [8, 32], strides = [1, 1]} : vector<8x128xf32> to vector<8x32xf32>
    %37 = arith.negf %36 : vector<8x32xf32>
    %38 = math.exp %37 : vector<8x32xf32>
    %cst_19 = arith.constant 1.000000e+00 : f32
    %39 = vector.broadcast %cst_19 : f32 to vector<8x32xf32>
    %40 = arith.addf %39, %38 : vector<8x32xf32>
    %41 = arith.divf %39, %40 : vector<8x32xf32>
    %42 = arith.mulf %33, %15 : vector<8x32xf32>
    %43 = arith.mulf %27, %35 : vector<8x32xf32>
    %44 = arith.addf %42, %43 : vector<8x32xf32>
    %45 = math.tanh %44 : vector<8x32xf32>
    %46 = arith.mulf %41, %45 : vector<8x32xf32>
    %47 = vector.extract_strided_slice %10 {offsets = [8, 0], sizes = [8, 16], strides = [1, 1]} : vector<64x16xf32> to vector<8x16xf32>
    %cst_20 = arith.constant dense<0.000000e+00> : vector<8x128xf32>
    %48 = tpu.matmul %47, %11, %cst_20 {dimension_numbers = #tpu.dot_dimension_numbers<[1], [0], [0], [1], [0, 0, 1, 1], [], []>} : vector<8x16xf32>, vector<16x128xf32>, vector<8x128xf32> -> vector<8x128xf32>
    %49 = vector.broadcast %13 : vector<1x128xf32> to vector<8x128xf32>
    %50 = arith.addf %48, %49 : vector<8x128xf32>
    %cst_21 = arith.constant dense<0.000000e+00> : vector<8x128xf32>
    %51 = tpu.matmul %46, %12, %cst_21 {dimension_numbers = #tpu.dot_dimension_numbers<[1], [0], [0], [1], [0, 0, 1, 1], [], []>} : vector<8x32xf32>, vector<32x128xf32>, vector<8x128xf32> -> vector<8x128xf32>
    %52 = arith.addf %50, %51 : vector<8x128xf32>
    %53 = vector.extract_strided_slice %52 {offsets = [0, 0], sizes = [8, 32], strides = [1, 1]} : vector<8x128xf32> to vector<8x32xf32>
    %54 = arith.negf %53 : vector<8x32xf32>
    %55 = math.exp %54 : vector<8x32xf32>
    %cst_22 = arith.constant 1.000000e+00 : f32
    %56 = vector.broadcast %cst_22 : f32 to vector<8x32xf32>
    %57 = arith.addf %56, %55 : vector<8x32xf32>
    %58 = arith.divf %56, %57 : vector<8x32xf32>
    %59 = vector.extract_strided_slice %52 {offsets = [0, 32], sizes = [8, 32], strides = [1, 1]} : vector<8x128xf32> to vector<8x32xf32>
    %60 = arith.negf %59 : vector<8x32xf32>
    %61 = math.exp %60 : vector<8x32xf32>
    %cst_23 = arith.constant 1.000000e+00 : f32
    %62 = vector.broadcast %cst_23 : f32 to vector<8x32xf32>
    %63 = arith.addf %62, %61 : vector<8x32xf32>
    %64 = arith.divf %62, %63 : vector<8x32xf32>
    %65 = vector.extract_strided_slice %52 {offsets = [0, 64], sizes = [8, 32], strides = [1, 1]} : vector<8x128xf32> to vector<8x32xf32>
    %66 = math.tanh %65 : vector<8x32xf32>
    %67 = vector.extract_strided_slice %52 {offsets = [0, 96], sizes = [8, 32], strides = [1, 1]} : vector<8x128xf32> to vector<8x32xf32>
    %68 = arith.negf %67 : vector<8x32xf32>
    %69 = math.exp %68 : vector<8x32xf32>
    %cst_24 = arith.constant 1.000000e+00 : f32
    %70 = vector.broadcast %cst_24 : f32 to vector<8x32xf32>
    %71 = arith.addf %70, %69 : vector<8x32xf32>
    %72 = arith.divf %70, %71 : vector<8x32xf32>
    %73 = arith.mulf %64, %44 : vector<8x32xf32>
    %74 = arith.mulf %58, %66 : vector<8x32xf32>
    %75 = arith.addf %73, %74 : vector<8x32xf32>
    %76 = math.tanh %75 : vector<8x32xf32>
    %77 = arith.mulf %72, %76 : vector<8x32xf32>
    %78 = vector.extract_strided_slice %10 {offsets = [16, 0], sizes = [8, 16], strides = [1, 1]} : vector<64x16xf32> to vector<8x16xf32>
    %cst_25 = arith.constant dense<0.000000e+00> : vector<8x128xf32>
    %79 = tpu.matmul %78, %11, %cst_25 {dimension_numbers = #tpu.dot_dimension_numbers<[1], [0], [0], [1], [0, 0, 1, 1], [], []>} : vector<8x16xf32>, vector<16x128xf32>, vector<8x128xf32> -> vector<8x128xf32>
    %80 = vector.broadcast %13 : vector<1x128xf32> to vector<8x128xf32>
    %81 = arith.addf %79, %80 : vector<8x128xf32>
    %cst_26 = arith.constant dense<0.000000e+00> : vector<8x128xf32>
    %82 = tpu.matmul %77, %12, %cst_26 {dimension_numbers = #tpu.dot_dimension_numbers<[1], [0], [0], [1], [0, 0, 1, 1], [], []>} : vector<8x32xf32>, vector<32x128xf32>, vector<8x128xf32> -> vector<8x128xf32>
    %83 = arith.addf %81, %82 : vector<8x128xf32>
    %84 = vector.extract_strided_slice %83 {offsets = [0, 0], sizes = [8, 32], strides = [1, 1]} : vector<8x128xf32> to vector<8x32xf32>
    %85 = arith.negf %84 : vector<8x32xf32>
    %86 = math.exp %85 : vector<8x32xf32>
    %cst_27 = arith.constant 1.000000e+00 : f32
    %87 = vector.broadcast %cst_27 : f32 to vector<8x32xf32>
    %88 = arith.addf %87, %86 : vector<8x32xf32>
    %89 = arith.divf %87, %88 : vector<8x32xf32>
    %90 = vector.extract_strided_slice %83 {offsets = [0, 32], sizes = [8, 32], strides = [1, 1]} : vector<8x128xf32> to vector<8x32xf32>
    %91 = arith.negf %90 : vector<8x32xf32>
    %92 = math.exp %91 : vector<8x32xf32>
    %cst_28 = arith.constant 1.000000e+00 : f32
    %93 = vector.broadcast %cst_28 : f32 to vector<8x32xf32>
    %94 = arith.addf %93, %92 : vector<8x32xf32>
    %95 = arith.divf %93, %94 : vector<8x32xf32>
    %96 = vector.extract_strided_slice %83 {offsets = [0, 64], sizes = [8, 32], strides = [1, 1]} : vector<8x128xf32> to vector<8x32xf32>
    %97 = math.tanh %96 : vector<8x32xf32>
    %98 = vector.extract_strided_slice %83 {offsets = [0, 96], sizes = [8, 32], strides = [1, 1]} : vector<8x128xf32> to vector<8x32xf32>
    %99 = arith.negf %98 : vector<8x32xf32>
    %100 = math.exp %99 : vector<8x32xf32>
    %cst_29 = arith.constant 1.000000e+00 : f32
    %101 = vector.broadcast %cst_29 : f32 to vector<8x32xf32>
    %102 = arith.addf %101, %100 : vector<8x32xf32>
    %103 = arith.divf %101, %102 : vector<8x32xf32>
    %104 = arith.mulf %95, %75 : vector<8x32xf32>
    %105 = arith.mulf %89, %97 : vector<8x32xf32>
    %106 = arith.addf %104, %105 : vector<8x32xf32>
    %107 = math.tanh %106 : vector<8x32xf32>
    %108 = arith.mulf %103, %107 : vector<8x32xf32>
    %109 = vector.extract_strided_slice %10 {offsets = [24, 0], sizes = [8, 16], strides = [1, 1]} : vector<64x16xf32> to vector<8x16xf32>
    %cst_30 = arith.constant dense<0.000000e+00> : vector<8x128xf32>
    %110 = tpu.matmul %109, %11, %cst_30 {dimension_numbers = #tpu.dot_dimension_numbers<[1], [0], [0], [1], [0, 0, 1, 1], [], []>} : vector<8x16xf32>, vector<16x128xf32>, vector<8x128xf32> -> vector<8x128xf32>
    %111 = vector.broadcast %13 : vector<1x128xf32> to vector<8x128xf32>
    %112 = arith.addf %110, %111 : vector<8x128xf32>
    %cst_31 = arith.constant dense<0.000000e+00> : vector<8x128xf32>
    %113 = tpu.matmul %108, %12, %cst_31 {dimension_numbers = #tpu.dot_dimension_numbers<[1], [0], [0], [1], [0, 0, 1, 1], [], []>} : vector<8x32xf32>, vector<32x128xf32>, vector<8x128xf32> -> vector<8x128xf32>
    %114 = arith.addf %112, %113 : vector<8x128xf32>
    %115 = vector.extract_strided_slice %114 {offsets = [0, 0], sizes = [8, 32], strides = [1, 1]} : vector<8x128xf32> to vector<8x32xf32>
    %116 = arith.negf %115 : vector<8x32xf32>
    %117 = math.exp %116 : vector<8x32xf32>
    %cst_32 = arith.constant 1.000000e+00 : f32
    %118 = vector.broadcast %cst_32 : f32 to vector<8x32xf32>
    %119 = arith.addf %118, %117 : vector<8x32xf32>
    %120 = arith.divf %118, %119 : vector<8x32xf32>
    %121 = vector.extract_strided_slice %114 {offsets = [0, 32], sizes = [8, 32], strides = [1, 1]} : vector<8x128xf32> to vector<8x32xf32>
    %122 = arith.negf %121 : vector<8x32xf32>
    %123 = math.exp %122 : vector<8x32xf32>
    %cst_33 = arith.constant 1.000000e+00 : f32
    %124 = vector.broadcast %cst_33 : f32 to vector<8x32xf32>
    %125 = arith.addf %124, %123 : vector<8x32xf32>
    %126 = arith.divf %124, %125 : vector<8x32xf32>
    %127 = vector.extract_strided_slice %114 {offsets = [0, 64], sizes = [8, 32], strides = [1, 1]} : vector<8x128xf32> to vector<8x32xf32>
    %128 = math.tanh %127 : vector<8x32xf32>
    %129 = vector.extract_strided_slice %114 {offsets = [0, 96], sizes = [8, 32], strides = [1, 1]} : vector<8x128xf32> to vector<8x32xf32>
    %130 = arith.negf %129 : vector<8x32xf32>
    %131 = math.exp %130 : vector<8x32xf32>
    %cst_34 = arith.constant 1.000000e+00 : f32
    %132 = vector.broadcast %cst_34 : f32 to vector<8x32xf32>
    %133 = arith.addf %132, %131 : vector<8x32xf32>
    %134 = arith.divf %132, %133 : vector<8x32xf32>
    %135 = arith.mulf %126, %106 : vector<8x32xf32>
    %136 = arith.mulf %120, %128 : vector<8x32xf32>
    %137 = arith.addf %135, %136 : vector<8x32xf32>
    %138 = math.tanh %137 : vector<8x32xf32>
    %139 = arith.mulf %134, %138 : vector<8x32xf32>
    %140 = vector.extract_strided_slice %10 {offsets = [32, 0], sizes = [8, 16], strides = [1, 1]} : vector<64x16xf32> to vector<8x16xf32>
    %cst_35 = arith.constant dense<0.000000e+00> : vector<8x128xf32>
    %141 = tpu.matmul %140, %11, %cst_35 {dimension_numbers = #tpu.dot_dimension_numbers<[1], [0], [0], [1], [0, 0, 1, 1], [], []>} : vector<8x16xf32>, vector<16x128xf32>, vector<8x128xf32> -> vector<8x128xf32>
    %142 = vector.broadcast %13 : vector<1x128xf32> to vector<8x128xf32>
    %143 = arith.addf %141, %142 : vector<8x128xf32>
    %cst_36 = arith.constant dense<0.000000e+00> : vector<8x128xf32>
    %144 = tpu.matmul %139, %12, %cst_36 {dimension_numbers = #tpu.dot_dimension_numbers<[1], [0], [0], [1], [0, 0, 1, 1], [], []>} : vector<8x32xf32>, vector<32x128xf32>, vector<8x128xf32> -> vector<8x128xf32>
    %145 = arith.addf %143, %144 : vector<8x128xf32>
    %146 = vector.extract_strided_slice %145 {offsets = [0, 0], sizes = [8, 32], strides = [1, 1]} : vector<8x128xf32> to vector<8x32xf32>
    %147 = arith.negf %146 : vector<8x32xf32>
    %148 = math.exp %147 : vector<8x32xf32>
    %cst_37 = arith.constant 1.000000e+00 : f32
    %149 = vector.broadcast %cst_37 : f32 to vector<8x32xf32>
    %150 = arith.addf %149, %148 : vector<8x32xf32>
    %151 = arith.divf %149, %150 : vector<8x32xf32>
    %152 = vector.extract_strided_slice %145 {offsets = [0, 32], sizes = [8, 32], strides = [1, 1]} : vector<8x128xf32> to vector<8x32xf32>
    %153 = arith.negf %152 : vector<8x32xf32>
    %154 = math.exp %153 : vector<8x32xf32>
    %cst_38 = arith.constant 1.000000e+00 : f32
    %155 = vector.broadcast %cst_38 : f32 to vector<8x32xf32>
    %156 = arith.addf %155, %154 : vector<8x32xf32>
    %157 = arith.divf %155, %156 : vector<8x32xf32>
    %158 = vector.extract_strided_slice %145 {offsets = [0, 64], sizes = [8, 32], strides = [1, 1]} : vector<8x128xf32> to vector<8x32xf32>
    %159 = math.tanh %158 : vector<8x32xf32>
    %160 = vector.extract_strided_slice %145 {offsets = [0, 96], sizes = [8, 32], strides = [1, 1]} : vector<8x128xf32> to vector<8x32xf32>
    %161 = arith.negf %160 : vector<8x32xf32>
    %162 = math.exp %161 : vector<8x32xf32>
    %cst_39 = arith.constant 1.000000e+00 : f32
    %163 = vector.broadcast %cst_39 : f32 to vector<8x32xf32>
    %164 = arith.addf %163, %162 : vector<8x32xf32>
    %165 = arith.divf %163, %164 : vector<8x32xf32>
    %166 = arith.mulf %157, %137 : vector<8x32xf32>
    %167 = arith.mulf %151, %159 : vector<8x32xf32>
    %168 = arith.addf %166, %167 : vector<8x32xf32>
    %169 = math.tanh %168 : vector<8x32xf32>
    %170 = arith.mulf %165, %169 : vector<8x32xf32>
    %171 = vector.extract_strided_slice %10 {offsets = [40, 0], sizes = [8, 16], strides = [1, 1]} : vector<64x16xf32> to vector<8x16xf32>
    %cst_40 = arith.constant dense<0.000000e+00> : vector<8x128xf32>
    %172 = tpu.matmul %171, %11, %cst_40 {dimension_numbers = #tpu.dot_dimension_numbers<[1], [0], [0], [1], [0, 0, 1, 1], [], []>} : vector<8x16xf32>, vector<16x128xf32>, vector<8x128xf32> -> vector<8x128xf32>
    %173 = vector.broadcast %13 : vector<1x128xf32> to vector<8x128xf32>
    %174 = arith.addf %172, %173 : vector<8x128xf32>
    %cst_41 = arith.constant dense<0.000000e+00> : vector<8x128xf32>
    %175 = tpu.matmul %170, %12, %cst_41 {dimension_numbers = #tpu.dot_dimension_numbers<[1], [0], [0], [1], [0, 0, 1, 1], [], []>} : vector<8x32xf32>, vector<32x128xf32>, vector<8x128xf32> -> vector<8x128xf32>
    %176 = arith.addf %174, %175 : vector<8x128xf32>
    %177 = vector.extract_strided_slice %176 {offsets = [0, 0], sizes = [8, 32], strides = [1, 1]} : vector<8x128xf32> to vector<8x32xf32>
    %178 = arith.negf %177 : vector<8x32xf32>
    %179 = math.exp %178 : vector<8x32xf32>
    %cst_42 = arith.constant 1.000000e+00 : f32
    %180 = vector.broadcast %cst_42 : f32 to vector<8x32xf32>
    %181 = arith.addf %180, %179 : vector<8x32xf32>
    %182 = arith.divf %180, %181 : vector<8x32xf32>
    %183 = vector.extract_strided_slice %176 {offsets = [0, 32], sizes = [8, 32], strides = [1, 1]} : vector<8x128xf32> to vector<8x32xf32>
    %184 = arith.negf %183 : vector<8x32xf32>
    %185 = math.exp %184 : vector<8x32xf32>
    %cst_43 = arith.constant 1.000000e+00 : f32
    %186 = vector.broadcast %cst_43 : f32 to vector<8x32xf32>
    %187 = arith.addf %186, %185 : vector<8x32xf32>
    %188 = arith.divf %186, %187 : vector<8x32xf32>
    %189 = vector.extract_strided_slice %176 {offsets = [0, 64], sizes = [8, 32], strides = [1, 1]} : vector<8x128xf32> to vector<8x32xf32>
    %190 = math.tanh %189 : vector<8x32xf32>
    %191 = vector.extract_strided_slice %176 {offsets = [0, 96], sizes = [8, 32], strides = [1, 1]} : vector<8x128xf32> to vector<8x32xf32>
    %192 = arith.negf %191 : vector<8x32xf32>
    %193 = math.exp %192 : vector<8x32xf32>
    %cst_44 = arith.constant 1.000000e+00 : f32
    %194 = vector.broadcast %cst_44 : f32 to vector<8x32xf32>
    %195 = arith.addf %194, %193 : vector<8x32xf32>
    %196 = arith.divf %194, %195 : vector<8x32xf32>
    %197 = arith.mulf %188, %168 : vector<8x32xf32>
    %198 = arith.mulf %182, %190 : vector<8x32xf32>
    %199 = arith.addf %197, %198 : vector<8x32xf32>
    %200 = math.tanh %199 : vector<8x32xf32>
    %201 = arith.mulf %196, %200 : vector<8x32xf32>
    %202 = vector.extract_strided_slice %10 {offsets = [48, 0], sizes = [8, 16], strides = [1, 1]} : vector<64x16xf32> to vector<8x16xf32>
    %cst_45 = arith.constant dense<0.000000e+00> : vector<8x128xf32>
    %203 = tpu.matmul %202, %11, %cst_45 {dimension_numbers = #tpu.dot_dimension_numbers<[1], [0], [0], [1], [0, 0, 1, 1], [], []>} : vector<8x16xf32>, vector<16x128xf32>, vector<8x128xf32> -> vector<8x128xf32>
    %204 = vector.broadcast %13 : vector<1x128xf32> to vector<8x128xf32>
    %205 = arith.addf %203, %204 : vector<8x128xf32>
    %cst_46 = arith.constant dense<0.000000e+00> : vector<8x128xf32>
    %206 = tpu.matmul %201, %12, %cst_46 {dimension_numbers = #tpu.dot_dimension_numbers<[1], [0], [0], [1], [0, 0, 1, 1], [], []>} : vector<8x32xf32>, vector<32x128xf32>, vector<8x128xf32> -> vector<8x128xf32>
    %207 = arith.addf %205, %206 : vector<8x128xf32>
    %208 = vector.extract_strided_slice %207 {offsets = [0, 0], sizes = [8, 32], strides = [1, 1]} : vector<8x128xf32> to vector<8x32xf32>
    %209 = arith.negf %208 : vector<8x32xf32>
    %210 = math.exp %209 : vector<8x32xf32>
    %cst_47 = arith.constant 1.000000e+00 : f32
    %211 = vector.broadcast %cst_47 : f32 to vector<8x32xf32>
    %212 = arith.addf %211, %210 : vector<8x32xf32>
    %213 = arith.divf %211, %212 : vector<8x32xf32>
    %214 = vector.extract_strided_slice %207 {offsets = [0, 32], sizes = [8, 32], strides = [1, 1]} : vector<8x128xf32> to vector<8x32xf32>
    %215 = arith.negf %214 : vector<8x32xf32>
    %216 = math.exp %215 : vector<8x32xf32>
    %cst_48 = arith.constant 1.000000e+00 : f32
    %217 = vector.broadcast %cst_48 : f32 to vector<8x32xf32>
    %218 = arith.addf %217, %216 : vector<8x32xf32>
    %219 = arith.divf %217, %218 : vector<8x32xf32>
    %220 = vector.extract_strided_slice %207 {offsets = [0, 64], sizes = [8, 32], strides = [1, 1]} : vector<8x128xf32> to vector<8x32xf32>
    %221 = math.tanh %220 : vector<8x32xf32>
    %222 = vector.extract_strided_slice %207 {offsets = [0, 96], sizes = [8, 32], strides = [1, 1]} : vector<8x128xf32> to vector<8x32xf32>
    %223 = arith.negf %222 : vector<8x32xf32>
    %224 = math.exp %223 : vector<8x32xf32>
    %cst_49 = arith.constant 1.000000e+00 : f32
    %225 = vector.broadcast %cst_49 : f32 to vector<8x32xf32>
    %226 = arith.addf %225, %224 : vector<8x32xf32>
    %227 = arith.divf %225, %226 : vector<8x32xf32>
    %228 = arith.mulf %219, %199 : vector<8x32xf32>
    %229 = arith.mulf %213, %221 : vector<8x32xf32>
    %230 = arith.addf %228, %229 : vector<8x32xf32>
    %231 = math.tanh %230 : vector<8x32xf32>
    %232 = arith.mulf %227, %231 : vector<8x32xf32>
    %233 = vector.extract_strided_slice %10 {offsets = [56, 0], sizes = [8, 16], strides = [1, 1]} : vector<64x16xf32> to vector<8x16xf32>
    %cst_50 = arith.constant dense<0.000000e+00> : vector<8x128xf32>
    %234 = tpu.matmul %233, %11, %cst_50 {dimension_numbers = #tpu.dot_dimension_numbers<[1], [0], [0], [1], [0, 0, 1, 1], [], []>} : vector<8x16xf32>, vector<16x128xf32>, vector<8x128xf32> -> vector<8x128xf32>
    %235 = vector.broadcast %13 : vector<1x128xf32> to vector<8x128xf32>
    %236 = arith.addf %234, %235 : vector<8x128xf32>
    %cst_51 = arith.constant dense<0.000000e+00> : vector<8x128xf32>
    %237 = tpu.matmul %232, %12, %cst_51 {dimension_numbers = #tpu.dot_dimension_numbers<[1], [0], [0], [1], [0, 0, 1, 1], [], []>} : vector<8x32xf32>, vector<32x128xf32>, vector<8x128xf32> -> vector<8x128xf32>
    %238 = arith.addf %236, %237 : vector<8x128xf32>
    %239 = vector.extract_strided_slice %238 {offsets = [0, 0], sizes = [8, 32], strides = [1, 1]} : vector<8x128xf32> to vector<8x32xf32>
    %240 = arith.negf %239 : vector<8x32xf32>
    %241 = math.exp %240 : vector<8x32xf32>
    %cst_52 = arith.constant 1.000000e+00 : f32
    %242 = vector.broadcast %cst_52 : f32 to vector<8x32xf32>
    %243 = arith.addf %242, %241 : vector<8x32xf32>
    %244 = arith.divf %242, %243 : vector<8x32xf32>
    %245 = vector.extract_strided_slice %238 {offsets = [0, 32], sizes = [8, 32], strides = [1, 1]} : vector<8x128xf32> to vector<8x32xf32>
    %246 = arith.negf %245 : vector<8x32xf32>
    %247 = math.exp %246 : vector<8x32xf32>
    %cst_53 = arith.constant 1.000000e+00 : f32
    %248 = vector.broadcast %cst_53 : f32 to vector<8x32xf32>
    %249 = arith.addf %248, %247 : vector<8x32xf32>
    %250 = arith.divf %248, %249 : vector<8x32xf32>
    %251 = vector.extract_strided_slice %238 {offsets = [0, 64], sizes = [8, 32], strides = [1, 1]} : vector<8x128xf32> to vector<8x32xf32>
    %252 = math.tanh %251 : vector<8x32xf32>
    %253 = vector.extract_strided_slice %238 {offsets = [0, 96], sizes = [8, 32], strides = [1, 1]} : vector<8x128xf32> to vector<8x32xf32>
    %254 = arith.negf %253 : vector<8x32xf32>
    %255 = math.exp %254 : vector<8x32xf32>
    %cst_54 = arith.constant 1.000000e+00 : f32
    %256 = vector.broadcast %cst_54 : f32 to vector<8x32xf32>
    %257 = arith.addf %256, %255 : vector<8x32xf32>
    %258 = arith.divf %256, %257 : vector<8x32xf32>
    %259 = arith.mulf %250, %230 : vector<8x32xf32>
    %260 = arith.mulf %244, %252 : vector<8x32xf32>
    %261 = arith.addf %259, %260 : vector<8x32xf32>
    %262 = math.tanh %261 : vector<8x32xf32>
    %263 = arith.mulf %258, %262 : vector<8x32xf32>
    %264 = tpu.concatenate %46, %77, %108, %139, %170, %201, %232, %263 in 0 : vector<8x32xf32>, vector<8x32xf32>, vector<8x32xf32>, vector<8x32xf32>, vector<8x32xf32>, vector<8x32xf32>, vector<8x32xf32>, vector<8x32xf32> -> vector<64x32xf32>
    %c0_55 = arith.constant 0 : index
    %c0_56 = arith.constant 0 : index
    %265 = vector.load %arg7[%c0_55, %c0_56] : memref<32x64xf32, #tpu.memory_space<vmem>>, vector<32x64xf32>
    %cst_57 = arith.constant dense<0.000000e+00> : vector<64x64xf32>
    %266 = tpu.matmul %264, %265, %cst_57 {dimension_numbers = #tpu.dot_dimension_numbers<[1], [0], [0], [1], [0, 0, 1, 1], [], []>} : vector<64x32xf32>, vector<32x64xf32>, vector<64x64xf32> -> vector<64x64xf32>
    %c0_58 = arith.constant 0 : index
    %c0_59 = arith.constant 0 : index
    %267 = vector.load %arg8[%c0_58, %c0_59] : memref<1x64xf32, #tpu.memory_space<vmem>>, vector<1x64xf32>
    %268 = vector.broadcast %267 : vector<1x64xf32> to vector<64x64xf32>
    %269 = arith.addf %266, %268 : vector<64x64xf32>
    %c0_60 = arith.constant 0 : index
    %c0_61 = arith.constant 0 : index
    %270 = vector.load %arg1[%c0_60, %c0_61] : memref<64x64xf32, #tpu.memory_space<vmem>>, vector<64x64xf32>
    %cst_62 = arith.constant dense<0.000000e+00> : vector<64x64xf32>
    %271 = tpu.matmul %270, %269, %cst_62 {dimension_numbers = #tpu.dot_dimension_numbers<[1], [0], [0], [1], [0, 0, 1, 1], [], []>} : vector<64x64xf32>, vector<64x64xf32>, vector<64x64xf32> -> vector<64x64xf32>
    %cst_63 = arith.constant 0.000000e+00 : f32
    %272 = vector.broadcast %cst_63 : f32 to vector<64x64xf32>
    %273 = arith.cmpf ogt, %271, %272 : vector<64x64xf32>
    %cst_64 = arith.constant 1.000000e-01 : f32
    %274 = vector.broadcast %cst_64 : f32 to vector<64x64xf32>
    %275 = arith.mulf %274, %271 : vector<64x64xf32>
    %276 = arith.select %273, %271, %275 : vector<64x64xi1>, vector<64x64xf32>
    %c0_65 = arith.constant 0 : index
    %c0_66 = arith.constant 0 : index
    %277 = vector.load %arg9[%c0_65, %c0_66] : memref<64x64xf32, #tpu.memory_space<vmem>>, vector<64x64xf32>
    %cst_67 = arith.constant dense<0.000000e+00> : vector<64x64xf32>
    %278 = tpu.matmul %276, %277, %cst_67 {dimension_numbers = #tpu.dot_dimension_numbers<[1], [0], [0], [1], [0, 0, 1, 1], [], []>} : vector<64x64xf32>, vector<64x64xf32>, vector<64x64xf32> -> vector<64x64xf32>
    %c0_68 = arith.constant 0 : index
    %c0_69 = arith.constant 0 : index
    %279 = vector.load %arg10[%c0_68, %c0_69] : memref<1x64xf32, #tpu.memory_space<vmem>>, vector<1x64xf32>
    %280 = vector.broadcast %279 : vector<1x64xf32> to vector<64x64xf32>
    %281 = arith.addf %278, %280 : vector<64x64xf32>
    %cst_70 = arith.constant 0.000000e+00 : f32
    %282 = vector.broadcast %cst_70 : f32 to vector<64x64xf32>
    %283 = arith.cmpf ogt, %281, %282 : vector<64x64xf32>
    %cst_71 = arith.constant 1.000000e-01 : f32
    %284 = vector.broadcast %cst_71 : f32 to vector<64x64xf32>
    %285 = arith.mulf %284, %281 : vector<64x64xf32>
    %286 = arith.select %283, %281, %285 : vector<64x64xi1>, vector<64x64xf32>
    %c0_72 = arith.constant 0 : index
    %c0_73 = arith.constant 0 : index
    %287 = vector.load %arg11[%c0_72, %c0_73] : memref<64x16xf32, #tpu.memory_space<vmem>>, vector<64x16xf32>
    %c0_74 = arith.constant 0 : index
    %c0_75 = arith.constant 0 : index
    %288 = vector.load %arg12[%c0_74, %c0_75] : memref<1x16xf32, #tpu.memory_space<vmem>>, vector<1x16xf32>
    %c0_76 = arith.constant 0 : index
    %c0_77 = arith.constant 0 : index
    %289 = vector.load %arg13[%c0_76, %c0_77] : memref<64x16xf32, #tpu.memory_space<vmem>>, vector<64x16xf32>
    %c0_78 = arith.constant 0 : index
    %c0_79 = arith.constant 0 : index
    %290 = vector.load %arg14[%c0_78, %c0_79] : memref<1x16xf32, #tpu.memory_space<vmem>>, vector<1x16xf32>
    %c0_80 = arith.constant 0 : index
    %c0_81 = arith.constant 0 : index
    %291 = vector.load %arg15[%c0_80, %c0_81] : memref<1x16xf32, #tpu.memory_space<vmem>>, vector<1x16xf32>
    %c0_82 = arith.constant 0 : index
    %c0_83 = arith.constant 0 : index
    %292 = vector.load %arg16[%c0_82, %c0_83] : memref<1x16xf32, #tpu.memory_space<vmem>>, vector<1x16xf32>
    %cst_84 = arith.constant dense<0.000000e+00> : vector<64x16xf32>
    %293 = tpu.matmul %286, %289, %cst_84 {dimension_numbers = #tpu.dot_dimension_numbers<[1], [0], [0], [1], [0, 0, 1, 1], [], []>} : vector<64x64xf32>, vector<64x16xf32>, vector<64x16xf32> -> vector<64x16xf32>
    %294 = vector.broadcast %290 : vector<1x16xf32> to vector<64x16xf32>
    %295 = arith.addf %293, %294 : vector<64x16xf32>
    %cst_85 = arith.constant dense<0.000000e+00> : vector<16xf32>
    %296 = vector.multi_reduction <add>, %295, %cst_85 [0] : vector<64x16xf32> to vector<16xf32>
    %297 = vector.shape_cast %296 : vector<16xf32> to vector<1x16xf32>
    %cst_86 = arith.constant 6.400000e+01 : f32
    %298 = vector.broadcast %cst_86 : f32 to vector<1x16xf32>
    %299 = arith.divf %297, %298 : vector<1x16xf32>
    %300 = vector.broadcast %299 : vector<1x16xf32> to vector<64x16xf32>
    %301 = arith.subf %295, %300 : vector<64x16xf32>
    %302 = arith.mulf %301, %301 : vector<64x16xf32>
    %cst_87 = arith.constant dense<0.000000e+00> : vector<16xf32>
    %303 = vector.multi_reduction <add>, %302, %cst_87 [0] : vector<64x16xf32> to vector<16xf32>
    %304 = vector.shape_cast %303 : vector<16xf32> to vector<1x16xf32>
    %cst_88 = arith.constant 6.400000e+01 : f32
    %305 = vector.broadcast %cst_88 : f32 to vector<1x16xf32>
    %306 = arith.divf %304, %305 : vector<1x16xf32>
    %307 = vector.broadcast %299 : vector<1x16xf32> to vector<64x16xf32>
    %308 = arith.subf %295, %307 : vector<64x16xf32>
    %cst_89 = arith.constant 9.99999974E-6 : f32
    %309 = vector.broadcast %cst_89 : f32 to vector<1x16xf32>
    %310 = arith.addf %306, %309 : vector<1x16xf32>
    %311 = math.rsqrt %310 : vector<1x16xf32>
    %312 = vector.broadcast %311 : vector<1x16xf32> to vector<64x16xf32>
    %313 = arith.mulf %308, %312 : vector<64x16xf32>
    %314 = vector.broadcast %291 : vector<1x16xf32> to vector<64x16xf32>
    %315 = arith.mulf %313, %314 : vector<64x16xf32>
    %316 = vector.broadcast %292 : vector<1x16xf32> to vector<64x16xf32>
    %317 = arith.addf %315, %316 : vector<64x16xf32>
    %cst_90 = arith.constant 0.000000e+00 : f32
    %318 = vector.broadcast %cst_90 : f32 to vector<64x64xf32>
    %319 = arith.cmpf ogt, %286, %318 : vector<64x64xf32>
    %cst_91 = arith.constant 1.000000e-01 : f32
    %320 = vector.broadcast %cst_91 : f32 to vector<64x64xf32>
    %321 = arith.mulf %320, %286 : vector<64x64xf32>
    %322 = arith.select %319, %286, %321 : vector<64x64xi1>, vector<64x64xf32>
    %cst_92 = arith.constant dense<0.000000e+00> : vector<64x16xf32>
    %323 = tpu.matmul %322, %287, %cst_92 {dimension_numbers = #tpu.dot_dimension_numbers<[1], [0], [0], [1], [0, 0, 1, 1], [], []>} : vector<64x64xf32>, vector<64x16xf32>, vector<64x16xf32> -> vector<64x16xf32>
    %324 = vector.broadcast %288 : vector<1x16xf32> to vector<64x16xf32>
    %325 = arith.addf %323, %324 : vector<64x16xf32>
    %326 = arith.addf %325, %317 : vector<64x16xf32>
    %cst_93 = arith.constant 0.000000e+00 : f32
    %327 = vector.broadcast %cst_93 : f32 to vector<64x16xf32>
    %328 = arith.cmpf ogt, %326, %327 : vector<64x16xf32>
    %cst_94 = arith.constant 1.000000e-01 : f32
    %329 = vector.broadcast %cst_94 : f32 to vector<64x16xf32>
    %330 = arith.mulf %329, %326 : vector<64x16xf32>
    %331 = arith.select %328, %326, %330 : vector<64x16xi1>, vector<64x16xf32>
    %c0_95 = arith.constant 0 : index
    %c0_96 = arith.constant 0 : index
    %332 = vector.load %arg17[%c0_95, %c0_96] : memref<16x8xf32, #tpu.memory_space<vmem>>, vector<16x8xf32>
    %c0_97 = arith.constant 0 : index
    %c0_98 = arith.constant 0 : index
    %333 = vector.load %arg18[%c0_97, %c0_98] : memref<1x8xf32, #tpu.memory_space<vmem>>, vector<1x8xf32>
    %c0_99 = arith.constant 0 : index
    %c0_100 = arith.constant 0 : index
    %334 = vector.load %arg19[%c0_99, %c0_100] : memref<16x8xf32, #tpu.memory_space<vmem>>, vector<16x8xf32>
    %c0_101 = arith.constant 0 : index
    %c0_102 = arith.constant 0 : index
    %335 = vector.load %arg20[%c0_101, %c0_102] : memref<1x8xf32, #tpu.memory_space<vmem>>, vector<1x8xf32>
    %c0_103 = arith.constant 0 : index
    %c0_104 = arith.constant 0 : index
    %336 = vector.load %arg21[%c0_103, %c0_104] : memref<1x8xf32, #tpu.memory_space<vmem>>, vector<1x8xf32>
    %c0_105 = arith.constant 0 : index
    %c0_106 = arith.constant 0 : index
    %337 = vector.load %arg22[%c0_105, %c0_106] : memref<1x8xf32, #tpu.memory_space<vmem>>, vector<1x8xf32>
    %cst_107 = arith.constant dense<0.000000e+00> : vector<64x8xf32>
    %338 = tpu.matmul %331, %334, %cst_107 {dimension_numbers = #tpu.dot_dimension_numbers<[1], [0], [0], [1], [0, 0, 1, 1], [], []>} : vector<64x16xf32>, vector<16x8xf32>, vector<64x8xf32> -> vector<64x8xf32>
    %339 = vector.broadcast %335 : vector<1x8xf32> to vector<64x8xf32>
    %340 = arith.addf %338, %339 : vector<64x8xf32>
    %cst_108 = arith.constant dense<0.000000e+00> : vector<8xf32>
    %341 = vector.multi_reduction <add>, %340, %cst_108 [0] : vector<64x8xf32> to vector<8xf32>
    %342 = vector.shape_cast %341 : vector<8xf32> to vector<1x8xf32>
    %cst_109 = arith.constant 6.400000e+01 : f32
    %343 = vector.broadcast %cst_109 : f32 to vector<1x8xf32>
    %344 = arith.divf %342, %343 : vector<1x8xf32>
    %345 = vector.broadcast %344 : vector<1x8xf32> to vector<64x8xf32>
    %346 = arith.subf %340, %345 : vector<64x8xf32>
    %347 = arith.mulf %346, %346 : vector<64x8xf32>
    %cst_110 = arith.constant dense<0.000000e+00> : vector<8xf32>
    %348 = vector.multi_reduction <add>, %347, %cst_110 [0] : vector<64x8xf32> to vector<8xf32>
    %349 = vector.shape_cast %348 : vector<8xf32> to vector<1x8xf32>
    %cst_111 = arith.constant 6.400000e+01 : f32
    %350 = vector.broadcast %cst_111 : f32 to vector<1x8xf32>
    %351 = arith.divf %349, %350 : vector<1x8xf32>
    %352 = vector.broadcast %344 : vector<1x8xf32> to vector<64x8xf32>
    %353 = arith.subf %340, %352 : vector<64x8xf32>
    %cst_112 = arith.constant 9.99999974E-6 : f32
    %354 = vector.broadcast %cst_112 : f32 to vector<1x8xf32>
    %355 = arith.addf %351, %354 : vector<1x8xf32>
    %356 = math.rsqrt %355 : vector<1x8xf32>
    %357 = vector.broadcast %356 : vector<1x8xf32> to vector<64x8xf32>
    %358 = arith.mulf %353, %357 : vector<64x8xf32>
    %359 = vector.broadcast %336 : vector<1x8xf32> to vector<64x8xf32>
    %360 = arith.mulf %358, %359 : vector<64x8xf32>
    %361 = vector.broadcast %337 : vector<1x8xf32> to vector<64x8xf32>
    %362 = arith.addf %360, %361 : vector<64x8xf32>
    %cst_113 = arith.constant 0.000000e+00 : f32
    %363 = vector.broadcast %cst_113 : f32 to vector<64x16xf32>
    %364 = arith.cmpf ogt, %331, %363 : vector<64x16xf32>
    %cst_114 = arith.constant 1.000000e-01 : f32
    %365 = vector.broadcast %cst_114 : f32 to vector<64x16xf32>
    %366 = arith.mulf %365, %331 : vector<64x16xf32>
    %367 = arith.select %364, %331, %366 : vector<64x16xi1>, vector<64x16xf32>
    %cst_115 = arith.constant dense<0.000000e+00> : vector<64x8xf32>
    %368 = tpu.matmul %367, %332, %cst_115 {dimension_numbers = #tpu.dot_dimension_numbers<[1], [0], [0], [1], [0, 0, 1, 1], [], []>} : vector<64x16xf32>, vector<16x8xf32>, vector<64x8xf32> -> vector<64x8xf32>
    %369 = vector.broadcast %333 : vector<1x8xf32> to vector<64x8xf32>
    %370 = arith.addf %368, %369 : vector<64x8xf32>
    %371 = arith.addf %370, %362 : vector<64x8xf32>
    %cst_116 = arith.constant 0.000000e+00 : f32
    %372 = vector.broadcast %cst_116 : f32 to vector<64x8xf32>
    %373 = arith.cmpf ogt, %371, %372 : vector<64x8xf32>
    %cst_117 = arith.constant 1.000000e-01 : f32
    %374 = vector.broadcast %cst_117 : f32 to vector<64x8xf32>
    %375 = arith.mulf %374, %371 : vector<64x8xf32>
    %376 = arith.select %373, %371, %375 : vector<64x8xi1>, vector<64x8xf32>
    %377 = vector.extract_strided_slice %376 {offsets = [0, 0], sizes = [8, 8], strides = [1, 1]} : vector<64x8xf32> to vector<8x8xf32>
    %378 = vector.extract_strided_slice %376 {offsets = [8, 0], sizes = [8, 8], strides = [1, 1]} : vector<64x8xf32> to vector<8x8xf32>
    %379 = vector.extract_strided_slice %376 {offsets = [16, 0], sizes = [8, 8], strides = [1, 1]} : vector<64x8xf32> to vector<8x8xf32>
    %380 = arith.maximumf %378, %379 : vector<8x8xf32>
    %381 = vector.extract_strided_slice %376 {offsets = [24, 0], sizes = [8, 8], strides = [1, 1]} : vector<64x8xf32> to vector<8x8xf32>
    %382 = vector.extract_strided_slice %376 {offsets = [32, 0], sizes = [8, 8], strides = [1, 1]} : vector<64x8xf32> to vector<8x8xf32>
    %383 = arith.maximumf %381, %382 : vector<8x8xf32>
    %384 = vector.extract_strided_slice %376 {offsets = [40, 0], sizes = [8, 8], strides = [1, 1]} : vector<64x8xf32> to vector<8x8xf32>
    %385 = vector.extract_strided_slice %376 {offsets = [48, 0], sizes = [8, 8], strides = [1, 1]} : vector<64x8xf32> to vector<8x8xf32>
    %386 = arith.maximumf %384, %385 : vector<8x8xf32>
    %387 = vector.extract_strided_slice %376 {offsets = [56, 0], sizes = [8, 8], strides = [1, 1]} : vector<64x8xf32> to vector<8x8xf32>
    %388 = tpu.concatenate %377, %380, %383, %386, %387 in 1 : vector<8x8xf32>, vector<8x8xf32>, vector<8x8xf32>, vector<8x8xf32>, vector<8x8xf32> -> vector<8x40xf32>
    %c0_118 = arith.constant 0 : index
    %c0_119 = arith.constant 0 : index
    %389 = vector.load %arg23[%c0_118, %c0_119] : memref<32x16xf32, #tpu.memory_space<vmem>>, vector<32x16xf32>
    %cst_120 = arith.constant dense<0.000000e+00> : vector<8x16xf32>
    %390 = tpu.matmul %263, %389, %cst_120 {dimension_numbers = #tpu.dot_dimension_numbers<[1], [0], [0], [1], [0, 0, 1, 1], [], []>} : vector<8x32xf32>, vector<32x16xf32>, vector<8x16xf32> -> vector<8x16xf32>
    %c0_121 = arith.constant 0 : index
    %c0_122 = arith.constant 0 : index
    %391 = vector.load %arg24[%c0_121, %c0_122] : memref<1x16xf32, #tpu.memory_space<vmem>>, vector<1x16xf32>
    %392 = vector.broadcast %391 : vector<1x16xf32> to vector<8x16xf32>
    %393 = arith.addf %390, %392 : vector<8x16xf32>
    %cst_123 = arith.constant 0.000000e+00 : f32
    %394 = vector.broadcast %cst_123 : f32 to vector<8x16xf32>
    %395 = arith.cmpf ogt, %393, %394 : vector<8x16xf32>
    %cst_124 = arith.constant 1.000000e-01 : f32
    %396 = vector.broadcast %cst_124 : f32 to vector<8x16xf32>
    %397 = arith.mulf %396, %393 : vector<8x16xf32>
    %398 = arith.select %395, %393, %397 : vector<8x16xi1>, vector<8x16xf32>
    %399 = tpu.concatenate %388, %398 in 1 : vector<8x40xf32>, vector<8x16xf32> -> vector<8x56xf32>
    %c0_125 = arith.constant 0 : index
    %c0_126 = arith.constant 0 : index
    %400 = vector.load %arg25[%c0_125, %c0_126] : memref<56x128xf32, #tpu.memory_space<vmem>>, vector<56x128xf32>
    %cst_127 = arith.constant dense<0.000000e+00> : vector<8x128xf32>
    %401 = tpu.matmul %399, %400, %cst_127 {dimension_numbers = #tpu.dot_dimension_numbers<[1], [0], [0], [1], [0, 0, 1, 1], [], []>} : vector<8x56xf32>, vector<56x128xf32>, vector<8x128xf32> -> vector<8x128xf32>
    %c0_128 = arith.constant 0 : index
    %c0_129 = arith.constant 0 : index
    %402 = vector.load %arg27[%c0_128, %c0_129] : memref<1x128xf32, #tpu.memory_space<vmem>>, vector<1x128xf32>
    %403 = vector.broadcast %402 : vector<1x128xf32> to vector<8x128xf32>
    %404 = arith.addf %401, %403 : vector<8x128xf32>
    %c0_130 = arith.constant 0 : index
    %c0_131 = arith.constant 0 : index
    %405 = vector.load %arg26[%c0_130, %c0_131] : memref<32x128xf32, #tpu.memory_space<vmem>>, vector<32x128xf32>
    %cst_132 = arith.constant 0.000000e+00 : f32
    %406 = vector.broadcast %cst_132 : f32 to vector<8x32xf32>
    %cst_133 = arith.constant 0.000000e+00 : f32
    %407 = vector.broadcast %cst_133 : f32 to vector<8x32xf32>
    %cst_134 = arith.constant dense<0.000000e+00> : vector<8x128xf32>
    %408 = tpu.matmul %406, %405, %cst_134 {dimension_numbers = #tpu.dot_dimension_numbers<[1], [0], [0], [1], [0, 0, 1, 1], [], []>} : vector<8x32xf32>, vector<32x128xf32>, vector<8x128xf32> -> vector<8x128xf32>
    %409 = arith.addf %404, %408 : vector<8x128xf32>
    %410 = vector.extract_strided_slice %409 {offsets = [0, 0], sizes = [8, 32], strides = [1, 1]} : vector<8x128xf32> to vector<8x32xf32>
    %411 = arith.negf %410 : vector<8x32xf32>
    %412 = math.exp %411 : vector<8x32xf32>
    %cst_135 = arith.constant 1.000000e+00 : f32
    %413 = vector.broadcast %cst_135 : f32 to vector<8x32xf32>
    %414 = arith.addf %413, %412 : vector<8x32xf32>
    %415 = arith.divf %413, %414 : vector<8x32xf32>
    %416 = vector.extract_strided_slice %409 {offsets = [0, 32], sizes = [8, 32], strides = [1, 1]} : vector<8x128xf32> to vector<8x32xf32>
    %417 = arith.negf %416 : vector<8x32xf32>
    %418 = math.exp %417 : vector<8x32xf32>
    %cst_136 = arith.constant 1.000000e+00 : f32
    %419 = vector.broadcast %cst_136 : f32 to vector<8x32xf32>
    %420 = arith.addf %419, %418 : vector<8x32xf32>
    %421 = arith.divf %419, %420 : vector<8x32xf32>
    %422 = vector.extract_strided_slice %409 {offsets = [0, 64], sizes = [8, 32], strides = [1, 1]} : vector<8x128xf32> to vector<8x32xf32>
    %423 = math.tanh %422 : vector<8x32xf32>
    %424 = vector.extract_strided_slice %409 {offsets = [0, 96], sizes = [8, 32], strides = [1, 1]} : vector<8x128xf32> to vector<8x32xf32>
    %425 = arith.negf %424 : vector<8x32xf32>
    %426 = math.exp %425 : vector<8x32xf32>
    %cst_137 = arith.constant 1.000000e+00 : f32
    %427 = vector.broadcast %cst_137 : f32 to vector<8x32xf32>
    %428 = arith.addf %427, %426 : vector<8x32xf32>
    %429 = arith.divf %427, %428 : vector<8x32xf32>
    %430 = arith.mulf %421, %407 : vector<8x32xf32>
    %431 = arith.mulf %415, %423 : vector<8x32xf32>
    %432 = arith.addf %430, %431 : vector<8x32xf32>
    %433 = math.tanh %432 : vector<8x32xf32>
    %434 = arith.mulf %429, %433 : vector<8x32xf32>
    %cst_138 = arith.constant dense<0.000000e+00> : vector<8x128xf32>
    %435 = tpu.matmul %434, %405, %cst_138 {dimension_numbers = #tpu.dot_dimension_numbers<[1], [0], [0], [1], [0, 0, 1, 1], [], []>} : vector<8x32xf32>, vector<32x128xf32>, vector<8x128xf32> -> vector<8x128xf32>
    %436 = arith.addf %404, %435 : vector<8x128xf32>
    %437 = vector.extract_strided_slice %436 {offsets = [0, 0], sizes = [8, 32], strides = [1, 1]} : vector<8x128xf32> to vector<8x32xf32>
    %438 = arith.negf %437 : vector<8x32xf32>
    %439 = math.exp %438 : vector<8x32xf32>
    %cst_139 = arith.constant 1.000000e+00 : f32
    %440 = vector.broadcast %cst_139 : f32 to vector<8x32xf32>
    %441 = arith.addf %440, %439 : vector<8x32xf32>
    %442 = arith.divf %440, %441 : vector<8x32xf32>
    %443 = vector.extract_strided_slice %436 {offsets = [0, 32], sizes = [8, 32], strides = [1, 1]} : vector<8x128xf32> to vector<8x32xf32>
    %444 = arith.negf %443 : vector<8x32xf32>
    %445 = math.exp %444 : vector<8x32xf32>
    %cst_140 = arith.constant 1.000000e+00 : f32
    %446 = vector.broadcast %cst_140 : f32 to vector<8x32xf32>
    %447 = arith.addf %446, %445 : vector<8x32xf32>
    %448 = arith.divf %446, %447 : vector<8x32xf32>
    %449 = vector.extract_strided_slice %436 {offsets = [0, 64], sizes = [8, 32], strides = [1, 1]} : vector<8x128xf32> to vector<8x32xf32>
    %450 = math.tanh %449 : vector<8x32xf32>
    %451 = vector.extract_strided_slice %436 {offsets = [0, 96], sizes = [8, 32], strides = [1, 1]} : vector<8x128xf32> to vector<8x32xf32>
    %452 = arith.negf %451 : vector<8x32xf32>
    %453 = math.exp %452 : vector<8x32xf32>
    %cst_141 = arith.constant 1.000000e+00 : f32
    %454 = vector.broadcast %cst_141 : f32 to vector<8x32xf32>
    %455 = arith.addf %454, %453 : vector<8x32xf32>
    %456 = arith.divf %454, %455 : vector<8x32xf32>
    %457 = arith.mulf %448, %432 : vector<8x32xf32>
    %458 = arith.mulf %442, %450 : vector<8x32xf32>
    %459 = arith.addf %457, %458 : vector<8x32xf32>
    %460 = math.tanh %459 : vector<8x32xf32>
    %461 = arith.mulf %456, %460 : vector<8x32xf32>
    %cst_142 = arith.constant dense<0.000000e+00> : vector<8x128xf32>
    %462 = tpu.matmul %461, %405, %cst_142 {dimension_numbers = #tpu.dot_dimension_numbers<[1], [0], [0], [1], [0, 0, 1, 1], [], []>} : vector<8x32xf32>, vector<32x128xf32>, vector<8x128xf32> -> vector<8x128xf32>
    %463 = arith.addf %404, %462 : vector<8x128xf32>
    %464 = vector.extract_strided_slice %463 {offsets = [0, 0], sizes = [8, 32], strides = [1, 1]} : vector<8x128xf32> to vector<8x32xf32>
    %465 = arith.negf %464 : vector<8x32xf32>
    %466 = math.exp %465 : vector<8x32xf32>
    %cst_143 = arith.constant 1.000000e+00 : f32
    %467 = vector.broadcast %cst_143 : f32 to vector<8x32xf32>
    %468 = arith.addf %467, %466 : vector<8x32xf32>
    %469 = arith.divf %467, %468 : vector<8x32xf32>
    %470 = vector.extract_strided_slice %463 {offsets = [0, 32], sizes = [8, 32], strides = [1, 1]} : vector<8x128xf32> to vector<8x32xf32>
    %471 = arith.negf %470 : vector<8x32xf32>
    %472 = math.exp %471 : vector<8x32xf32>
    %cst_144 = arith.constant 1.000000e+00 : f32
    %473 = vector.broadcast %cst_144 : f32 to vector<8x32xf32>
    %474 = arith.addf %473, %472 : vector<8x32xf32>
    %475 = arith.divf %473, %474 : vector<8x32xf32>
    %476 = vector.extract_strided_slice %463 {offsets = [0, 64], sizes = [8, 32], strides = [1, 1]} : vector<8x128xf32> to vector<8x32xf32>
    %477 = math.tanh %476 : vector<8x32xf32>
    %478 = vector.extract_strided_slice %463 {offsets = [0, 96], sizes = [8, 32], strides = [1, 1]} : vector<8x128xf32> to vector<8x32xf32>
    %479 = arith.negf %478 : vector<8x32xf32>
    %480 = math.exp %479 : vector<8x32xf32>
    %cst_145 = arith.constant 1.000000e+00 : f32
    %481 = vector.broadcast %cst_145 : f32 to vector<8x32xf32>
    %482 = arith.addf %481, %480 : vector<8x32xf32>
    %483 = arith.divf %481, %482 : vector<8x32xf32>
    %484 = arith.mulf %475, %459 : vector<8x32xf32>
    %485 = arith.mulf %469, %477 : vector<8x32xf32>
    %486 = arith.addf %484, %485 : vector<8x32xf32>
    %487 = math.tanh %486 : vector<8x32xf32>
    %488 = arith.mulf %483, %487 : vector<8x32xf32>
    %cst_146 = arith.constant dense<0.000000e+00> : vector<8x128xf32>
    %489 = tpu.matmul %488, %405, %cst_146 {dimension_numbers = #tpu.dot_dimension_numbers<[1], [0], [0], [1], [0, 0, 1, 1], [], []>} : vector<8x32xf32>, vector<32x128xf32>, vector<8x128xf32> -> vector<8x128xf32>
    %490 = arith.addf %404, %489 : vector<8x128xf32>
    %491 = vector.extract_strided_slice %490 {offsets = [0, 0], sizes = [8, 32], strides = [1, 1]} : vector<8x128xf32> to vector<8x32xf32>
    %492 = arith.negf %491 : vector<8x32xf32>
    %493 = math.exp %492 : vector<8x32xf32>
    %cst_147 = arith.constant 1.000000e+00 : f32
    %494 = vector.broadcast %cst_147 : f32 to vector<8x32xf32>
    %495 = arith.addf %494, %493 : vector<8x32xf32>
    %496 = arith.divf %494, %495 : vector<8x32xf32>
    %497 = vector.extract_strided_slice %490 {offsets = [0, 32], sizes = [8, 32], strides = [1, 1]} : vector<8x128xf32> to vector<8x32xf32>
    %498 = arith.negf %497 : vector<8x32xf32>
    %499 = math.exp %498 : vector<8x32xf32>
    %cst_148 = arith.constant 1.000000e+00 : f32
    %500 = vector.broadcast %cst_148 : f32 to vector<8x32xf32>
    %501 = arith.addf %500, %499 : vector<8x32xf32>
    %502 = arith.divf %500, %501 : vector<8x32xf32>
    %503 = vector.extract_strided_slice %490 {offsets = [0, 64], sizes = [8, 32], strides = [1, 1]} : vector<8x128xf32> to vector<8x32xf32>
    %504 = math.tanh %503 : vector<8x32xf32>
    %505 = vector.extract_strided_slice %490 {offsets = [0, 96], sizes = [8, 32], strides = [1, 1]} : vector<8x128xf32> to vector<8x32xf32>
    %506 = arith.negf %505 : vector<8x32xf32>
    %507 = math.exp %506 : vector<8x32xf32>
    %cst_149 = arith.constant 1.000000e+00 : f32
    %508 = vector.broadcast %cst_149 : f32 to vector<8x32xf32>
    %509 = arith.addf %508, %507 : vector<8x32xf32>
    %510 = arith.divf %508, %509 : vector<8x32xf32>
    %511 = arith.mulf %502, %486 : vector<8x32xf32>
    %512 = arith.mulf %496, %504 : vector<8x32xf32>
    %513 = arith.addf %511, %512 : vector<8x32xf32>
    %514 = math.tanh %513 : vector<8x32xf32>
    %515 = arith.mulf %510, %514 : vector<8x32xf32>
    %516 = tpu.concatenate %434, %461, %488, %515 in 0 : vector<8x32xf32>, vector<8x32xf32>, vector<8x32xf32>, vector<8x32xf32> -> vector<32x32xf32>
    %c0_150 = arith.constant 0 : index
    %c0_151 = arith.constant 0 : index
    %517 = vector.load %arg28[%c0_150, %c0_151] : memref<32x5xf32, #tpu.memory_space<vmem>>, vector<32x5xf32>
    %cst_152 = arith.constant dense<0.000000e+00> : vector<32x5xf32>
    %518 = tpu.matmul %516, %517, %cst_152 {dimension_numbers = #tpu.dot_dimension_numbers<[1], [0], [0], [1], [0, 0, 1, 1], [], []>} : vector<32x32xf32>, vector<32x5xf32>, vector<32x5xf32> -> vector<32x5xf32>
    %c0_153 = arith.constant 0 : index
    %c0_154 = arith.constant 0 : index
    %519 = vector.load %arg29[%c0_153, %c0_154] : memref<1x5xf32, #tpu.memory_space<vmem>>, vector<1x5xf32>
    %520 = vector.broadcast %519 : vector<1x5xf32> to vector<32x5xf32>
    %521 = arith.addf %518, %520 : vector<32x5xf32>
    %522 = tpu.iota {dimensions = array<i32: 1>} : vector<32x5xi32>
    %c2_i32 = arith.constant 2 : i32
    %523 = vector.broadcast %c2_i32 : i32 to vector<32x5xi32>
    %524 = arith.cmpi slt, %522, %523 : vector<32x5xi32>
    %c4_i32 = arith.constant 4 : i32
    %525 = vector.broadcast %c4_i32 : i32 to vector<32x5xi32>
    %526 = arith.cmpi slt, %522, %525 : vector<32x5xi32>
    %527 = math.exp %521 : vector<32x5xf32>
    %528 = math.tanh %521 : vector<32x5xf32>
    %529 = arith.select %526, %527, %528 : vector<32x5xi1>, vector<32x5xf32>
    %530 = arith.select %524, %521, %529 : vector<32x5xi1>, vector<32x5xf32>
    %c0_155 = arith.constant 0 : index
    %c0_156 = arith.constant 0 : index
    %531 = vector.load %arg30[%c0_155, %c0_156] : memref<32x5xf32, #tpu.memory_space<vmem>>, vector<32x5xf32>
    tpu.vector_store %arg30[%c0_155, %c0_156], %530 {strides = array<i32>} : memref<32x5xf32, #tpu.memory_space<vmem>>, vector<32x5xf32>,
    return
  }
}

</mosaic_0001>

<llo_original>
// kernel: stgcn2d_forward.1
$region0: #{stgcn2d_forward.1}
  #allocation0 [shape = 'u32[]', space=smem, size = 0x4, offset = 0x4, fixed_abs, tag = 'smem constant byte address 0x4 - core index']
  #allocation1 [shape = 'u32[72,128]{1,0:T(1,128)}', space=vmem, size = 0x9000, scoped, tag = 'internal scratch']
  %s0 = inlined_call_operand.smem [shape: u32[31], index: -1, kind: input, shape index: {}]
  %s1 = sld [smem:[%s0]]
  %s2 = scalar_lea.smem %s0, 1
  %s3 = sld [smem:[%s2]]
  %s4 = scalar_lea.smem %s0, 2
  %s5 = sld [smem:[%s4]]
  %s6 = scalar_lea.smem %s0, 3
  %s7 = sld [smem:[%s6]]
  %s8 = scalar_lea.smem %s0, 4
  %s9 = sld [smem:[%s8]]
  %s10 = scalar_lea.smem %s0, 5
  %s11 = sld [smem:[%s10]]
  %s12 = scalar_lea.smem %s0, 6
  %s13 = sld [smem:[%s12]]
  %s14 = scalar_lea.smem %s0, 7
  %s15 = sld [smem:[%s14]]
  %s16 = scalar_lea.smem %s0, 8
  %s17 = sld [smem:[%s16]]
  %s18 = scalar_lea.smem %s0, 9
  %s19 = sld [smem:[%s18]]
  %s20 = scalar_lea.smem %s0, 10
  %s21 = sld [smem:[%s20]]
  %s22 = scalar_lea.smem %s0, 11
  %s23 = sld [smem:[%s22]]
  %s24 = scalar_lea.smem %s0, 12
  %s25 = sld [smem:[%s24]]
  %s26 = scalar_lea.smem %s0, 13
  %s27 = sld [smem:[%s26]]
  %s28 = scalar_lea.smem %s0, 14
  %s29 = sld [smem:[%s28]]
  %s30 = scalar_lea.smem %s0, 15
  %s31 = sld [smem:[%s30]]
  %s32 = scalar_lea.smem %s0, 16
  %s33 = sld [smem:[%s32]]
  %s34 = scalar_lea.smem %s0, 17
  %s35 = sld [smem:[%s34]]
  %s36 = scalar_lea.smem %s0, 18
  %s37 = sld [smem:[%s36]]
  %s38 = scalar_lea.smem %s0, 19
  %s39 = sld [smem:[%s38]]
  %s40 = scalar_lea.smem %s0, 20
  %s41 = sld [smem:[%s40]]
  %s42 = scalar_lea.smem %s0, 21
  %s43 = sld [smem:[%s42]]
  %s44 = scalar_lea.smem %s0, 22
  %s45 = sld [smem:[%s44]]
  %s46 = scalar_lea.smem %s0, 23
  %s47 = sld [smem:[%s46]]
  %s48 = scalar_lea.smem %s0, 24
  %s49 = sld [smem:[%s48]]
  %s50 = scalar_lea.smem %s0, 25
  %s51 = sld [smem:[%s50]]
  %s52 = scalar_lea.smem %s0, 26
  %s53 = sld [smem:[%s52]]
  %s54 = scalar_lea.smem %s0, 27
  %s55 = sld [smem:[%s54]]
  %s56 = scalar_lea.smem %s0, 28
  %s57 = sld [smem:[%s56]]
  %s58 = scalar_lea.smem %s0, 29
  %s59 = sld [smem:[%s58]]
  %s60 = scalar_lea.smem %s0, 30
  %s61 = sld [smem:[%s60]]
  %s62 = sld [smem:[#allocation0]]
  $region130: #{stgcn2d_forward.1} parent=0
    _
  %s64 = ssub.s32 1, %s62
  %s65 = scalar_select 0, %s64, %s62
  // Predicated region
  $region2: #{stgcn2d_forward.1} parent=0 // pred_check
    _
  $region3: #{stgcn2d_forward.1} parent=0 // pred_check_branch
    %67 = sbr.rel (0) target = $region5
  $region4: #{stgcn2d_forward.1} parent=0 // pred_region
    _
  $region5: #{stgcn2d_forward.1} parent=0 // pred_fallthru
    _
  // Predicated region
  $region6: #{stgcn2d_forward.1} parent=0 // pred_check
    _
  $region7: #{stgcn2d_forward.1} parent=0 // pred_check_branch
    %69 = sbr.rel (0) target = $region9
  $region8: #{stgcn2d_forward.1} parent=0 // pred_region
    _
  $region9: #{stgcn2d_forward.1} parent=0 // pred_fallthru
    _
  // Predicated region
  $region10: #{stgcn2d_forward.1} parent=0 // pred_check
    _
  $region11: #{stgcn2d_forward.1} parent=0 // pred_check_branch
    %71 = sbr.rel (0) target = $region13
  $region12: #{stgcn2d_forward.1} parent=0 // pred_region
    _
  $region13: #{stgcn2d_forward.1} parent=0 // pred_fallthru
    _
  // Predicated region
  $region14: #{stgcn2d_forward.1} parent=0 // pred_check
    _
  $region15: #{stgcn2d_forward.1} parent=0 // pred_check_branch
    %73 = sbr.rel (0) target = $region17
  $region16: #{stgcn2d_forward.1} parent=0 // pred_region
    _
  $region17: #{stgcn2d_forward.1} parent=0 // pred_fallthru
    _
  // Predicated region
  $region18: #{stgcn2d_forward.1} parent=0 // pred_check
    _
  $region19: #{stgcn2d_forward.1} parent=0 // pred_check_branch
    %75 = sbr.rel (0) target = $region21
  $region20: #{stgcn2d_forward.1} parent=0 // pred_region
    _
  $region21: #{stgcn2d_forward.1} parent=0 // pred_fallthru
    _
  // Predicated region
  $region22: #{stgcn2d_forward.1} parent=0 // pred_check
    _
  $region23: #{stgcn2d_forward.1} parent=0 // pred_check_branch
    %77 = sbr.rel (0) target = $region25
  $region24: #{stgcn2d_forward.1} parent=0 // pred_region
    _
  $region25: #{stgcn2d_forward.1} parent=0 // pred_fallthru
    _
  // Predicated region
  $region26: #{stgcn2d_forward.1} parent=0 // pred_check
    _
  $region27: #{stgcn2d_forward.1} parent=0 // pred_check_branch
    %79 = sbr.rel (0) target = $region29
  $region28: #{stgcn2d_forward.1} parent=0 // pred_region
    _
  $region29: #{stgcn2d_forward.1} parent=0 // pred_fallthru
    _
  // Predicated region
  $region30: #{stgcn2d_forward.1} parent=0 // pred_check
    _
  $region31: #{stgcn2d_forward.1} parent=0 // pred_check_branch
    %81 = sbr.rel (0) target = $region33
  $region32: #{stgcn2d_forward.1} parent=0 // pred_region
    _
  $region33: #{stgcn2d_forward.1} parent=0 // pred_fallthru
    _
  // Predicated region
  $region34: #{stgcn2d_forward.1} parent=0 // pred_check
    _
  $region35: #{stgcn2d_forward.1} parent=0 // pred_check_branch
    %83 = sbr.rel (0) target = $region37
  $region36: #{stgcn2d_forward.1} parent=0 // pred_region
    _
  $region37: #{stgcn2d_forward.1} parent=0 // pred_fallthru
    _
  // Predicated region
  $region38: #{stgcn2d_forward.1} parent=0 // pred_check
    _
  $region39: #{stgcn2d_forward.1} parent=0 // pred_check_branch
    %85 = sbr.rel (0) target = $region41
  $region40: #{stgcn2d_forward.1} parent=0 // pred_region
    _
  $region41: #{stgcn2d_forward.1} parent=0 // pred_fallthru
    _
  // Predicated region
  $region42: #{stgcn2d_forward.1} parent=0 // pred_check
    _
  $region43: #{stgcn2d_forward.1} parent=0 // pred_check_branch
    %87 = sbr.rel (0) target = $region45
  $region44: #{stgcn2d_forward.1} parent=0 // pred_region
    _
  $region45: #{stgcn2d_forward.1} parent=0 // pred_fallthru
    _
  // Predicated region
  $region46: #{stgcn2d_forward.1} parent=0 // pred_check
    _
  $region47: #{stgcn2d_forward.1} parent=0 // pred_check_branch
    %89 = sbr.rel (0) target = $region49
  $region48: #{stgcn2d_forward.1} parent=0 // pred_region
    _
  $region49: #{stgcn2d_forward.1} parent=0 // pred_fallthru
    _
  // Predicated region
  $region50: #{stgcn2d_forward.1} parent=0 // pred_check
    _
  $region51: #{stgcn2d_forward.1} parent=0 // pred_check_branch
    %91 = sbr.rel (0) target = $region53
  $region52: #{stgcn2d_forward.1} parent=0 // pred_region
    _
  $region53: #{stgcn2d_forward.1} parent=0 // pred_fallthru
    _
  // Predicated region
  $region54: #{stgcn2d_forward.1} parent=0 // pred_check
    _
  $region55: #{stgcn2d_forward.1} parent=0 // pred_check_branch
    %93 = sbr.rel (0) target = $region57
  $region56: #{stgcn2d_forward.1} parent=0 // pred_region
    _
  $region57: #{stgcn2d_forward.1} parent=0 // pred_fallthru
    _
  // Predicated region
  $region58: #{stgcn2d_forward.1} parent=0 // pred_check
    _
  $region59: #{stgcn2d_forward.1} parent=0 // pred_check_branch
    %95 = sbr.rel (0) target = $region61
  $region60: #{stgcn2d_forward.1} parent=0 // pred_region
    _
  $region61: #{stgcn2d_forward.1} parent=0 // pred_fallthru
    _
  // Predicated region
  $region62: #{stgcn2d_forward.1} parent=0 // pred_check
    _
  $region63: #{stgcn2d_forward.1} parent=0 // pred_check_branch
    %97 = sbr.rel (0) target = $region65
  $region64: #{stgcn2d_forward.1} parent=0 // pred_region
    _
  $region65: #{stgcn2d_forward.1} parent=0 // pred_fallthru
    _
  // Predicated region
  $region66: #{stgcn2d_forward.1} parent=0 // pred_check
    _
  $region67: #{stgcn2d_forward.1} parent=0 // pred_check_branch
    %99 = sbr.rel (0) target = $region69
  $region68: #{stgcn2d_forward.1} parent=0 // pred_region
    _
  $region69: #{stgcn2d_forward.1} parent=0 // pred_fallthru
    _
  // Predicated region
  $region70: #{stgcn2d_forward.1} parent=0 // pred_check
    _
  $region71: #{stgcn2d_forward.1} parent=0 // pred_check_branch
    %101 = sbr.rel (0) target = $region73
  $region72: #{stgcn2d_forward.1} parent=0 // pred_region
    _
  $region73: #{stgcn2d_forward.1} parent=0 // pred_fallthru
    _
  // Predicated region
  $region74: #{stgcn2d_forward.1} parent=0 // pred_check
    _
  $region75: #{stgcn2d_forward.1} parent=0 // pred_check_branch
    %103 = sbr.rel (0) target = $region77
  $region76: #{stgcn2d_forward.1} parent=0 // pred_region
    _
  $region77: #{stgcn2d_forward.1} parent=0 // pred_fallthru
    _
  // Predicated region
  $region78: #{stgcn2d_forward.1} parent=0 // pred_check
    _
  $region79: #{stgcn2d_forward.1} parent=0 // pred_check_branch
    %105 = sbr.rel (0) target = $region81
  $region80: #{stgcn2d_forward.1} parent=0 // pred_region
    _
  $region81: #{stgcn2d_forward.1} parent=0 // pred_fallthru
    _
  // Predicated region
  $region82: #{stgcn2d_forward.1} parent=0 // pred_check
    _
  $region83: #{stgcn2d_forward.1} parent=0 // pred_check_branch
    %107 = sbr.rel (0) target = $region85
  $region84: #{stgcn2d_forward.1} parent=0 // pred_region
    _
  $region85: #{stgcn2d_forward.1} parent=0 // pred_fallthru
    _
  // Predicated region
  $region86: #{stgcn2d_forward.1} parent=0 // pred_check
    _
  $region87: #{stgcn2d_forward.1} parent=0 // pred_check_branch
    %109 = sbr.rel (0) target = $region89
  $region88: #{stgcn2d_forward.1} parent=0 // pred_region
    _
  $region89: #{stgcn2d_forward.1} parent=0 // pred_fallthru
    _
  // Predicated region
  $region90: #{stgcn2d_forward.1} parent=0 // pred_check
    _
  $region91: #{stgcn2d_forward.1} parent=0 // pred_check_branch
    %111 = sbr.rel (0) target = $region93
  $region92: #{stgcn2d_forward.1} parent=0 // pred_region
    _
  $region93: #{stgcn2d_forward.1} parent=0 // pred_fallthru
    _
  // Predicated region
  $region94: #{stgcn2d_forward.1} parent=0 // pred_check
    _
  $region95: #{stgcn2d_forward.1} parent=0 // pred_check_branch
    %113 = sbr.rel (0) target = $region97
  $region96: #{stgcn2d_forward.1} parent=0 // pred_region
    _
  $region97: #{stgcn2d_forward.1} parent=0 // pred_fallthru
    _
  // Predicated region
  $region98: #{stgcn2d_forward.1} parent=0 // pred_check
    _
  $region99: #{stgcn2d_forward.1} parent=0 // pred_check_branch
    %115 = sbr.rel (0) target = $region101
  $region100: #{stgcn2d_forward.1} parent=0 // pred_region
    _
  $region101: #{stgcn2d_forward.1} parent=0 // pred_fallthru
    _
  // Predicated region
  $region102: #{stgcn2d_forward.1} parent=0 // pred_check
    _
  $region103: #{stgcn2d_forward.1} parent=0 // pred_check_branch
    %117 = sbr.rel (0) target = $region105
  $region104: #{stgcn2d_forward.1} parent=0 // pred_region
    _
  $region105: #{stgcn2d_forward.1} parent=0 // pred_fallthru
    _
  // Predicated region
  $region106: #{stgcn2d_forward.1} parent=0 // pred_check
    _
  $region107: #{stgcn2d_forward.1} parent=0 // pred_check_branch
    %119 = sbr.rel (0) target = $region109
  $region108: #{stgcn2d_forward.1} parent=0 // pred_region
    _
  $region109: #{stgcn2d_forward.1} parent=0 // pred_fallthru
    _
  // Predicated region
  $region110: #{stgcn2d_forward.1} parent=0 // pred_check
    _
  $region111: #{stgcn2d_forward.1} parent=0 // pred_check_branch
    %121 = sbr.rel (0) target = $region113
  $region112: #{stgcn2d_forward.1} parent=0 // pred_region
    _
  $region113: #{stgcn2d_forward.1} parent=0 // pred_fallthru
    _
  // Predicated region
  $region114: #{stgcn2d_forward.1} parent=0 // pred_check
    _
  $region115: #{stgcn2d_forward.1} parent=0 // pred_check_branch
    %123 = sbr.rel (0) target = $region117
  $region116: #{stgcn2d_forward.1} parent=0 // pred_region
    _
  $region117: #{stgcn2d_forward.1} parent=0 // pred_fallthru
    _
  // Predicated region
  $region118: #{stgcn2d_forward.1} parent=0 // pred_check
    _
  $region119: #{stgcn2d_forward.1} parent=0 // pred_check_branch
    %125 = sbr.rel (0) target = $region121
  $region120: #{stgcn2d_forward.1} parent=0 // pred_region
    _
  $region121: #{stgcn2d_forward.1} parent=0 // pred_fallthru
    _
  %v126 = vld [vmem:[%s1] sm:$0xff]
  %v127 = vld [vmem:[%s1 + $0x8] sm:$0xff]
  %v128 = vld [vmem:[%s1 + $0x10] sm:$0xff]
  %v129 = vld [vmem:[%s1 + $0x18] sm:$0xff]
  %v130 = vld [vmem:[%s1 + $0x20] sm:$0xff]
  %v131 = vld [vmem:[%s1 + $0x28] sm:$0xff]
  %v132 = vld [vmem:[%s1 + $0x30] sm:$0xff]
  %v133 = vld [vmem:[%s1 + $0x38] sm:$0xff]
  %v134 = vld [vmem:[%s5] sm:$0x3]
  %v135 = vld [vmem:[%s7] sm:$0x1]
  %v137 = vperm.slane %v135, 0
  %vm139 = vcmask 15360
  %v141 = vsel %vm139, %v126, 0
  %v144 = vsel %vm139, %v127, 0
  %v147 = vsel %vm139, %v128, 0
  %v150 = vsel %vm139, %v129, 0
  %v153 = vsel %vm139, %v130, 0
  %v156 = vsel %vm139, %v131, 0
  %v159 = vsel %vm139, %v132, 0
  %v162 = vsel %vm139, %v133, 0
  %vm164 = vcmask 1041408
  %v166 = vsel %vm164, %v134, 0
  %168 = vmatpush.msra.mxu0 0.0
  %169 = vmatpush.msra.mxu0 0.0
  %170 = vmatpush.msra.mxu0 0.0
  %171 = vmatpush.msra.mxu0 0.0
  %172 = vmatpush.msra.mxu0 0.0
  %173 = vmatpush.msra.mxu0 0.0
  %174 = vmatpush.msra.mxu0 0.0
  %175 = vmatpush.msra.mxu0 0.0
  %176 = vmatpush.msra.mxu0 0.0
  %177 = vmatpush.msra.mxu0 0.0
  %178 = vmatpush.msra.mxu0 0.0
  %179 = vmatpush.msra.mxu0 0.0
  %180 = vmatpush.msra.mxu0 0.0
  %181 = vmatpush.msra.mxu0 0.0
  %182 = vmatpush.msra.mxu0 0.0
  %183 = vmatpush.msra.mxu0 %v166
  %184 = vmatmul.f32.gmra.mxu0 %v141
  %v185 = vpop.f32.mrf.mxu0
  %v186 = vadd.f32 %v137, %v185
  %187 = vmatmul.f32.gmra.mxu0 %v144
  %v188 = vpop.f32.mrf.mxu0
  %v189 = vadd.f32 %v137, %v188
  %190 = vmatmul.f32.gmra.mxu0 %v147
  %v191 = vpop.f32.mrf.mxu0
  %v192 = vadd.f32 %v137, %v191
  %193 = vmatmul.f32.gmra.mxu0 %v150
  %v194 = vpop.f32.mrf.mxu0
  %v195 = vadd.f32 %v137, %v194
  %196 = vmatmul.f32.gmra.mxu0 %v153
  %v197 = vpop.f32.mrf.mxu0
  %v198 = vadd.f32 %v137, %v197
  %199 = vmatmul.f32.gmra.mxu0 %v156
  %v200 = vpop.f32.mrf.mxu0
  %v201 = vadd.f32 %v137, %v200
  %202 = vmatmul.f32.gmra.mxu0 %v159
  %v203 = vpop.f32.mrf.mxu0
  %v204 = vadd.f32 %v137, %v203
  %205 = vmatmul.f32.gmra.mxu0 %v162
  %v206 = vpop.f32.mrf.mxu0
  %v207 = vadd.f32 %v137, %v206
  %208 = vdwg.mxu0
  %vm209 = vcmp.gt.f32.partialorder %v186, 0.0
  %vm210 = vcmp.gt.f32.partialorder %v189, 0.0
  %vm211 = vcmp.gt.f32.partialorder %v192, 0.0
  %vm212 = vcmp.gt.f32.partialorder %v195, 0.0
  %vm213 = vcmp.gt.f32.partialorder %v198, 0.0
  %vm214 = vcmp.gt.f32.partialorder %v201, 0.0
  %vm215 = vcmp.gt.f32.partialorder %v204, 0.0
  %vm216 = vcmp.gt.f32.partialorder %v207, 0.0
  %v217 = vmul.f32 %v186, 0.1
  %v218 = vmul.f32 %v189, 0.1
  %v219 = vmul.f32 %v192, 0.1
  %v220 = vmul.f32 %v195, 0.1
  %v221 = vmul.f32 %v198, 0.1
  %v222 = vmul.f32 %v201, 0.1
  %v223 = vmul.f32 %v204, 0.1
  %v224 = vmul.f32 %v207, 0.1
  %v225 = vsel %vm209, %v186, %v217
  %v226 = vsel %vm210, %v189, %v218
  %v227 = vsel %vm211, %v192, %v219
  %v228 = vsel %vm212, %v195, %v220
  %v229 = vsel %vm213, %v198, %v221
  %v230 = vsel %vm214, %v201, %v222
  %v231 = vsel %vm215, %v204, %v223
  %v232 = vsel %vm216, %v207, %v224
  %v233 = vld [vmem:[%s9] sm:$0xff]
  %v234 = vld [vmem:[%s9 + $0x8] sm:$0xff]
  %v235 = vld [vmem:[%s11] sm:$0xff]
  %v236 = vld [vmem:[%s11 + $0x8] sm:$0xff]
  %v237 = vld [vmem:[%s11 + $0x10] sm:$0xff]
  %v238 = vld [vmem:[%s11 + $0x18] sm:$0xff]
  %v239 = vld [vmem:[%s13] sm:$0x1]
  %v241 = vperm.slane %v239, 0
  %vm243 = vcmask 130048
  %v245 = vsel %vm243, %v225, 0
  %247 = vmatpush.msra.mxu0 0.0
  %248 = vmatpush.msra.mxu0 0.0
  %249 = vmatpush.msra.mxu0 0.0
  %250 = vmatpush.msra.mxu0 0.0
  %251 = vmatpush.msra.mxu0 0.0
  %252 = vmatpush.msra.mxu0 0.0
  %253 = vmatpush.msra.mxu0 0.0
  %254 = vmatpush.msra.mxu0 0.0
  %255 = vmatpush.msra.mxu0 0.0
  %256 = vmatpush.msra.mxu0 0.0
  %257 = vmatpush.msra.mxu0 0.0
  %258 = vmatpush.msra.mxu0 0.0
  %259 = vmatpush.msra.mxu0 0.0
  %260 = vmatpush.msra.mxu0 0.0
  %261 = vmatpush.msra.mxu0 %v234
  %262 = vmatpush.msra.mxu0 %v233
  %263 = vmatmul.f32.gmra.mxu0 %v245
  %v264 = vpop.f32.mrf.mxu0
  %v265 = vadd.f32 %v241, %v264
  %266 = vdwg.mxu0
  %vm267 = vcmask 261120
  %v269 = vsel %vm267, 0.0, 0
  %271 = vmatpush.msra.mxu0 0.0
  %272 = vmatpush.msra.mxu0 0.0
  %273 = vmatpush.msra.mxu0 0.0
  %274 = vmatpush.msra.mxu0 0.0
  %275 = vmatpush.msra.mxu0 0.0
  %276 = vmatpush.msra.mxu0 0.0
  %277 = vmatpush.msra.mxu0 0.0
  %278 = vmatpush.msra.mxu0 0.0
  %279 = vmatpush.msra.mxu0 0.0
  %280 = vmatpush.msra.mxu0 0.0
  %281 = vmatpush.msra.mxu0 0.0
  %282 = vmatpush.msra.mxu0 0.0
  %283 = vmatpush.msra.mxu0 %v238
  %284 = vmatpush.msra.mxu0 %v237
  %285 = vmatpush.msra.mxu0 %v236
  %286 = vmatpush.msra.mxu0 %v235
  %287 = vmatmul.f32.gmra.mxu0 %v269
  %v288 = vpop.f32.mrf.mxu0
  %v289 = vadd.f32 0.0, %v288
  %290 = vdwg.mxu0
  %v291 = vadd.f32 %v265, %v289
  %v292 = vxor.u32 %v291, 2147483648
  %v293 = vmul.f32 %v292, 1.442695
  %v294 = vpow.pop %v293
  %v295 = vadd.f32 %v294, 1.0
  %v296 = vrcp.pop %v295
  %v297 = vmul.f32 %v295, %v296
  %v298 = vsub.f32 1.0, %v297
  %v299 = vmul.f32 %v296, %v298
  %v300 = vadd.f32 %v296, %v299
  %vm301 = vweird.f32 %v295
  %vm302 = vweird.f32 %v296
  %vm303 = vmor %vm301, %vm302
  %v304 = vsel %vm303, %v296, %v300
  %v305 = vand.u32 2147483647, %v295
  %vm306 = vcmp.eq.f32.partialorder %v305, 8.507059e+37
  %v307 = vand.u32 %v295, 2147483648
  %v308 = vor.u32 1.1754944e-38, %v307
  %v309 = vsel %vm306, %v308, %v304
  %v310 = vmul.f32 1.0, %v309
  %v311 = vtanh.pop %v291
  %v312 = vmul.f32 %v310, 0.0
  %314 = vrot.lane.b32.xlu0 %v311, 64
  %v315 = vpop.permute.xlu0 %314
  %v317 = vmul.f32 %v310, %v315
  %319 = vrot.lane.b32.xlu0 %v317, 32
  %v320 = vpop.permute.xlu0 %319
  %v322 = vadd.f32 %v312, %v320
  %v323 = vtanh.pop %v322
  %325 = vrot.lane.b32.xlu0 %v323, 64
  %v326 = vpop.permute.xlu0 %325
  %v328 = vmul.f32 %v310, %v326
  %v330 = vsel %vm243, %v226, 0
  %332 = vmatpush.msra.mxu0 0.0
  %333 = vmatpush.msra.mxu0 0.0
  %334 = vmatpush.msra.mxu0 0.0
  %335 = vmatpush.msra.mxu0 0.0
  %336 = vmatpush.msra.mxu0 0.0
  %337 = vmatpush.msra.mxu0 0.0
  %338 = vmatpush.msra.mxu0 0.0
  %339 = vmatpush.msra.mxu0 0.0
  %340 = vmatpush.msra.mxu0 0.0
  %341 = vmatpush.msra.mxu0 0.0
  %342 = vmatpush.msra.mxu0 0.0
  %343 = vmatpush.msra.mxu0 0.0
  %344 = vmatpush.msra.mxu0 0.0
  %345 = vmatpush.msra.mxu0 0.0
  %346 = vmatpush.msra.mxu0 %v234
  %347 = vmatpush.msra.mxu0 %v233
  %348 = vmatmul.f32.gmra.mxu0 %v330
  %v349 = vpop.f32.mrf.mxu0
  %v350 = vadd.f32 %v241, %v349
  %351 = vdwg.mxu0
  %353 = vrot.lane.b32.xlu0 %v328, 32
  %v354 = vpop.permute.xlu0 %353
  %v355 = vsel %vm267, %v354, 0
  %357 = vmatpush.msra.mxu0 0.0
  %358 = vmatpush.msra.mxu0 0.0
  %359 = vmatpush.msra.mxu0 0.0
  %360 = vmatpush.msra.mxu0 0.0
  %361 = vmatpush.msra.mxu0 0.0
  %362 = vmatpush.msra.mxu0 0.0
  %363 = vmatpush.msra.mxu0 0.0
  %364 = vmatpush.msra.mxu0 0.0
  %365 = vmatpush.msra.mxu0 0.0
  %366 = vmatpush.msra.mxu0 0.0
  %367 = vmatpush.msra.mxu0 0.0
  %368 = vmatpush.msra.mxu0 0.0
  %369 = vmatpush.msra.mxu0 %v238
  %370 = vmatpush.msra.mxu0 %v237
  %371 = vmatpush.msra.mxu0 %v236
  %372 = vmatpush.msra.mxu0 %v235
  %373 = vmatmul.f32.gmra.mxu0 %v355
  %v374 = vpop.f32.mrf.mxu0
  %v375 = vadd.f32 0.0, %v374
  %376 = vdwg.mxu0
  %v377 = vadd.f32 %v350, %v375
  %v378 = vxor.u32 %v377, 2147483648
  %v379 = vmul.f32 %v378, 1.442695
  %v380 = vpow.pop %v379
  %v381 = vadd.f32 %v380, 1.0
  %v382 = vrcp.pop %v381
  %v383 = vmul.f32 %v381, %v382
  %v384 = vsub.f32 1.0, %v383
  %v385 = vmul.f32 %v382, %v384
  %v386 = vadd.f32 %v382, %v385
  %vm387 = vweird.f32 %v381
  %vm388 = vweird.f32 %v382
  %vm389 = vmor %vm387, %vm388
  %v390 = vsel %vm389, %v382, %v386
  %v391 = vand.u32 2147483647, %v381
  %vm392 = vcmp.eq.f32.partialorder %v391, 8.507059e+37
  %v393 = vand.u32 %v381, 2147483648
  %v394 = vor.u32 1.1754944e-38, %v393
  %v395 = vsel %vm392, %v394, %v390
  %v396 = vmul.f32 1.0, %v395
  %v397 = vtanh.pop %v377
  %v398 = vmul.f32 %v396, %v322
  %400 = vrot.lane.b32.xlu0 %v397, 64
  %v401 = vpop.permute.xlu0 %400
  %v403 = vmul.f32 %v396, %v401
  %405 = vrot.lane.b32.xlu0 %v403, 32
  %v406 = vpop.permute.xlu0 %405
  %v408 = vadd.f32 %v398, %v406
  %v409 = vtanh.pop %v408
  %411 = vrot.lane.b32.xlu0 %v409, 64
  %v412 = vpop.permute.xlu0 %411
  %v414 = vmul.f32 %v396, %v412
  %v416 = vsel %vm243, %v227, 0
  %418 = vmatpush.msra.mxu0 0.0
  %419 = vmatpush.msra.mxu0 0.0
  %420 = vmatpush.msra.mxu0 0.0
  %421 = vmatpush.msra.mxu0 0.0
  %422 = vmatpush.msra.mxu0 0.0
  %423 = vmatpush.msra.mxu0 0.0
  %424 = vmatpush.msra.mxu0 0.0
  %425 = vmatpush.msra.mxu0 0.0
  %426 = vmatpush.msra.mxu0 0.0
  %427 = vmatpush.msra.mxu0 0.0
  %428 = vmatpush.msra.mxu0 0.0
  %429 = vmatpush.msra.mxu0 0.0
  %430 = vmatpush.msra.mxu0 0.0
  %431 = vmatpush.msra.mxu0 0.0
  %432 = vmatpush.msra.mxu0 %v234
  %433 = vmatpush.msra.mxu0 %v233
  %434 = vmatmul.f32.gmra.mxu0 %v416
  %v435 = vpop.f32.mrf.mxu0
  %v436 = vadd.f32 %v241, %v435
  %437 = vdwg.mxu0
  %439 = vrot.lane.b32.xlu0 %v414, 32
  %v440 = vpop.permute.xlu0 %439
  %v441 = vsel %vm267, %v440, 0
  %443 = vmatpush.msra.mxu0 0.0
  %444 = vmatpush.msra.mxu0 0.0
  %445 = vmatpush.msra.mxu0 0.0
  %446 = vmatpush.msra.mxu0 0.0
  %447 = vmatpush.msra.mxu0 0.0
  %448 = vmatpush.msra.mxu0 0.0
  %449 = vmatpush.msra.mxu0 0.0
  %450 = vmatpush.msra.mxu0 0.0
  %451 = vmatpush.msra.mxu0 0.0
  %452 = vmatpush.msra.mxu0 0.0
  %453 = vmatpush.msra.mxu0 0.0
  %454 = vmatpush.msra.mxu0 0.0
  %455 = vmatpush.msra.mxu0 %v238
  %456 = vmatpush.msra.mxu0 %v237
  %457 = vmatpush.msra.mxu0 %v236
  %458 = vmatpush.msra.mxu0 %v235
  %459 = vmatmul.f32.gmra.mxu0 %v441
  %v460 = vpop.f32.mrf.mxu0
  %v461 = vadd.f32 0.0, %v460
  %462 = vdwg.mxu0
  %v463 = vadd.f32 %v436, %v461
  %v464 = vxor.u32 %v463, 2147483648
  %v465 = vmul.f32 %v464, 1.442695
  %v466 = vpow.pop %v465
  %v467 = vadd.f32 %v466, 1.0
  %v468 = vrcp.pop %v467
  %v469 = vmul.f32 %v467, %v468
  %v470 = vsub.f32 1.0, %v469
  %v471 = vmul.f32 %v468, %v470
  %v472 = vadd.f32 %v468, %v471
  %vm473 = vweird.f32 %v467
  %vm474 = vweird.f32 %v468
  %vm475 = vmor %vm473, %vm474
  %v476 = vsel %vm475, %v468, %v472
  %v477 = vand.u32 2147483647, %v467
  %vm478 = vcmp.eq.f32.partialorder %v477, 8.507059e+37
  %v479 = vand.u32 %v467, 2147483648
  %v480 = vor.u32 1.1754944e-38, %v479
  %v481 = vsel %vm478, %v480, %v476
  %v482 = vmul.f32 1.0, %v481
  %v483 = vtanh.pop %v463
  %v484 = vmul.f32 %v482, %v408
  %486 = vrot.lane.b32.xlu0 %v483, 64
  %v487 = vpop.permute.xlu0 %486
  %v489 = vmul.f32 %v482, %v487
  %491 = vrot.lane.b32.xlu0 %v489, 32
  %v492 = vpop.permute.xlu0 %491
  %v494 = vadd.f32 %v484, %v492
  %v495 = vtanh.pop %v494
  %497 = vrot.lane.b32.xlu0 %v495, 64
  %v498 = vpop.permute.xlu0 %497
  %v500 = vmul.f32 %v482, %v498
  %v502 = vsel %vm243, %v228, 0
  %504 = vmatpush.msra.mxu0 0.0
  %505 = vmatpush.msra.mxu0 0.0
  %506 = vmatpush.msra.mxu0 0.0
  %507 = vmatpush.msra.mxu0 0.0
  %508 = vmatpush.msra.mxu0 0.0
  %509 = vmatpush.msra.mxu0 0.0
  %510 = vmatpush.msra.mxu0 0.0
  %511 = vmatpush.msra.mxu0 0.0
  %512 = vmatpush.msra.mxu0 0.0
  %513 = vmatpush.msra.mxu0 0.0
  %514 = vmatpush.msra.mxu0 0.0
  %515 = vmatpush.msra.mxu0 0.0
  %516 = vmatpush.msra.mxu0 0.0
  %517 = vmatpush.msra.mxu0 0.0
  %518 = vmatpush.msra.mxu0 %v234
  %519 = vmatpush.msra.mxu0 %v233
  %520 = vmatmul.f32.gmra.mxu0 %v502
  %v521 = vpop.f32.mrf.mxu0
  %v522 = vadd.f32 %v241, %v521
  %523 = vdwg.mxu0
  %525 = vrot.lane.b32.xlu0 %v500, 32
  %v526 = vpop.permute.xlu0 %525
  %v527 = vsel %vm267, %v526, 0
  %529 = vmatpush.msra.mxu0 0.0
  %530 = vmatpush.msra.mxu0 0.0
  %531 = vmatpush.msra.mxu0 0.0
  %532 = vmatpush.msra.mxu0 0.0
  %533 = vmatpush.msra.mxu0 0.0
  %534 = vmatpush.msra.mxu0 0.0
  %535 = vmatpush.msra.mxu0 0.0
  %536 = vmatpush.msra.mxu0 0.0
  %537 = vmatpush.msra.mxu0 0.0
  %538 = vmatpush.msra.mxu0 0.0
  %539 = vmatpush.msra.mxu0 0.0
  %540 = vmatpush.msra.mxu0 0.0
  %541 = vmatpush.msra.mxu0 %v238
  %542 = vmatpush.msra.mxu0 %v237
  %543 = vmatpush.msra.mxu0 %v236
  %544 = vmatpush.msra.mxu0 %v235
  %545 = vmatmul.f32.gmra.mxu0 %v527
  %v546 = vpop.f32.mrf.mxu0
  %v547 = vadd.f32 0.0, %v546
  %548 = vdwg.mxu0
  %v549 = vadd.f32 %v522, %v547
  %v550 = vxor.u32 %v549, 2147483648
  %v551 = vmul.f32 %v550, 1.442695
  %v552 = vpow.pop %v551
  %v553 = vadd.f32 %v552, 1.0
  %v554 = vrcp.pop %v553
  %v555 = vmul.f32 %v553, %v554
  %v556 = vsub.f32 1.0, %v555
  %v557 = vmul.f32 %v554, %v556
  %v558 = vadd.f32 %v554, %v557
  %vm559 = vweird.f32 %v553
  %vm560 = vweird.f32 %v554
  %vm561 = vmor %vm559, %vm560
  %v562 = vsel %vm561, %v554, %v558
  %v563 = vand.u32 2147483647, %v553
  %vm564 = vcmp.eq.f32.partialorder %v563, 8.507059e+37
  %v565 = vand.u32 %v553, 2147483648
  %v566 = vor.u32 1.1754944e-38, %v565
  %v567 = vsel %vm564, %v566, %v562
  %v568 = vmul.f32 1.0, %v567
  %v569 = vtanh.pop %v549
  %v570 = vmul.f32 %v568, %v494
  %572 = vrot.lane.b32.xlu0 %v569, 64
  %v573 = vpop.permute.xlu0 %572
  %v575 = vmul.f32 %v568, %v573
  %577 = vrot.lane.b32.xlu0 %v575, 32
  %v578 = vpop.permute.xlu0 %577
  %v580 = vadd.f32 %v570, %v578
  %v581 = vtanh.pop %v580
  %583 = vrot.lane.b32.xlu0 %v581, 64
  %v584 = vpop.permute.xlu0 %583
  %v586 = vmul.f32 %v568, %v584
  %v588 = vsel %vm243, %v229, 0
  %590 = vmatpush.msra.mxu0 0.0
  %591 = vmatpush.msra.mxu0 0.0
  %592 = vmatpush.msra.mxu0 0.0
  %593 = vmatpush.msra.mxu0 0.0
  %594 = vmatpush.msra.mxu0 0.0
  %595 = vmatpush.msra.mxu0 0.0
  %596 = vmatpush.msra.mxu0 0.0
  %597 = vmatpush.msra.mxu0 0.0
  %598 = vmatpush.msra.mxu0 0.0
  %599 = vmatpush.msra.mxu0 0.0
  %600 = vmatpush.msra.mxu0 0.0
  %601 = vmatpush.msra.mxu0 0.0
  %602 = vmatpush.msra.mxu0 0.0
  %603 = vmatpush.msra.mxu0 0.0
  %604 = vmatpush.msra.mxu0 %v234
  %605 = vmatpush.msra.mxu0 %v233
  %606 = vmatmul.f32.gmra.mxu0 %v588
  %v607 = vpop.f32.mrf.mxu0
  %v608 = vadd.f32 %v241, %v607
  %609 = vdwg.mxu0
  %611 = vrot.lane.b32.xlu0 %v586, 32
  %v612 = vpop.permute.xlu0 %611
  %v613 = vsel %vm267, %v612, 0
  %615 = vmatpush.msra.mxu0 0.0
  %616 = vmatpush.msra.mxu0 0.0
  %617 = vmatpush.msra.mxu0 0.0
  %618 = vmatpush.msra.mxu0 0.0
  %619 = vmatpush.msra.mxu0 0.0
  %620 = vmatpush.msra.mxu0 0.0
  %621 = vmatpush.msra.mxu0 0.0
  %622 = vmatpush.msra.mxu0 0.0
  %623 = vmatpush.msra.mxu0 0.0
  %624 = vmatpush.msra.mxu0 0.0
  %625 = vmatpush.msra.mxu0 0.0
  %626 = vmatpush.msra.mxu0 0.0
  %627 = vmatpush.msra.mxu0 %v238
  %628 = vmatpush.msra.mxu0 %v237
  %629 = vmatpush.msra.mxu0 %v236
  %630 = vmatpush.msra.mxu0 %v235
  %631 = vmatmul.f32.gmra.mxu0 %v613
  %v632 = vpop.f32.mrf.mxu0
  %v633 = vadd.f32 0.0, %v632
  %634 = vdwg.mxu0
  %v635 = vadd.f32 %v608, %v633
  %v636 = vxor.u32 %v635, 2147483648
  %v637 = vmul.f32 %v636, 1.442695
  %v638 = vpow.pop %v637
  %v639 = vadd.f32 %v638, 1.0
  %v640 = vrcp.pop %v639
  %v641 = vmul.f32 %v639, %v640
  %v642 = vsub.f32 1.0, %v641
  %v643 = vmul.f32 %v640, %v642
  %v644 = vadd.f32 %v640, %v643
  %vm645 = vweird.f32 %v639
  %vm646 = vweird.f32 %v640
  %vm647 = vmor %vm645, %vm646
  %v648 = vsel %vm647, %v640, %v644
  %v649 = vand.u32 2147483647, %v639
  %vm650 = vcmp.eq.f32.partialorder %v649, 8.507059e+37
  %v651 = vand.u32 %v639, 2147483648
  %v652 = vor.u32 1.1754944e-38, %v651
  %v653 = vsel %vm650, %v652, %v648
  %v654 = vmul.f32 1.0, %v653
  %v655 = vtanh.pop %v635
  %v656 = vmul.f32 %v654, %v580
  %658 = vrot.lane.b32.xlu0 %v655, 64
  %v659 = vpop.permute.xlu0 %658
  %v661 = vmul.f32 %v654, %v659
  %663 = vrot.lane.b32.xlu0 %v661, 32
  %v664 = vpop.permute.xlu0 %663
  %v666 = vadd.f32 %v656, %v664
  %v667 = vtanh.pop %v666
  %669 = vrot.lane.b32.xlu0 %v667, 64
  %v670 = vpop.permute.xlu0 %669
  %v672 = vmul.f32 %v654, %v670
  %v674 = vsel %vm243, %v230, 0
  %676 = vmatpush.msra.mxu0 0.0
  %677 = vmatpush.msra.mxu0 0.0
  %678 = vmatpush.msra.mxu0 0.0
  %679 = vmatpush.msra.mxu0 0.0
  %680 = vmatpush.msra.mxu0 0.0
  %681 = vmatpush.msra.mxu0 0.0
  %682 = vmatpush.msra.mxu0 0.0
  %683 = vmatpush.msra.mxu0 0.0
  %684 = vmatpush.msra.mxu0 0.0
  %685 = vmatpush.msra.mxu0 0.0
  %686 = vmatpush.msra.mxu0 0.0
  %687 = vmatpush.msra.mxu0 0.0
  %688 = vmatpush.msra.mxu0 0.0
  %689 = vmatpush.msra.mxu0 0.0
  %690 = vmatpush.msra.mxu0 %v234
  %691 = vmatpush.msra.mxu0 %v233
  %692 = vmatmul.f32.gmra.mxu0 %v674
  %v693 = vpop.f32.mrf.mxu0
  %v694 = vadd.f32 %v241, %v693
  %695 = vdwg.mxu0
  %697 = vrot.lane.b32.xlu0 %v672, 32
  %v698 = vpop.permute.xlu0 %697
  %v699 = vsel %vm267, %v698, 0
  %701 = vmatpush.msra.mxu0 0.0
  %702 = vmatpush.msra.mxu0 0.0
  %703 = vmatpush.msra.mxu0 0.0
  %704 = vmatpush.msra.mxu0 0.0
  %705 = vmatpush.msra.mxu0 0.0
  %706 = vmatpush.msra.mxu0 0.0
  %707 = vmatpush.msra.mxu0 0.0
  %708 = vmatpush.msra.mxu0 0.0
  %709 = vmatpush.msra.mxu0 0.0
  %710 = vmatpush.msra.mxu0 0.0
  %711 = vmatpush.msra.mxu0 0.0
  %712 = vmatpush.msra.mxu0 0.0
  %713 = vmatpush.msra.mxu0 %v238
  %714 = vmatpush.msra.mxu0 %v237
  %715 = vmatpush.msra.mxu0 %v236
  %716 = vmatpush.msra.mxu0 %v235
  %717 = vmatmul.f32.gmra.mxu0 %v699
  %v718 = vpop.f32.mrf.mxu0
  %v719 = vadd.f32 0.0, %v718
  %720 = vdwg.mxu0
  %v721 = vadd.f32 %v694, %v719
  %v722 = vxor.u32 %v721, 2147483648
  %v723 = vmul.f32 %v722, 1.442695
  %v724 = vpow.pop %v723
  %v725 = vadd.f32 %v724, 1.0
  %v726 = vrcp.pop %v725
  %v727 = vmul.f32 %v725, %v726
  %v728 = vsub.f32 1.0, %v727
  %v729 = vmul.f32 %v726, %v728
  %v730 = vadd.f32 %v726, %v729
  %vm731 = vweird.f32 %v725
  %vm732 = vweird.f32 %v726
  %vm733 = vmor %vm731, %vm732
  %v734 = vsel %vm733, %v726, %v730
  %v735 = vand.u32 2147483647, %v725
  %vm736 = vcmp.eq.f32.partialorder %v735, 8.507059e+37
  %v737 = vand.u32 %v725, 2147483648
  %v738 = vor.u32 1.1754944e-38, %v737
  %v739 = vsel %vm736, %v738, %v734
  %v740 = vmul.f32 1.0, %v739
  %v741 = vtanh.pop %v721
  %v742 = vmul.f32 %v740, %v666
  %744 = vrot.lane.b32.xlu0 %v741, 64
  %v745 = vpop.permute.xlu0 %744
  %v747 = vmul.f32 %v740, %v745
  %749 = vrot.lane.b32.xlu0 %v747, 32
  %v750 = vpop.permute.xlu0 %749
  %v752 = vadd.f32 %v742, %v750
  %v753 = vtanh.pop %v752
  %755 = vrot.lane.b32.xlu0 %v753, 64
  %v756 = vpop.permute.xlu0 %755
  %v758 = vmul.f32 %v740, %v756
  %v760 = vsel %vm243, %v231, 0
  %762 = vmatpush.msra.mxu0 0.0
  %763 = vmatpush.msra.mxu0 0.0
  %764 = vmatpush.msra.mxu0 0.0
  %765 = vmatpush.msra.mxu0 0.0
  %766 = vmatpush.msra.mxu0 0.0
  %767 = vmatpush.msra.mxu0 0.0
  %768 = vmatpush.msra.mxu0 0.0
  %769 = vmatpush.msra.mxu0 0.0
  %770 = vmatpush.msra.mxu0 0.0
  %771 = vmatpush.msra.mxu0 0.0
  %772 = vmatpush.msra.mxu0 0.0
  %773 = vmatpush.msra.mxu0 0.0
  %774 = vmatpush.msra.mxu0 0.0
  %775 = vmatpush.msra.mxu0 0.0
  %776 = vmatpush.msra.mxu0 %v234
  %777 = vmatpush.msra.mxu0 %v233
  %778 = vmatmul.f32.gmra.mxu0 %v760
  %v779 = vpop.f32.mrf.mxu0
  %v780 = vadd.f32 %v241, %v779
  %781 = vdwg.mxu0
  %783 = vrot.lane.b32.xlu0 %v758, 32
  %v784 = vpop.permute.xlu0 %783
  %v785 = vsel %vm267, %v784, 0
  %787 = vmatpush.msra.mxu0 0.0
  %788 = vmatpush.msra.mxu0 0.0
  %789 = vmatpush.msra.mxu0 0.0
  %790 = vmatpush.msra.mxu0 0.0
  %791 = vmatpush.msra.mxu0 0.0
  %792 = vmatpush.msra.mxu0 0.0
  %793 = vmatpush.msra.mxu0 0.0
  %794 = vmatpush.msra.mxu0 0.0
  %795 = vmatpush.msra.mxu0 0.0
  %796 = vmatpush.msra.mxu0 0.0
  %797 = vmatpush.msra.mxu0 0.0
  %798 = vmatpush.msra.mxu0 0.0
  %799 = vmatpush.msra.mxu0 %v238
  %800 = vmatpush.msra.mxu0 %v237
  %801 = vmatpush.msra.mxu0 %v236
  %802 = vmatpush.msra.mxu0 %v235
  %803 = vmatmul.f32.gmra.mxu0 %v785
  %v804 = vpop.f32.mrf.mxu0
  %v805 = vadd.f32 0.0, %v804
  %806 = vdwg.mxu0
  %v807 = vadd.f32 %v780, %v805
  %v808 = vxor.u32 %v807, 2147483648
  %v809 = vmul.f32 %v808, 1.442695
  %v810 = vpow.pop %v809
  %v811 = vadd.f32 %v810, 1.0
  %v812 = vrcp.pop %v811
  %v813 = vmul.f32 %v811, %v812
  %v814 = vsub.f32 1.0, %v813
  %v815 = vmul.f32 %v812, %v814
  %v816 = vadd.f32 %v812, %v815
  %vm817 = vweird.f32 %v811
  %vm818 = vweird.f32 %v812
  %vm819 = vmor %vm817, %vm818
  %v820 = vsel %vm819, %v812, %v816
  %v821 = vand.u32 2147483647, %v811
  %vm822 = vcmp.eq.f32.partialorder %v821, 8.507059e+37
  %v823 = vand.u32 %v811, 2147483648
  %v824 = vor.u32 1.1754944e-38, %v823
  %v825 = vsel %vm822, %v824, %v820
  %v826 = vmul.f32 1.0, %v825
  %v827 = vtanh.pop %v807
  %v828 = vmul.f32 %v826, %v752
  %830 = vrot.lane.b32.xlu0 %v827, 64
  %v831 = vpop.permute.xlu0 %830
  %v833 = vmul.f32 %v826, %v831
  %835 = vrot.lane.b32.xlu0 %v833, 32
  %v836 = vpop.permute.xlu0 %835
  %v838 = vadd.f32 %v828, %v836
  %v839 = vtanh.pop %v838
  %841 = vrot.lane.b32.xlu0 %v839, 64
  %v842 = vpop.permute.xlu0 %841
  %v844 = vmul.f32 %v826, %v842
  %v846 = vsel %vm243, %v232, 0
  %848 = vmatpush.msra.mxu0 0.0
  %849 = vmatpush.msra.mxu0 0.0
  %850 = vmatpush.msra.mxu0 0.0
  %851 = vmatpush.msra.mxu0 0.0
  %852 = vmatpush.msra.mxu0 0.0
  %853 = vmatpush.msra.mxu0 0.0
  %854 = vmatpush.msra.mxu0 0.0
  %855 = vmatpush.msra.mxu0 0.0
  %856 = vmatpush.msra.mxu0 0.0
  %857 = vmatpush.msra.mxu0 0.0
  %858 = vmatpush.msra.mxu0 0.0
  %859 = vmatpush.msra.mxu0 0.0
  %860 = vmatpush.msra.mxu0 0.0
  %861 = vmatpush.msra.mxu0 0.0
  %862 = vmatpush.msra.mxu0 %v234
  %863 = vmatpush.msra.mxu0 %v233
  %864 = vmatmul.f32.gmra.mxu0 %v846
  %v865 = vpop.f32.mrf.mxu0
  %v866 = vadd.f32 %v241, %v865
  %867 = vdwg.mxu0
  %869 = vrot.lane.b32.xlu0 %v844, 32
  %v870 = vpop.permute.xlu0 %869
  %v871 = vsel %vm267, %v870, 0
  %873 = vmatpush.msra.mxu0 0.0
  %874 = vmatpush.msra.mxu0 0.0
  %875 = vmatpush.msra.mxu0 0.0
  %876 = vmatpush.msra.mxu0 0.0
  %877 = vmatpush.msra.mxu0 0.0
  %878 = vmatpush.msra.mxu0 0.0
  %879 = vmatpush.msra.mxu0 0.0
  %880 = vmatpush.msra.mxu0 0.0
  %881 = vmatpush.msra.mxu0 0.0
  %882 = vmatpush.msra.mxu0 0.0
  %883 = vmatpush.msra.mxu0 0.0
  %884 = vmatpush.msra.mxu0 0.0
  %885 = vmatpush.msra.mxu0 %v238
  %886 = vmatpush.msra.mxu0 %v237
  %887 = vmatpush.msra.mxu0 %v236
  %888 = vmatpush.msra.mxu0 %v235
  %889 = vmatmul.f32.gmra.mxu0 %v871
  %v890 = vpop.f32.mrf.mxu0
  %v891 = vadd.f32 0.0, %v890
  %892 = vdwg.mxu0
  %v893 = vadd.f32 %v866, %v891
  %v894 = vxor.u32 %v893, 2147483648
  %v895 = vmul.f32 %v894, 1.442695
  %v896 = vpow.pop %v895
  %v897 = vadd.f32 %v896, 1.0
  %v898 = vrcp.pop %v897
  %v899 = vmul.f32 %v897, %v898
  %v900 = vsub.f32 1.0, %v899
  %v901 = vmul.f32 %v898, %v900
  %v902 = vadd.f32 %v898, %v901
  %vm903 = vweird.f32 %v897
  %vm904 = vweird.f32 %v898
  %vm905 = vmor %vm903, %vm904
  %v906 = vsel %vm905, %v898, %v902
  %v907 = vand.u32 2147483647, %v897
  %vm908 = vcmp.eq.f32.partialorder %v907, 8.507059e+37
  %v909 = vand.u32 %v897, 2147483648
  %v910 = vor.u32 1.1754944e-38, %v909
  %v911 = vsel %vm908, %v910, %v906
  %v912 = vmul.f32 1.0, %v911
  %v913 = vtanh.pop %v893
  %v914 = vmul.f32 %v912, %v838
  %916 = vrot.lane.b32.xlu0 %v913, 64
  %v917 = vpop.permute.xlu0 %916
  %v919 = vmul.f32 %v912, %v917
  %921 = vrot.lane.b32.xlu0 %v919, 32
  %v922 = vpop.permute.xlu0 %921
  %v924 = vadd.f32 %v914, %v922
  %v925 = vtanh.pop %v924
  %927 = vrot.lane.b32.xlu0 %v925, 64
  %v928 = vpop.permute.xlu0 %927
  %v930 = vmul.f32 %v912, %v928
  %v931 = vld [vmem:[%s15] sm:$0xff]
  %v932 = vld [vmem:[%s15 + $0x8] sm:$0xff]
  %v933 = vld [vmem:[%s15 + $0x10] sm:$0xff]
  %v934 = vld [vmem:[%s15 + $0x18] sm:$0xff]
  %v935 = vld [vmem:[%s17] sm:$0x1]
  %v937 = vperm.slane %v935, 0
  %940 = vrot.lane.b32.xlu0 %v930, 32
  %v941 = vpop.permute.xlu0 %940
  %v942 = vsel %vm267, %v941, 0
  %944 = vmatpush.msra.mxu0 0.0
  %945 = vmatpush.msra.mxu0 0.0
  %946 = vmatpush.msra.mxu0 0.0
  %947 = vmatpush.msra.mxu0 0.0
  %948 = vmatpush.msra.mxu0 0.0
  %949 = vmatpush.msra.mxu0 0.0
  %950 = vmatpush.msra.mxu0 0.0
  %951 = vmatpush.msra.mxu0 0.0
  %952 = vmatpush.msra.mxu0 0.0
  %953 = vmatpush.msra.mxu0 0.0
  %954 = vmatpush.msra.mxu0 0.0
  %955 = vmatpush.msra.mxu0 0.0
  %956 = vmatpush.msra.mxu0 %v934
  %957 = vmatpush.msra.mxu0 %v933
  %958 = vmatpush.msra.mxu0 %v932
  %959 = vmatpush.msra.mxu0 %v931
  %960 = vmatmul.f32.gmra.mxu0 %v355
  %v961 = vpop.f32.mrf.mxu0
  %v962 = vadd.f32 %v937, %v961
  %963 = vmatmul.f32.gmra.mxu0 %v441
  %v964 = vpop.f32.mrf.mxu0
  %v965 = vadd.f32 %v937, %v964
  %966 = vmatmul.f32.gmra.mxu0 %v527
  %v967 = vpop.f32.mrf.mxu0
  %v968 = vadd.f32 %v937, %v967
  %969 = vmatmul.f32.gmra.mxu0 %v613
  %v970 = vpop.f32.mrf.mxu0
  %v971 = vadd.f32 %v937, %v970
  %972 = vmatmul.f32.gmra.mxu0 %v699
  %v973 = vpop.f32.mrf.mxu0
  %v974 = vadd.f32 %v937, %v973
  %975 = vmatmul.f32.gmra.mxu0 %v785
  %v976 = vpop.f32.mrf.mxu0
  %v977 = vadd.f32 %v937, %v976
  %978 = vmatmul.f32.gmra.mxu0 %v871
  %v979 = vpop.f32.mrf.mxu0
  %v980 = vadd.f32 %v937, %v979
  %981 = vmatmul.f32.gmra.mxu0 %v942
  %v982 = vpop.f32.mrf.mxu0
  %v983 = vadd.f32 %v937, %v982
  %984 = vdwg.mxu0
  %v985 = vld [vmem:[%s3] sm:$0xff]
  %v986 = vld [vmem:[%s3 + $0x8] sm:$0xff]
  %v987 = vld [vmem:[%s3 + $0x10] sm:$0xff]
  %v988 = vld [vmem:[%s3 + $0x18] sm:$0xff]
  %v989 = vld [vmem:[%s3 + $0x20] sm:$0xff]
  %v990 = vld [vmem:[%s3 + $0x28] sm:$0xff]
  %v991 = vld [vmem:[%s3 + $0x30] sm:$0xff]
  %v992 = vld [vmem:[%s3 + $0x38] sm:$0xff]
  %vm993 = vcmask 523264
  %v995 = vsel %vm993, %v985, 0
  %v998 = vsel %vm993, %v986, 0
  %v1001 = vsel %vm993, %v987, 0
  %v1004 = vsel %vm993, %v988, 0
  %v1007 = vsel %vm993, %v989, 0
  %v1010 = vsel %vm993, %v990, 0
  %v1013 = vsel %vm993, %v991, 0
  %v1016 = vsel %vm993, %v992, 0
  %1018 = vmatpush.msra.mxu0 0.0
  %1019 = vmatpush.msra.mxu0 0.0
  %1020 = vmatpush.msra.mxu0 0.0
  %1021 = vmatpush.msra.mxu0 0.0
  %1022 = vmatpush.msra.mxu0 0.0
  %1023 = vmatpush.msra.mxu0 0.0
  %1024 = vmatpush.msra.mxu0 0.0
  %1025 = vmatpush.msra.mxu0 0.0
  %1026 = vmatpush.msra.mxu0 %v983
  %1027 = vmatpush.msra.mxu0 %v980
  %1028 = vmatpush.msra.mxu0 %v977
  %1029 = vmatpush.msra.mxu0 %v974
  %1030 = vmatpush.msra.mxu0 %v971
  %1031 = vmatpush.msra.mxu0 %v968
  %1032 = vmatpush.msra.mxu0 %v965
  %1033 = vmatpush.msra.mxu0 %v962
  %1034 = vmatmul.f32.gmra.mxu0 %v995
  %v1035 = vpop.f32.mrf.mxu0
  %v1036 = vadd.f32 0.0, %v1035
  %1037 = vmatmul.f32.gmra.mxu0 %v998
  %v1038 = vpop.f32.mrf.mxu0
  %v1039 = vadd.f32 0.0, %v1038
  %1040 = vmatmul.f32.gmra.mxu0 %v1001
  %v1041 = vpop.f32.mrf.mxu0
  %v1042 = vadd.f32 0.0, %v1041
  %1043 = vmatmul.f32.gmra.mxu0 %v1004
  %v1044 = vpop.f32.mrf.mxu0
  %v1045 = vadd.f32 0.0, %v1044
  %1046 = vmatmul.f32.gmra.mxu0 %v1007
  %v1047 = vpop.f32.mrf.mxu0
  %v1048 = vadd.f32 0.0, %v1047
  %1049 = vmatmul.f32.gmra.mxu0 %v1010
  %v1050 = vpop.f32.mrf.mxu0
  %v1051 = vadd.f32 0.0, %v1050
  %1052 = vmatmul.f32.gmra.mxu0 %v1013
  %v1053 = vpop.f32.mrf.mxu0
  %v1054 = vadd.f32 0.0, %v1053
  %1055 = vmatmul.f32.gmra.mxu0 %v1016
  %v1056 = vpop.f32.mrf.mxu0
  %v1057 = vadd.f32 0.0, %v1056
  %1058 = vdwg.mxu0
  %vm1059 = vcmp.gt.f32.partialorder %v1036, 0.0
  %vm1060 = vcmp.gt.f32.partialorder %v1039, 0.0
  %vm1061 = vcmp.gt.f32.partialorder %v1042, 0.0
  %vm1062 = vcmp.gt.f32.partialorder %v1045, 0.0
  %vm1063 = vcmp.gt.f32.partialorder %v1048, 0.0
  %vm1064 = vcmp.gt.f32.partialorder %v1051, 0.0
  %vm1065 = vcmp.gt.f32.partialorder %v1054, 0.0
  %vm1066 = vcmp.gt.f32.partialorder %v1057, 0.0
  %v1067 = vmul.f32 %v1036, 0.1
  %v1068 = vmul.f32 %v1039, 0.1
  %v1069 = vmul.f32 %v1042, 0.1
  %v1070 = vmul.f32 %v1045, 0.1
  %v1071 = vmul.f32 %v1048, 0.1
  %v1072 = vmul.f32 %v1051, 0.1
  %v1073 = vmul.f32 %v1054, 0.1
  %v1074 = vmul.f32 %v1057, 0.1
  %v1075 = vsel %vm1059, %v1036, %v1067
  %v1076 = vsel %vm1060, %v1039, %v1068
  %v1077 = vsel %vm1061, %v1042, %v1069
  %v1078 = vsel %vm1062, %v1045, %v1070
  %v1079 = vsel %vm1063, %v1048, %v1071
  %v1080 = vsel %vm1064, %v1051, %v1072
  %v1081 = vsel %vm1065, %v1054, %v1073
  %v1082 = vsel %vm1066, %v1057, %v1074
  %v1083 = vld [vmem:[%s19] sm:$0xff]
  %v1084 = vld [vmem:[%s19 + $0x8] sm:$0xff]
  %v1085 = vld [vmem:[%s19 + $0x10] sm:$0xff]
  %v1086 = vld [vmem:[%s19 + $0x18] sm:$0xff]
  %v1087 = vld [vmem:[%s19 + $0x20] sm:$0xff]
  %v1088 = vld [vmem:[%s19 + $0x28] sm:$0xff]
  %v1089 = vld [vmem:[%s19 + $0x30] sm:$0xff]
  %v1090 = vld [vmem:[%s19 + $0x38] sm:$0xff]
  %v1091 = vld [vmem:[%s21] sm:$0x1]
  %v1093 = vperm.slane %v1091, 0
  %v1096 = vsel %vm993, %v1075, 0
  %v1099 = vsel %vm993, %v1076, 0
  %v1102 = vsel %vm993, %v1077, 0
  %v1105 = vsel %vm993, %v1078, 0
  %v1108 = vsel %vm993, %v1079, 0
  %v1111 = vsel %vm993, %v1080, 0
  %v1114 = vsel %vm993, %v1081, 0
  %v1117 = vsel %vm993, %v1082, 0
  %1119 = vmatpush.msra.mxu0 0.0
  %1120 = vmatpush.msra.mxu0 0.0
  %1121 = vmatpush.msra.mxu0 0.0
  %1122 = vmatpush.msra.mxu0 0.0
  %1123 = vmatpush.msra.mxu0 0.0
  %1124 = vmatpush.msra.mxu0 0.0
  %1125 = vmatpush.msra.mxu0 0.0
  %1126 = vmatpush.msra.mxu0 0.0
  %1127 = vmatpush.msra.mxu0 %v1090
  %1128 = vmatpush.msra.mxu0 %v1089
  %1129 = vmatpush.msra.mxu0 %v1088
  %1130 = vmatpush.msra.mxu0 %v1087
  %1131 = vmatpush.msra.mxu0 %v1086
  %1132 = vmatpush.msra.mxu0 %v1085
  %1133 = vmatpush.msra.mxu0 %v1084
  %1134 = vmatpush.msra.mxu0 %v1083
  %1135 = vmatmul.f32.gmra.mxu0 %v1096
  %v1136 = vpop.f32.mrf.mxu0
  %v1137 = vadd.f32 %v1093, %v1136
  %1138 = vmatmul.f32.gmra.mxu0 %v1099
  %v1139 = vpop.f32.mrf.mxu0
  %v1140 = vadd.f32 %v1093, %v1139
  %1141 = vmatmul.f32.gmra.mxu0 %v1102
  %v1142 = vpop.f32.mrf.mxu0
  %v1143 = vadd.f32 %v1093, %v1142
  %1144 = vmatmul.f32.gmra.mxu0 %v1105
  %v1145 = vpop.f32.mrf.mxu0
  %v1146 = vadd.f32 %v1093, %v1145
  %1147 = vmatmul.f32.gmra.mxu0 %v1108
  %v1148 = vpop.f32.mrf.mxu0
  %v1149 = vadd.f32 %v1093, %v1148
  %1150 = vmatmul.f32.gmra.mxu0 %v1111
  %v1151 = vpop.f32.mrf.mxu0
  %v1152 = vadd.f32 %v1093, %v1151
  %1153 = vmatmul.f32.gmra.mxu0 %v1114
  %v1154 = vpop.f32.mrf.mxu0
  %v1155 = vadd.f32 %v1093, %v1154
  %1156 = vmatmul.f32.gmra.mxu0 %v1117
  %v1157 = vpop.f32.mrf.mxu0
  %v1158 = vadd.f32 %v1093, %v1157
  %1159 = vdwg.mxu0
  %vm1160 = vcmp.gt.f32.partialorder %v1137, 0.0
  %vm1161 = vcmp.gt.f32.partialorder %v1140, 0.0
  %vm1162 = vcmp.gt.f32.partialorder %v1143, 0.0
  %vm1163 = vcmp.gt.f32.partialorder %v1146, 0.0
  %vm1164 = vcmp.gt.f32.partialorder %v1149, 0.0
  %vm1165 = vcmp.gt.f32.partialorder %v1152, 0.0
  %vm1166 = vcmp.gt.f32.partialorder %v1155, 0.0
  %vm1167 = vcmp.gt.f32.partialorder %v1158, 0.0
  %v1168 = vmul.f32 %v1137, 0.1
  %v1169 = vmul.f32 %v1140, 0.1
  %v1170 = vmul.f32 %v1143, 0.1
  %v1171 = vmul.f32 %v1146, 0.1
  %v1172 = vmul.f32 %v1149, 0.1
  %v1173 = vmul.f32 %v1152, 0.1
  %v1174 = vmul.f32 %v1155, 0.1
  %v1175 = vmul.f32 %v1158, 0.1
  %v1176 = vsel %vm1160, %v1137, %v1168
  %v1177 = vsel %vm1161, %v1140, %v1169
  %v1178 = vsel %vm1162, %v1143, %v1170
  %v1179 = vsel %vm1163, %v1146, %v1171
  %v1180 = vsel %vm1164, %v1149, %v1172
  %v1181 = vsel %vm1165, %v1152, %v1173
  %v1182 = vsel %vm1166, %v1155, %v1174
  %v1183 = vsel %vm1167, %v1158, %v1175
  %v1184 = vld [vmem:[%s23] sm:$0xff]
  %v1185 = vld [vmem:[%s23 + $0x8] sm:$0xff]
  %v1186 = vld [vmem:[%s23 + $0x10] sm:$0xff]
  %v1187 = vld [vmem:[%s23 + $0x18] sm:$0xff]
  %v1188 = vld [vmem:[%s23 + $0x20] sm:$0xff]
  %v1189 = vld [vmem:[%s23 + $0x28] sm:$0xff]
  %v1190 = vld [vmem:[%s23 + $0x30] sm:$0xff]
  %v1191 = vld [vmem:[%s23 + $0x38] sm:$0xff]
  %v1192 = vld [vmem:[%s25] sm:$0x1]
  %v1193 = vld [vmem:[%s27] sm:$0xff]
  %v1194 = vld [vmem:[%s27 + $0x8] sm:$0xff]
  %v1195 = vld [vmem:[%s27 + $0x10] sm:$0xff]
  %v1196 = vld [vmem:[%s27 + $0x18] sm:$0xff]
  %v1197 = vld [vmem:[%s27 + $0x20] sm:$0xff]
  %v1198 = vld [vmem:[%s27 + $0x28] sm:$0xff]
  %v1199 = vld [vmem:[%s27 + $0x30] sm:$0xff]
  %v1200 = vld [vmem:[%s27 + $0x38] sm:$0xff]
  %v1201 = vld [vmem:[%s29] sm:$0x1]
  %v1202 = vld [vmem:[%s31] sm:$0x1]
  %v1203 = vld [vmem:[%s33] sm:$0x1]
  %v1205 = vperm.slane %v1201, 0
  %v1208 = vsel %vm993, %v1176, 0
  %v1211 = vsel %vm993, %v1177, 0
  %v1214 = vsel %vm993, %v1178, 0
  %v1217 = vsel %vm993, %v1179, 0
  %v1220 = vsel %vm993, %v1180, 0
  %v1223 = vsel %vm993, %v1181, 0
  %v1226 = vsel %vm993, %v1182, 0
  %v1229 = vsel %vm993, %v1183, 0
  %1231 = vmatpush.msra.mxu0 0.0
  %1232 = vmatpush.msra.mxu0 0.0
  %1233 = vmatpush.msra.mxu0 0.0
  %1234 = vmatpush.msra.mxu0 0.0
  %1235 = vmatpush.msra.mxu0 0.0
  %1236 = vmatpush.msra.mxu0 0.0
  %1237 = vmatpush.msra.mxu0 0.0
  %1238 = vmatpush.msra.mxu0 0.0
  %1239 = vmatpush.msra.mxu0 %v1200
  %1240 = vmatpush.msra.mxu0 %v1199
  %1241 = vmatpush.msra.mxu0 %v1198
  %1242 = vmatpush.msra.mxu0 %v1197
  %1243 = vmatpush.msra.mxu0 %v1196
  %1244 = vmatpush.msra.mxu0 %v1195
  %1245 = vmatpush.msra.mxu0 %v1194
  %1246 = vmatpush.msra.mxu0 %v1193
  %1247 = vmatmul.f32.gmra.mxu0 %v1208
  %v1248 = vpop.f32.mrf.mxu0
  %v1249 = vadd.f32 %v1205, %v1248
  %1250 = vmatmul.f32.gmra.mxu0 %v1211
  %v1251 = vpop.f32.mrf.mxu0
  %v1252 = vadd.f32 %v1205, %v1251
  %1253 = vmatmul.f32.gmra.mxu0 %v1214
  %v1254 = vpop.f32.mrf.mxu0
  %v1255 = vadd.f32 %v1205, %v1254
  %1256 = vmatmul.f32.gmra.mxu0 %v1217
  %v1257 = vpop.f32.mrf.mxu0
  %v1258 = vadd.f32 %v1205, %v1257
  %1259 = vmatmul.f32.gmra.mxu0 %v1220
  %v1260 = vpop.f32.mrf.mxu0
  %v1261 = vadd.f32 %v1205, %v1260
  %1262 = vmatmul.f32.gmra.mxu0 %v1223
  %v1263 = vpop.f32.mrf.mxu0
  %v1264 = vadd.f32 %v1205, %v1263
  %1265 = vmatmul.f32.gmra.mxu0 %v1226
  %v1266 = vpop.f32.mrf.mxu0
  %v1267 = vadd.f32 %v1205, %v1266
  %1268 = vmatmul.f32.gmra.mxu0 %v1229
  %v1269 = vpop.f32.mrf.mxu0
  %v1270 = vadd.f32 %v1205, %v1269
  %1271 = vdwg.mxu0
  %v1272 = vsel %vm243, %v1249, 0.0
  %v1273 = vsel %vm243, %v1252, 0.0
  %v1274 = vadd.f32 %v1272, %v1273
  %v1275 = vsel %vm243, %v1255, 0.0
  %v1276 = vadd.f32 %v1274, %v1275
  %v1277 = vsel %vm243, %v1258, 0.0
  %v1278 = vadd.f32 %v1276, %v1277
  %v1279 = vsel %vm243, %v1261, 0.0
  %v1280 = vadd.f32 %v1278, %v1279
  %v1281 = vsel %vm243, %v1264, 0.0
  %v1282 = vadd.f32 %v1280, %v1281
  %v1283 = vsel %vm243, %v1267, 0.0
  %v1284 = vadd.f32 %v1282, %v1283
  %v1285 = vsel %vm243, %v1270, 0.0
  %v1286 = vadd.f32 %v1284, %v1285
  %v1287 = vrot.slane %v1286, 4
  %v1288 = vadd.f32 %v1286, %v1287
  %v1289 = vrot.slane %v1288, 2
  %v1290 = vadd.f32 %v1288, %v1289
  %v1291 = vrot.slane %v1290, 1
  %v1292 = vadd.f32 %v1290, %v1291
  %v1293 = vrcp.pop 64.0
  %v1294 = vmul.f32 64.0, %v1293
  %v1295 = vsub.f32 1.0, %v1294
  %v1296 = vmul.f32 %v1293, %v1295
  %v1297 = vadd.f32 %v1293, %v1296
  %vm1298 = vweird.f32 %v1293
  %v1299 = vsel %vm1298, %v1293, %v1297
  %v1300 = vmul.f32 %v1292, %v1299
  %v1301 = vsub.f32 %v1249, %v1300
  %v1302 = vsub.f32 %v1252, %v1300
  %v1303 = vsub.f32 %v1255, %v1300
  %v1304 = vsub.f32 %v1258, %v1300
  %v1305 = vsub.f32 %v1261, %v1300
  %v1306 = vsub.f32 %v1264, %v1300
  %v1307 = vsub.f32 %v1267, %v1300
  %v1308 = vsub.f32 %v1270, %v1300
  %v1309 = vmul.f32 %v1301, %v1301
  %v1310 = vmul.f32 %v1302, %v1302
  %v1311 = vmul.f32 %v1303, %v1303
  %v1312 = vmul.f32 %v1304, %v1304
  %v1313 = vmul.f32 %v1305, %v1305
  %v1314 = vmul.f32 %v1306, %v1306
  %v1315 = vmul.f32 %v1307, %v1307
  %v1316 = vmul.f32 %v1308, %v1308
  %v1317 = vsel %vm243, %v1309, 0.0
  %v1318 = vsel %vm243, %v1310, 0.0
  %v1319 = vadd.f32 %v1317, %v1318
  %v1320 = vsel %vm243, %v1311, 0.0
  %v1321 = vadd.f32 %v1319, %v1320
  %v1322 = vsel %vm243, %v1312, 0.0
  %v1323 = vadd.f32 %v1321, %v1322
  %v1324 = vsel %vm243, %v1313, 0.0
  %v1325 = vadd.f32 %v1323, %v1324
  %v1326 = vsel %vm243, %v1314, 0.0
  %v1327 = vadd.f32 %v1325, %v1326
  %v1328 = vsel %vm243, %v1315, 0.0
  %v1329 = vadd.f32 %v1327, %v1328
  %v1330 = vsel %vm243, %v1316, 0.0
  %v1331 = vadd.f32 %v1329, %v1330
  %v1332 = vrot.slane %v1331, 4
  %v1333 = vadd.f32 %v1331, %v1332
  %v1334 = vrot.slane %v1333, 2
  %v1335 = vadd.f32 %v1333, %v1334
  %v1336 = vrot.slane %v1335, 1
  %v1337 = vadd.f32 %v1335, %v1336
  %v1338 = vmul.f32 %v1337, %v1299
  %v1339 = vadd.f32 %v1338, 1e-05
  %v1340 = vrsqrt.pop %v1339
  %v1341 = vmul.f32 %v1340, %v1339
  %v1342 = vmul.f32 %v1341, %v1340
  %v1343 = vmul.f32 0.5, %v1342
  %v1344 = vsub.f32 1.5, %v1343
  %v1345 = vmul.f32 %v1340, %v1344
  %vm1346 = vweird.f32 %v1339
  %vm1347 = vweird.f32 %v1340
  %vm1348 = vmor %vm1346, %vm1347
  %v1349 = vsel %vm1348, %v1340, %v1345
  %v1350 = vmul.f32 %v1301, %v1349
  %v1351 = vmul.f32 %v1302, %v1349
  %v1352 = vmul.f32 %v1303, %v1349
  %v1353 = vmul.f32 %v1304, %v1349
  %v1354 = vmul.f32 %v1305, %v1349
  %v1355 = vmul.f32 %v1306, %v1349
  %v1356 = vmul.f32 %v1307, %v1349
  %v1357 = vmul.f32 %v1308, %v1349
  %v1359 = vperm.slane %v1202, 0
  %v1361 = vmul.f32 %v1350, %v1359
  %v1362 = vmul.f32 %v1351, %v1359
  %v1363 = vmul.f32 %v1352, %v1359
  %v1364 = vmul.f32 %v1353, %v1359
  %v1365 = vmul.f32 %v1354, %v1359
  %v1366 = vmul.f32 %v1355, %v1359
  %v1367 = vmul.f32 %v1356, %v1359
  %v1368 = vmul.f32 %v1357, %v1359
  %v1370 = vperm.slane %v1203, 0
  %v1372 = vadd.f32 %v1361, %v1370
  %v1373 = vadd.f32 %v1362, %v1370
  %v1374 = vadd.f32 %v1363, %v1370
  %v1375 = vadd.f32 %v1364, %v1370
  %v1376 = vadd.f32 %v1365, %v1370
  %v1377 = vadd.f32 %v1366, %v1370
  %v1378 = vadd.f32 %v1367, %v1370
  %v1379 = vadd.f32 %v1368, %v1370
  %vm1380 = vcmp.gt.f32.partialorder %v1176, 0.0
  %vm1381 = vcmp.gt.f32.partialorder %v1177, 0.0
  %vm1382 = vcmp.gt.f32.partialorder %v1178, 0.0
  %vm1383 = vcmp.gt.f32.partialorder %v1179, 0.0
  %vm1384 = vcmp.gt.f32.partialorder %v1180, 0.0
  %vm1385 = vcmp.gt.f32.partialorder %v1181, 0.0
  %vm1386 = vcmp.gt.f32.partialorder %v1182, 0.0
  %vm1387 = vcmp.gt.f32.partialorder %v1183, 0.0
  %v1388 = vmul.f32 %v1176, 0.1
  %v1389 = vmul.f32 %v1177, 0.1
  %v1390 = vmul.f32 %v1178, 0.1
  %v1391 = vmul.f32 %v1179, 0.1
  %v1392 = vmul.f32 %v1180, 0.1
  %v1393 = vmul.f32 %v1181, 0.1
  %v1394 = vmul.f32 %v1182, 0.1
  %v1395 = vmul.f32 %v1183, 0.1
  %v1396 = vsel %vm1380, %v1176, %v1388
  %v1397 = vsel %vm1381, %v1177, %v1389
  %v1398 = vsel %vm1382, %v1178, %v1390
  %v1399 = vsel %vm1383, %v1179, %v1391
  %v1400 = vsel %vm1384, %v1180, %v1392
  %v1401 = vsel %vm1385, %v1181, %v1393
  %v1402 = vsel %vm1386, %v1182, %v1394
  %v1403 = vsel %vm1387, %v1183, %v1395
  %v1405 = vperm.slane %v1192, 0
  %v1408 = vsel %vm993, %v1396, 0
  %v1411 = vsel %vm993, %v1397, 0
  %v1414 = vsel %vm993, %v1398, 0
  %v1417 = vsel %vm993, %v1399, 0
  %v1420 = vsel %vm993, %v1400, 0
  %v1423 = vsel %vm993, %v1401, 0
  %v1426 = vsel %vm993, %v1402, 0
  %v1429 = vsel %vm993, %v1403, 0
  %1431 = vmatpush.msra.mxu0 0.0
  %1432 = vmatpush.msra.mxu0 0.0
  %1433 = vmatpush.msra.mxu0 0.0
  %1434 = vmatpush.msra.mxu0 0.0
  %1435 = vmatpush.msra.mxu0 0.0
  %1436 = vmatpush.msra.mxu0 0.0
  %1437 = vmatpush.msra.mxu0 0.0
  %1438 = vmatpush.msra.mxu0 0.0
  %1439 = vmatpush.msra.mxu0 %v1191
  %1440 = vmatpush.msra.mxu0 %v1190
  %1441 = vmatpush.msra.mxu0 %v1189
  %1442 = vmatpush.msra.mxu0 %v1188
  %1443 = vmatpush.msra.mxu0 %v1187
  %1444 = vmatpush.msra.mxu0 %v1186
  %1445 = vmatpush.msra.mxu0 %v1185
  %1446 = vmatpush.msra.mxu0 %v1184
  %1447 = vmatmul.f32.gmra.mxu0 %v1408
  %v1448 = vpop.f32.mrf.mxu0
  %v1449 = vadd.f32 %v1405, %v1448
  %1450 = vmatmul.f32.gmra.mxu0 %v1411
  %v1451 = vpop.f32.mrf.mxu0
  %v1452 = vadd.f32 %v1405, %v1451
  %1453 = vmatmul.f32.gmra.mxu0 %v1414
  %v1454 = vpop.f32.mrf.mxu0
  %v1455 = vadd.f32 %v1405, %v1454
  %1456 = vmatmul.f32.gmra.mxu0 %v1417
  %v1457 = vpop.f32.mrf.mxu0
  %v1458 = vadd.f32 %v1405, %v1457
  %1459 = vmatmul.f32.gmra.mxu0 %v1420
  %v1460 = vpop.f32.mrf.mxu0
  %v1461 = vadd.f32 %v1405, %v1460
  %1462 = vmatmul.f32.gmra.mxu0 %v1423
  %v1463 = vpop.f32.mrf.mxu0
  %v1464 = vadd.f32 %v1405, %v1463
  %1465 = vmatmul.f32.gmra.mxu0 %v1426
  %v1466 = vpop.f32.mrf.mxu0
  %v1467 = vadd.f32 %v1405, %v1466
  %1468 = vmatmul.f32.gmra.mxu0 %v1429
  %v1469 = vpop.f32.mrf.mxu0
  %v1470 = vadd.f32 %v1405, %v1469
  %1471 = vdwg.mxu0
  %v1472 = vadd.f32 %v1449, %v1372
  %v1473 = vadd.f32 %v1452, %v1373
  %v1474 = vadd.f32 %v1455, %v1374
  %v1475 = vadd.f32 %v1458, %v1375
  %v1476 = vadd.f32 %v1461, %v1376
  %v1477 = vadd.f32 %v1464, %v1377
  %v1478 = vadd.f32 %v1467, %v1378
  %v1479 = vadd.f32 %v1470, %v1379
  %vm1480 = vcmp.gt.f32.partialorder %v1472, 0.0
  %vm1481 = vcmp.gt.f32.partialorder %v1473, 0.0
  %vm1482 = vcmp.gt.f32.partialorder %v1474, 0.0
  %vm1483 = vcmp.gt.f32.partialorder %v1475, 0.0
  %vm1484 = vcmp.gt.f32.partialorder %v1476, 0.0
  %vm1485 = vcmp.gt.f32.partialorder %v1477, 0.0
  %vm1486 = vcmp.gt.f32.partialorder %v1478, 0.0
  %vm1487 = vcmp.gt.f32.partialorder %v1479, 0.0
  %v1488 = vmul.f32 %v1472, 0.1
  %v1489 = vmul.f32 %v1473, 0.1
  %v1490 = vmul.f32 %v1474, 0.1
  %v1491 = vmul.f32 %v1475, 0.1
  %v1492 = vmul.f32 %v1476, 0.1
  %v1493 = vmul.f32 %v1477, 0.1
  %v1494 = vmul.f32 %v1478, 0.1
  %v1495 = vmul.f32 %v1479, 0.1
  %v1496 = vsel %vm1480, %v1472, %v1488
  %v1497 = vsel %vm1481, %v1473, %v1489
  %v1498 = vsel %vm1482, %v1474, %v1490
  %v1499 = vsel %vm1483, %v1475, %v1491
  %v1500 = vsel %vm1484, %v1476, %v1492
  %v1501 = vsel %vm1485, %v1477, %v1493
  %v1502 = vsel %vm1486, %v1478, %v1494
  %v1503 = vsel %vm1487, %v1479, %v1495
  %v1504 = vld [vmem:[%s35] sm:$0xff]
  %v1505 = vld [vmem:[%s35 + $0x8] sm:$0xff]
  %v1506 = vld [vmem:[%s37] sm:$0x1]
  %v1507 = vld [vmem:[%s39] sm:$0xff]
  %v1508 = vld [vmem:[%s39 + $0x8] sm:$0xff]
  %v1509 = vld [vmem:[%s41] sm:$0x1]
  %v1510 = vld [vmem:[%s43] sm:$0x1]
  %v1511 = vld [vmem:[%s45] sm:$0x1]
  %v1513 = vperm.slane %v1509, 0
  %v1516 = vsel %vm243, %v1496, 0
  %v1519 = vsel %vm243, %v1497, 0
  %v1522 = vsel %vm243, %v1498, 0
  %v1525 = vsel %vm243, %v1499, 0
  %v1528 = vsel %vm243, %v1500, 0
  %v1531 = vsel %vm243, %v1501, 0
  %v1534 = vsel %vm243, %v1502, 0
  %v1537 = vsel %vm243, %v1503, 0
  %1539 = vmatpush.msra.mxu0 0.0
  %1540 = vmatpush.msra.mxu0 0.0
  %1541 = vmatpush.msra.mxu0 0.0
  %1542 = vmatpush.msra.mxu0 0.0
  %1543 = vmatpush.msra.mxu0 0.0
  %1544 = vmatpush.msra.mxu0 0.0
  %1545 = vmatpush.msra.mxu0 0.0
  %1546 = vmatpush.msra.mxu0 0.0
  %1547 = vmatpush.msra.mxu0 0.0
  %1548 = vmatpush.msra.mxu0 0.0
  %1549 = vmatpush.msra.mxu0 0.0
  %1550 = vmatpush.msra.mxu0 0.0
  %1551 = vmatpush.msra.mxu0 0.0
  %1552 = vmatpush.msra.mxu0 0.0
  %1553 = vmatpush.msra.mxu0 %v1508
  %1554 = vmatpush.msra.mxu0 %v1507
  %1555 = vmatmul.f32.gmra.mxu0 %v1516
  %v1556 = vpop.f32.mrf.mxu0
  %v1557 = vadd.f32 %v1513, %v1556
  %1558 = vmatmul.f32.gmra.mxu0 %v1519
  %v1559 = vpop.f32.mrf.mxu0
  %v1560 = vadd.f32 %v1513, %v1559
  %1561 = vmatmul.f32.gmra.mxu0 %v1522
  %v1562 = vpop.f32.mrf.mxu0
  %v1563 = vadd.f32 %v1513, %v1562
  %1564 = vmatmul.f32.gmra.mxu0 %v1525
  %v1565 = vpop.f32.mrf.mxu0
  %v1566 = vadd.f32 %v1513, %v1565
  %1567 = vmatmul.f32.gmra.mxu0 %v1528
  %v1568 = vpop.f32.mrf.mxu0
  %v1569 = vadd.f32 %v1513, %v1568
  %1570 = vmatmul.f32.gmra.mxu0 %v1531
  %v1571 = vpop.f32.mrf.mxu0
  %v1572 = vadd.f32 %v1513, %v1571
  %1573 = vmatmul.f32.gmra.mxu0 %v1534
  %v1574 = vpop.f32.mrf.mxu0
  %v1575 = vadd.f32 %v1513, %v1574
  %1576 = vmatmul.f32.gmra.mxu0 %v1537
  %v1577 = vpop.f32.mrf.mxu0
  %v1578 = vadd.f32 %v1513, %v1577
  %1579 = vdwg.mxu0
  %vm1580 = vcmask 64512
  %v1581 = vsel %vm1580, %v1557, 0.0
  %v1582 = vsel %vm1580, %v1560, 0.0
  %v1583 = vadd.f32 %v1581, %v1582
  %v1584 = vsel %vm1580, %v1563, 0.0
  %v1585 = vadd.f32 %v1583, %v1584
  %v1586 = vsel %vm1580, %v1566, 0.0
  %v1587 = vadd.f32 %v1585, %v1586
  %v1588 = vsel %vm1580, %v1569, 0.0
  %v1589 = vadd.f32 %v1587, %v1588
  %v1590 = vsel %vm1580, %v1572, 0.0
  %v1591 = vadd.f32 %v1589, %v1590
  %v1592 = vsel %vm1580, %v1575, 0.0
  %v1593 = vadd.f32 %v1591, %v1592
  %v1594 = vsel %vm1580, %v1578, 0.0
  %v1595 = vadd.f32 %v1593, %v1594
  %v1596 = vrot.slane %v1595, 4
  %v1597 = vadd.f32 %v1595, %v1596
  %v1598 = vrot.slane %v1597, 2
  %v1599 = vadd.f32 %v1597, %v1598
  %v1600 = vrot.slane %v1599, 1
  %v1601 = vadd.f32 %v1599, %v1600
  %v1602 = vmul.f32 %v1601, %v1299
  %v1603 = vsub.f32 %v1557, %v1602
  %v1604 = vsub.f32 %v1560, %v1602
  %v1605 = vsub.f32 %v1563, %v1602
  %v1606 = vsub.f32 %v1566, %v1602
  %v1607 = vsub.f32 %v1569, %v1602
  %v1608 = vsub.f32 %v1572, %v1602
  %v1609 = vsub.f32 %v1575, %v1602
  %v1610 = vsub.f32 %v1578, %v1602
  %v1611 = vmul.f32 %v1603, %v1603
  %v1612 = vmul.f32 %v1604, %v1604
  %v1613 = vmul.f32 %v1605, %v1605
  %v1614 = vmul.f32 %v1606, %v1606
  %v1615 = vmul.f32 %v1607, %v1607
  %v1616 = vmul.f32 %v1608, %v1608
  %v1617 = vmul.f32 %v1609, %v1609
  %v1618 = vmul.f32 %v1610, %v1610
  %v1619 = vsel %vm1580, %v1611, 0.0
  %v1620 = vsel %vm1580, %v1612, 0.0
  %v1621 = vadd.f32 %v1619, %v1620
  %v1622 = vsel %vm1580, %v1613, 0.0
  %v1623 = vadd.f32 %v1621, %v1622
  %v1624 = vsel %vm1580, %v1614, 0.0
  %v1625 = vadd.f32 %v1623, %v1624
  %v1626 = vsel %vm1580, %v1615, 0.0
  %v1627 = vadd.f32 %v1625, %v1626
  %v1628 = vsel %vm1580, %v1616, 0.0
  %v1629 = vadd.f32 %v1627, %v1628
  %v1630 = vsel %vm1580, %v1617, 0.0
  %v1631 = vadd.f32 %v1629, %v1630
  %v1632 = vsel %vm1580, %v1618, 0.0
  %v1633 = vadd.f32 %v1631, %v1632
  %v1634 = vrot.slane %v1633, 4
  %v1635 = vadd.f32 %v1633, %v1634
  %v1636 = vrot.slane %v1635, 2
  %v1637 = vadd.f32 %v1635, %v1636
  %v1638 = vrot.slane %v1637, 1
  %v1639 = vadd.f32 %v1637, %v1638
  %v1640 = vmul.f32 %v1639, %v1299
  %v1641 = vadd.f32 %v1640, 1e-05
  %v1642 = vrsqrt.pop %v1641
  %v1643 = vmul.f32 %v1642, %v1641
  %v1644 = vmul.f32 %v1643, %v1642
  %v1645 = vmul.f32 0.5, %v1644
  %v1646 = vsub.f32 1.5, %v1645
  %v1647 = vmul.f32 %v1642, %v1646
  %vm1648 = vweird.f32 %v1641
  %vm1649 = vweird.f32 %v1642
  %vm1650 = vmor %vm1648, %vm1649
  %v1651 = vsel %vm1650, %v1642, %v1647
  %v1652 = vmul.f32 %v1603, %v1651
  %v1653 = vmul.f32 %v1604, %v1651
  %v1654 = vmul.f32 %v1605, %v1651
  %v1655 = vmul.f32 %v1606, %v1651
  %v1656 = vmul.f32 %v1607, %v1651
  %v1657 = vmul.f32 %v1608, %v1651
  %v1658 = vmul.f32 %v1609, %v1651
  %v1659 = vmul.f32 %v1610, %v1651
  %v1661 = vperm.slane %v1510, 0
  %v1663 = vmul.f32 %v1652, %v1661
  %v1664 = vmul.f32 %v1653, %v1661
  %v1665 = vmul.f32 %v1654, %v1661
  %v1666 = vmul.f32 %v1655, %v1661
  %v1667 = vmul.f32 %v1656, %v1661
  %v1668 = vmul.f32 %v1657, %v1661
  %v1669 = vmul.f32 %v1658, %v1661
  %v1670 = vmul.f32 %v1659, %v1661
  %v1672 = vperm.slane %v1511, 0
  %v1674 = vadd.f32 %v1663, %v1672
  %v1675 = vadd.f32 %v1664, %v1672
  %v1676 = vadd.f32 %v1665, %v1672
  %v1677 = vadd.f32 %v1666, %v1672
  %v1678 = vadd.f32 %v1667, %v1672
  %v1679 = vadd.f32 %v1668, %v1672
  %v1680 = vadd.f32 %v1669, %v1672
  %v1681 = vadd.f32 %v1670, %v1672
  %vm1682 = vcmp.gt.f32.partialorder %v1496, 0.0
  %vm1683 = vcmp.gt.f32.partialorder %v1497, 0.0
  %vm1684 = vcmp.gt.f32.partialorder %v1498, 0.0
  %vm1685 = vcmp.gt.f32.partialorder %v1499, 0.0
  %vm1686 = vcmp.gt.f32.partialorder %v1500, 0.0
  %vm1687 = vcmp.gt.f32.partialorder %v1501, 0.0
  %vm1688 = vcmp.gt.f32.partialorder %v1502, 0.0
  %vm1689 = vcmp.gt.f32.partialorder %v1503, 0.0
  %v1690 = vmul.f32 %v1496, 0.1
  %v1691 = vmul.f32 %v1497, 0.1
  %v1692 = vmul.f32 %v1498, 0.1
  %v1693 = vmul.f32 %v1499, 0.1
  %v1694 = vmul.f32 %v1500, 0.1
  %v1695 = vmul.f32 %v1501, 0.1
  %v1696 = vmul.f32 %v1502, 0.1
  %v1697 = vmul.f32 %v1503, 0.1
  %v1698 = vsel %vm1682, %v1496, %v1690
  %v1699 = vsel %vm1683, %v1497, %v1691
  %v1700 = vsel %vm1684, %v1498, %v1692
  %v1701 = vsel %vm1685, %v1499, %v1693
  %v1702 = vsel %vm1686, %v1500, %v1694
  %v1703 = vsel %vm1687, %v1501, %v1695
  %v1704 = vsel %vm1688, %v1502, %v1696
  %v1705 = vsel %vm1689, %v1503, %v1697
  %v1707 = vperm.slane %v1506, 0
  %v1710 = vsel %vm243, %v1698, 0
  %v1713 = vsel %vm243, %v1699, 0
  %v1716 = vsel %vm243, %v1700, 0
  %v1719 = vsel %vm243, %v1701, 0
  %v1722 = vsel %vm243, %v1702, 0
  %v1725 = vsel %vm243, %v1703, 0
  %v1728 = vsel %vm243, %v1704, 0
  %v1731 = vsel %vm243, %v1705, 0
  %1733 = vmatpush.msra.mxu0 0.0
  %1734 = vmatpush.msra.mxu0 0.0
  %1735 = vmatpush.msra.mxu0 0.0
  %1736 = vmatpush.msra.mxu0 0.0
  %1737 = vmatpush.msra.mxu0 0.0
  %1738 = vmatpush.msra.mxu0 0.0
  %1739 = vmatpush.msra.mxu0 0.0
  %1740 = vmatpush.msra.mxu0 0.0
  %1741 = vmatpush.msra.mxu0 0.0
  %1742 = vmatpush.msra.mxu0 0.0
  %1743 = vmatpush.msra.mxu0 0.0
  %1744 = vmatpush.msra.mxu0 0.0
  %1745 = vmatpush.msra.mxu0 0.0
  %1746 = vmatpush.msra.mxu0 0.0
  %1747 = vmatpush.msra.mxu0 %v1505
  %1748 = vmatpush.msra.mxu0 %v1504
  %1749 = vmatmul.f32.gmra.mxu0 %v1710
  %v1750 = vpop.f32.mrf.mxu0
  %v1751 = vadd.f32 %v1707, %v1750
  %1752 = vmatmul.f32.gmra.mxu0 %v1713
  %v1753 = vpop.f32.mrf.mxu0
  %v1754 = vadd.f32 %v1707, %v1753
  %1755 = vmatmul.f32.gmra.mxu0 %v1716
  %v1756 = vpop.f32.mrf.mxu0
  %v1757 = vadd.f32 %v1707, %v1756
  %1758 = vmatmul.f32.gmra.mxu0 %v1719
  %v1759 = vpop.f32.mrf.mxu0
  %v1760 = vadd.f32 %v1707, %v1759
  %1761 = vmatmul.f32.gmra.mxu0 %v1722
  %v1762 = vpop.f32.mrf.mxu0
  %v1763 = vadd.f32 %v1707, %v1762
  %1764 = vmatmul.f32.gmra.mxu0 %v1725
  %v1765 = vpop.f32.mrf.mxu0
  %v1766 = vadd.f32 %v1707, %v1765
  %1767 = vmatmul.f32.gmra.mxu0 %v1728
  %v1768 = vpop.f32.mrf.mxu0
  %v1769 = vadd.f32 %v1707, %v1768
  %1770 = vmatmul.f32.gmra.mxu0 %v1731
  %v1771 = vpop.f32.mrf.mxu0
  %v1772 = vadd.f32 %v1707, %v1771
  %1773 = vdwg.mxu0
  %v1774 = vadd.f32 %v1751, %v1674
  %v1775 = vadd.f32 %v1754, %v1675
  %v1776 = vadd.f32 %v1757, %v1676
  %v1777 = vadd.f32 %v1760, %v1677
  %v1778 = vadd.f32 %v1763, %v1678
  %v1779 = vadd.f32 %v1766, %v1679
  %v1780 = vadd.f32 %v1769, %v1680
  %v1781 = vadd.f32 %v1772, %v1681
  %vm1782 = vcmp.gt.f32.partialorder %v1774, 0.0
  %vm1783 = vcmp.gt.f32.partialorder %v1775, 0.0
  %vm1784 = vcmp.gt.f32.partialorder %v1776, 0.0
  %vm1785 = vcmp.gt.f32.partialorder %v1777, 0.0
  %vm1786 = vcmp.gt.f32.partialorder %v1778, 0.0
  %vm1787 = vcmp.gt.f32.partialorder %v1779, 0.0
  %vm1788 = vcmp.gt.f32.partialorder %v1780, 0.0
  %vm1789 = vcmp.gt.f32.partialorder %v1781, 0.0
  %v1790 = vmul.f32 %v1774, 0.1
  %v1791 = vmul.f32 %v1775, 0.1
  %v1792 = vmul.f32 %v1776, 0.1
  %v1793 = vmul.f32 %v1777, 0.1
  %v1794 = vmul.f32 %v1778, 0.1
  %v1795 = vmul.f32 %v1779, 0.1
  %v1796 = vmul.f32 %v1780, 0.1
  %v1797 = vmul.f32 %v1781, 0.1
  %v1798 = vsel %vm1782, %v1774, %v1790
  %v1799 = vsel %vm1783, %v1775, %v1791
  %v1800 = vsel %vm1784, %v1776, %v1792
  %v1801 = vsel %vm1785, %v1777, %v1793
  %v1802 = vsel %vm1786, %v1778, %v1794
  %v1803 = vsel %vm1787, %v1779, %v1795
  %v1804 = vsel %vm1788, %v1780, %v1796
  %v1805 = vsel %vm1789, %v1781, %v1797
  %v1806 = vmax.f32 %v1799, %v1800
  %v1807 = vmax.f32 %v1801, %v1802
  %v1808 = vmax.f32 %v1803, %v1804
  %1810 = vrot.lane.b32.xlu0 %v1806, 8
  %v1811 = vpop.permute.xlu0 %1810
  %1814 = vrot.lane.b32.xlu0 %v1807, 16
  %v1815 = vpop.permute.xlu0 %1814
  %1818 = vrot.lane.b32.xlu0 %v1808, 24
  %v1819 = vpop.permute.xlu0 %1818
  %1822 = vrot.lane.b32.xlu0 %v1805, 32
  %v1823 = vpop.permute.xlu0 %1822
  %v1825 = vsel %vm1580, %v1798, %v1811
  %v1826 = vsel %vm243, %v1825, %v1815
  %vm1827 = vcmask 195584
  %v1828 = vsel %vm1827, %v1826, %v1819
  %v1829 = vsel %vm267, %v1828, %v1823
  %v1830 = vld [vmem:[%s47] sm:$0xff]
  %v1831 = vld [vmem:[%s47 + $0x8] sm:$0xff]
  %v1832 = vld [vmem:[%s47 + $0x10] sm:$0xff]
  %v1833 = vld [vmem:[%s47 + $0x18] sm:$0xff]
  %v1834 = vld [vmem:[%s49] sm:$0x1]
  %v1836 = vperm.slane %v1834, 0
  %1838 = vmatpush.msra.mxu0 0.0
  %1839 = vmatpush.msra.mxu0 0.0
  %1840 = vmatpush.msra.mxu0 0.0
  %1841 = vmatpush.msra.mxu0 0.0
  %1842 = vmatpush.msra.mxu0 0.0
  %1843 = vmatpush.msra.mxu0 0.0
  %1844 = vmatpush.msra.mxu0 0.0
  %1845 = vmatpush.msra.mxu0 0.0
  %1846 = vmatpush.msra.mxu0 0.0
  %1847 = vmatpush.msra.mxu0 0.0
  %1848 = vmatpush.msra.mxu0 0.0
  %1849 = vmatpush.msra.mxu0 0.0
  %1850 = vmatpush.msra.mxu0 %v1833
  %1851 = vmatpush.msra.mxu0 %v1832
  %1852 = vmatpush.msra.mxu0 %v1831
  %1853 = vmatpush.msra.mxu0 %v1830
  %1854 = vmatmul.f32.gmra.mxu0 %v942
  %v1855 = vpop.f32.mrf.mxu0
  %v1856 = vadd.f32 %v1836, %v1855
  %1857 = vdwg.mxu0
  %vm1858 = vcmp.gt.f32.partialorder %v1856, 0.0
  %v1859 = vmul.f32 %v1856, 0.1
  %v1860 = vsel %vm1858, %v1856, %v1859
  %1862 = vrot.lane.b32.xlu0 %v1860, 40
  %v1863 = vpop.permute.xlu0 %1862
  %vm1865 = vcmask 326656
  %v1866 = vsel %vm1865, %v1829, %v1863
  %v1867 = vld [vmem:[%s51] sm:$0xff]
  %v1868 = vld [vmem:[%s51 + $0x8] sm:$0xff]
  %v1869 = vld [vmem:[%s51 + $0x10] sm:$0xff]
  %v1870 = vld [vmem:[%s51 + $0x18] sm:$0xff]
  %v1871 = vld [vmem:[%s51 + $0x20] sm:$0xff]
  %v1872 = vld [vmem:[%s51 + $0x28] sm:$0xff]
  %v1873 = vld [vmem:[%s51 + $0x30] sm:$0xff]
  %v1874 = vld [vmem:[%s55] sm:$0x1]
  %v1876 = vperm.slane %v1874, 0
  %vm1878 = vcmask 457728
  %v1880 = vsel %vm1878, %v1866, 0
  %1882 = vmatpush.msra.mxu0 0.0
  %1883 = vmatpush.msra.mxu0 0.0
  %1884 = vmatpush.msra.mxu0 0.0
  %1885 = vmatpush.msra.mxu0 0.0
  %1886 = vmatpush.msra.mxu0 0.0
  %1887 = vmatpush.msra.mxu0 0.0
  %1888 = vmatpush.msra.mxu0 0.0
  %1889 = vmatpush.msra.mxu0 0.0
  %1890 = vmatpush.msra.mxu0 0.0
  %1891 = vmatpush.msra.mxu0 %v1873
  %1892 = vmatpush.msra.mxu0 %v1872
  %1893 = vmatpush.msra.mxu0 %v1871
  %1894 = vmatpush.msra.mxu0 %v1870
  %1895 = vmatpush.msra.mxu0 %v1869
  %1896 = vmatpush.msra.mxu0 %v1868
  %1897 = vmatpush.msra.mxu0 %v1867
  %1898 = vmatmul.f32.gmra.mxu0 %v1880
  %v1899 = vpop.f32.mrf.mxu0
  %v1900 = vadd.f32 %v1876, %v1899
  %1901 = vdwg.mxu0
  %v1902 = vld [vmem:[%s53] sm:$0xff]
  %v1903 = vld [vmem:[%s53 + $0x8] sm:$0xff]
  %v1904 = vld [vmem:[%s53 + $0x10] sm:$0xff]
  %v1905 = vld [vmem:[%s53 + $0x18] sm:$0xff]
  %1906 = vmatpush.msra.mxu0 0.0
  %1907 = vmatpush.msra.mxu0 0.0
  %1908 = vmatpush.msra.mxu0 0.0
  %1909 = vmatpush.msra.mxu0 0.0
  %1910 = vmatpush.msra.mxu0 0.0
  %1911 = vmatpush.msra.mxu0 0.0
  %1912 = vmatpush.msra.mxu0 0.0
  %1913 = vmatpush.msra.mxu0 0.0
  %1914 = vmatpush.msra.mxu0 0.0
  %1915 = vmatpush.msra.mxu0 0.0
  %1916 = vmatpush.msra.mxu0 0.0
  %1917 = vmatpush.msra.mxu0 0.0
  %1918 = vmatpush.msra.mxu0 %v1905
  %1919 = vmatpush.msra.mxu0 %v1904
  %1920 = vmatpush.msra.mxu0 %v1903
  %1921 = vmatpush.msra.mxu0 %v1902
  %1922 = vmatmul.f32.gmra.mxu0 %v269
  %v1923 = vpop.f32.mrf.mxu0
  %v1924 = vadd.f32 0.0, %v1923
  %1925 = vdwg.mxu0
  %v1926 = vadd.f32 %v1900, %v1924
  %v1927 = vxor.u32 %v1926, 2147483648
  %v1928 = vmul.f32 %v1927, 1.442695
  %v1929 = vpow.pop %v1928
  %v1930 = vadd.f32 %v1929, 1.0
  %v1931 = vrcp.pop %v1930
  %v1932 = vmul.f32 %v1930, %v1931
  %v1933 = vsub.f32 1.0, %v1932
  %v1934 = vmul.f32 %v1931, %v1933
  %v1935 = vadd.f32 %v1931, %v1934
  %vm1936 = vweird.f32 %v1930
  %vm1937 = vweird.f32 %v1931
  %vm1938 = vmor %vm1936, %vm1937
  %v1939 = vsel %vm1938, %v1931, %v1935
  %v1940 = vand.u32 2147483647, %v1930
  %vm1941 = vcmp.eq.f32.partialorder %v1940, 8.507059e+37
  %v1942 = vand.u32 %v1930, 2147483648
  %v1943 = vor.u32 1.1754944e-38, %v1942
  %v1944 = vsel %vm1941, %v1943, %v1939
  %v1945 = vmul.f32 1.0, %v1944
  %v1946 = vtanh.pop %v1926
  %v1947 = vmul.f32 %v1945, 0.0
  %1949 = vrot.lane.b32.xlu0 %v1946, 64
  %v1950 = vpop.permute.xlu0 %1949
  %v1952 = vmul.f32 %v1945, %v1950
  %1954 = vrot.lane.b32.xlu0 %v1952, 32
  %v1955 = vpop.permute.xlu0 %1954
  %v1957 = vadd.f32 %v1947, %v1955
  %v1958 = vtanh.pop %v1957
  %1960 = vrot.lane.b32.xlu0 %v1958, 64
  %v1961 = vpop.permute.xlu0 %1960
  %v1963 = vmul.f32 %v1945, %v1961
  %1965 = vrot.lane.b32.xlu0 %v1963, 32
  %v1966 = vpop.permute.xlu0 %1965
  %v1967 = vsel %vm267, %v1966, 0
  %1969 = vmatpush.msra.mxu0 0.0
  %1970 = vmatpush.msra.mxu0 0.0
  %1971 = vmatpush.msra.mxu0 0.0
  %1972 = vmatpush.msra.mxu0 0.0
  %1973 = vmatpush.msra.mxu0 0.0
  %1974 = vmatpush.msra.mxu0 0.0
  %1975 = vmatpush.msra.mxu0 0.0
  %1976 = vmatpush.msra.mxu0 0.0
  %1977 = vmatpush.msra.mxu0 0.0
  %1978 = vmatpush.msra.mxu0 0.0
  %1979 = vmatpush.msra.mxu0 0.0
  %1980 = vmatpush.msra.mxu0 0.0
  %1981 = vmatpush.msra.mxu0 %v1905
  %1982 = vmatpush.msra.mxu0 %v1904
  %1983 = vmatpush.msra.mxu0 %v1903
  %1984 = vmatpush.msra.mxu0 %v1902
  %1985 = vmatmul.f32.gmra.mxu0 %v1967
  %v1986 = vpop.f32.mrf.mxu0
  %v1987 = vadd.f32 0.0, %v1986
  %1988 = vdwg.mxu0
  %v1989 = vadd.f32 %v1900, %v1987
  %v1990 = vxor.u32 %v1989, 2147483648
  %v1991 = vmul.f32 %v1990, 1.442695
  %v1992 = vpow.pop %v1991
  %v1993 = vadd.f32 %v1992, 1.0
  %v1994 = vrcp.pop %v1993
  %v1995 = vmul.f32 %v1993, %v1994
  %v1996 = vsub.f32 1.0, %v1995
  %v1997 = vmul.f32 %v1994, %v1996
  %v1998 = vadd.f32 %v1994, %v1997
  %vm1999 = vweird.f32 %v1993
  %vm2000 = vweird.f32 %v1994
  %vm2001 = vmor %vm1999, %vm2000
  %v2002 = vsel %vm2001, %v1994, %v1998
  %v2003 = vand.u32 2147483647, %v1993
  %vm2004 = vcmp.eq.f32.partialorder %v2003, 8.507059e+37
  %v2005 = vand.u32 %v1993, 2147483648
  %v2006 = vor.u32 1.1754944e-38, %v2005
  %v2007 = vsel %vm2004, %v2006, %v2002
  %v2008 = vmul.f32 1.0, %v2007
  %v2009 = vtanh.pop %v1989
  %v2010 = vmul.f32 %v2008, %v1957
  %2012 = vrot.lane.b32.xlu0 %v2009, 64
  %v2013 = vpop.permute.xlu0 %2012
  %v2015 = vmul.f32 %v2008, %v2013
  %2017 = vrot.lane.b32.xlu0 %v2015, 32
  %v2018 = vpop.permute.xlu0 %2017
  %v2020 = vadd.f32 %v2010, %v2018
  %v2021 = vtanh.pop %v2020
  %2023 = vrot.lane.b32.xlu0 %v2021, 64
  %v2024 = vpop.permute.xlu0 %2023
  %v2026 = vmul.f32 %v2008, %v2024
  %2028 = vrot.lane.b32.xlu0 %v2026, 32
  %v2029 = vpop.permute.xlu0 %2028
  %v2030 = vsel %vm267, %v2029, 0
  %2032 = vmatpush.msra.mxu0 0.0
  %2033 = vmatpush.msra.mxu0 0.0
  %2034 = vmatpush.msra.mxu0 0.0
  %2035 = vmatpush.msra.mxu0 0.0
  %2036 = vmatpush.msra.mxu0 0.0
  %2037 = vmatpush.msra.mxu0 0.0
  %2038 = vmatpush.msra.mxu0 0.0
  %2039 = vmatpush.msra.mxu0 0.0
  %2040 = vmatpush.msra.mxu0 0.0
  %2041 = vmatpush.msra.mxu0 0.0
  %2042 = vmatpush.msra.mxu0 0.0
  %2043 = vmatpush.msra.mxu0 0.0
  %2044 = vmatpush.msra.mxu0 %v1905
  %2045 = vmatpush.msra.mxu0 %v1904
  %2046 = vmatpush.msra.mxu0 %v1903
  %2047 = vmatpush.msra.mxu0 %v1902
  %2048 = vmatmul.f32.gmra.mxu0 %v2030
  %v2049 = vpop.f32.mrf.mxu0
  %v2050 = vadd.f32 0.0, %v2049
  %2051 = vdwg.mxu0
  %v2052 = vadd.f32 %v1900, %v2050
  %v2053 = vxor.u32 %v2052, 2147483648
  %v2054 = vmul.f32 %v2053, 1.442695
  %v2055 = vpow.pop %v2054
  %v2056 = vadd.f32 %v2055, 1.0
  %v2057 = vrcp.pop %v2056
  %v2058 = vmul.f32 %v2056, %v2057
  %v2059 = vsub.f32 1.0, %v2058
  %v2060 = vmul.f32 %v2057, %v2059
  %v2061 = vadd.f32 %v2057, %v2060
  %vm2062 = vweird.f32 %v2056
  %vm2063 = vweird.f32 %v2057
  %vm2064 = vmor %vm2062, %vm2063
  %v2065 = vsel %vm2064, %v2057, %v2061
  %v2066 = vand.u32 2147483647, %v2056
  %vm2067 = vcmp.eq.f32.partialorder %v2066, 8.507059e+37
  %v2068 = vand.u32 %v2056, 2147483648
  %v2069 = vor.u32 1.1754944e-38, %v2068
  %v2070 = vsel %vm2067, %v2069, %v2065
  %v2071 = vmul.f32 1.0, %v2070
  %v2072 = vtanh.pop %v2052
  %v2073 = vmul.f32 %v2071, %v2020
  %2075 = vrot.lane.b32.xlu0 %v2072, 64
  %v2076 = vpop.permute.xlu0 %2075
  %v2078 = vmul.f32 %v2071, %v2076
  %2080 = vrot.lane.b32.xlu0 %v2078, 32
  %v2081 = vpop.permute.xlu0 %2080
  %v2083 = vadd.f32 %v2073, %v2081
  %v2084 = vtanh.pop %v2083
  %2086 = vrot.lane.b32.xlu0 %v2084, 64
  %v2087 = vpop.permute.xlu0 %2086
  %v2089 = vmul.f32 %v2071, %v2087
  %2091 = vrot.lane.b32.xlu0 %v2089, 32
  %v2092 = vpop.permute.xlu0 %2091
  %v2093 = vsel %vm267, %v2092, 0
  %2095 = vmatpush.msra.mxu0 0.0
  %2096 = vmatpush.msra.mxu0 0.0
  %2097 = vmatpush.msra.mxu0 0.0
  %2098 = vmatpush.msra.mxu0 0.0
  %2099 = vmatpush.msra.mxu0 0.0
  %2100 = vmatpush.msra.mxu0 0.0
  %2101 = vmatpush.msra.mxu0 0.0
  %2102 = vmatpush.msra.mxu0 0.0
  %2103 = vmatpush.msra.mxu0 0.0
  %2104 = vmatpush.msra.mxu0 0.0
  %2105 = vmatpush.msra.mxu0 0.0
  %2106 = vmatpush.msra.mxu0 0.0
  %2107 = vmatpush.msra.mxu0 %v1905
  %2108 = vmatpush.msra.mxu0 %v1904
  %2109 = vmatpush.msra.mxu0 %v1903
  %2110 = vmatpush.msra.mxu0 %v1902
  %2111 = vmatmul.f32.gmra.mxu0 %v2093
  %v2112 = vpop.f32.mrf.mxu0
  %v2113 = vadd.f32 0.0, %v2112
  %2114 = vdwg.mxu0
  %v2115 = vadd.f32 %v1900, %v2113
  %v2116 = vxor.u32 %v2115, 2147483648
  %v2117 = vmul.f32 %v2116, 1.442695
  %v2118 = vpow.pop %v2117
  %v2119 = vadd.f32 %v2118, 1.0
  %v2120 = vrcp.pop %v2119
  %v2121 = vmul.f32 %v2119, %v2120
  %v2122 = vsub.f32 1.0, %v2121
  %v2123 = vmul.f32 %v2120, %v2122
  %v2124 = vadd.f32 %v2120, %v2123
  %vm2125 = vweird.f32 %v2119
  %vm2126 = vweird.f32 %v2120
  %vm2127 = vmor %vm2125, %vm2126
  %v2128 = vsel %vm2127, %v2120, %v2124
  %v2129 = vand.u32 2147483647, %v2119
  %vm2130 = vcmp.eq.f32.partialorder %v2129, 8.507059e+37
  %v2131 = vand.u32 %v2119, 2147483648
  %v2132 = vor.u32 1.1754944e-38, %v2131
  %v2133 = vsel %vm2130, %v2132, %v2128
  %v2134 = vmul.f32 1.0, %v2133
  %v2135 = vtanh.pop %v2115
  %v2136 = vmul.f32 %v2134, %v2083
  %2138 = vrot.lane.b32.xlu0 %v2135, 64
  %v2139 = vpop.permute.xlu0 %2138
  %v2141 = vmul.f32 %v2134, %v2139
  %2143 = vrot.lane.b32.xlu0 %v2141, 32
  %v2144 = vpop.permute.xlu0 %2143
  %v2146 = vadd.f32 %v2136, %v2144
  %v2147 = vtanh.pop %v2146
  %2149 = vrot.lane.b32.xlu0 %v2147, 64
  %v2150 = vpop.permute.xlu0 %2149
  %v2152 = vmul.f32 %v2134, %v2150
  %v2153 = vld [vmem:[%s57] sm:$0xff]
  %v2154 = vld [vmem:[%s57 + $0x8] sm:$0xff]
  %v2155 = vld [vmem:[%s57 + $0x10] sm:$0xff]
  %v2156 = vld [vmem:[%s57 + $0x18] sm:$0xff]
  %v2157 = vld [vmem:[%s59] sm:$0x1]
  %v2159 = vperm.slane %v2157, 0
  %2162 = vrot.lane.b32.xlu0 %v2152, 32
  %v2163 = vpop.permute.xlu0 %2162
  %v2164 = vsel %vm267, %v2163, 0
  %2166 = vmatpush.msra.mxu0 0.0
  %2167 = vmatpush.msra.mxu0 0.0
  %2168 = vmatpush.msra.mxu0 0.0
  %2169 = vmatpush.msra.mxu0 0.0
  %2170 = vmatpush.msra.mxu0 0.0
  %2171 = vmatpush.msra.mxu0 0.0
  %2172 = vmatpush.msra.mxu0 0.0
  %2173 = vmatpush.msra.mxu0 0.0
  %2174 = vmatpush.msra.mxu0 0.0
  %2175 = vmatpush.msra.mxu0 0.0
  %2176 = vmatpush.msra.mxu0 0.0
  %2177 = vmatpush.msra.mxu0 0.0
  %2178 = vmatpush.msra.mxu0 %v2156
  %2179 = vmatpush.msra.mxu0 %v2155
  %2180 = vmatpush.msra.mxu0 %v2154
  %2181 = vmatpush.msra.mxu0 %v2153
  %2182 = vmatmul.f32.gmra.mxu0 %v1967
  %v2183 = vpop.f32.mrf.mxu0
  %v2184 = vadd.f32 %v2159, %v2183
  %2185 = vmatmul.f32.gmra.mxu0 %v2030
  %v2186 = vpop.f32.mrf.mxu0
  %v2187 = vadd.f32 %v2159, %v2186
  %2188 = vmatmul.f32.gmra.mxu0 %v2093
  %v2189 = vpop.f32.mrf.mxu0
  %v2190 = vadd.f32 %v2159, %v2189
  %2191 = vmatmul.f32.gmra.mxu0 %v2164
  %v2192 = vpop.f32.mrf.mxu0
  %v2193 = vadd.f32 %v2159, %v2192
  %2194 = vdwg.mxu0
  %v2195 = vlaneseq
  %v2196 = vand.u32 %v2195, 127
  %vm2197 = vcmp.lt.s32.totalorder %v2196, 2
  %vm2198 = vcmp.lt.s32.totalorder %v2196, 4
  %v2199 = vmul.f32 %v2184, 1.442695
  %v2200 = vpow.pop %v2199
  %v2201 = vmul.f32 %v2187, 1.442695
  %v2202 = vpow.pop %v2201
  %v2203 = vmul.f32 %v2190, 1.442695
  %v2204 = vpow.pop %v2203
  %v2205 = vmul.f32 %v2193, 1.442695
  %v2206 = vpow.pop %v2205
  %v2207 = vtanh.pop %v2184
  %v2208 = vtanh.pop %v2187
  %v2209 = vtanh.pop %v2190
  %v2210 = vtanh.pop %v2193
  %v2211 = vsel %vm2198, %v2200, %v2207
  %v2212 = vsel %vm2198, %v2202, %v2208
  %v2213 = vsel %vm2198, %v2204, %v2209
  %v2214 = vsel %vm2198, %v2206, %v2210
  %v2215 = vsel %vm2197, %v2184, %v2211
  %v2216 = vsel %vm2197, %v2187, %v2212
  %v2217 = vsel %vm2197, %v2190, %v2213
  %v2218 = vsel %vm2197, %v2193, %v2214
  %vm2219 = vcmask 39936
  %2220 = vst.msk [vmem:[%s61] sm:$0xff] %vm2219, %v2215
  %2221 = vst.msk [vmem:[%s61 + $0x8] sm:$0xff] %vm2219, %v2216
  %2222 = vst.msk [vmem:[%s61 + $0x10] sm:$0xff] %vm2219, %v2217
  %2223 = vst.msk [vmem:[%s61 + $0x18] sm:$0xff] %vm2219, %v2218
  // Predicated region
  $region122: #{stgcn2d_forward.1} parent=0 // pred_check
    _
  $region123: #{stgcn2d_forward.1} parent=0 // pred_check_branch
    %2225 = sbr.rel (0) target = $region125
  $region124: #{stgcn2d_forward.1} parent=0 // pred_region
    _
  $region125: #{stgcn2d_forward.1} parent=0 // pred_fallthru
    _
  // Predicated region
  $region126: #{stgcn2d_forward.1} parent=0 // pred_check
    _
  $region127: #{stgcn2d_forward.1} parent=0 // pred_check_branch
    %2227 = sbr.rel (0) target = $region129
  $region128: #{stgcn2d_forward.1} parent=0 // pred_region
    _
  $region129: #{stgcn2d_forward.1} parent=0 // pred_fallthru
    _

</llo_original>
